<compile_context>
chip_gen: v7x
topology: tpu7x:2x2x1
jax: 0.10.0
libtpu: 0.0.40
codegen_flags: <defaults>
</compile_context>

<pallas_src>
import jax
import jax.numpy as jnp
from jax.experimental import pallas as pl
from jax.experimental.pallas import tpu as pltpu

# ----------------------------------------------------------------------------
# Model hyper-parameters (from the module / a small synthetic config)
# ----------------------------------------------------------------------------
PIXEL_H = 64
PIXEL_W = 64
IN_FEATURES = PIXEL_H * PIXEL_W          # 4096
LATENT_DIM = 32                          # model_config['dimension']
LATENT_PAD = 128                         # latent padded to a full lane width
LAYER_WIDTH = 128                        # model_config['width'] (no dropout)


# ----------------------------------------------------------------------------
# Generation-aware sizing (query once at import; conservative fallback)
# ----------------------------------------------------------------------------
def _query_vmem_bytes():
    try:
        return int(pltpu.get_tpu_info().vmem_capacity_bytes)
    except Exception:
        return 64 << 20    # conservative: size for the smallest (v7x) VMEM


_VMEM_BYTES = _query_vmem_bytes()
_BIG_VMEM = _VMEM_BYTES >= (96 << 20)            # v5e/v6e: 128 MiB VMEM
MAX_BATCH_TILE = 512 if _BIG_VMEM else 256       # rows per grid step
_VMEM_LIMIT = (96 << 20) if _BIG_VMEM else (40 << 20)


def _pick_tile(batch):
    """Batch-tile rows (multiple of 8, f32 sublane tile)."""
    tb = max(8, -(-batch // 8) * 8)              # round batch up to mult of 8
    tb = min(tb, MAX_BATCH_TILE)
    if not _BIG_VMEM and batch > 8:
        # Small-VMEM parts (v7x) have 2 TensorCores sharded over the
        # "parallel" batch axis: cap the tile so the grid has >= 2 steps.
        half = -(-batch // 2)
        half = max(8, -(-half // 8) * 8)
        tb = min(tb, half)
    return tb


# ----------------------------------------------------------------------------
# Pallas kernel: fused encoder + decoder MLP for one batch tile
# ----------------------------------------------------------------------------
def _dense(h_bf16, w_ref, b_ref):
    # bf16 x bf16 MXU matmul with f32 accumulation; bias add in f32.
    return (jnp.dot(h_bf16, w_ref[...], preferred_element_type=jnp.float32)
            + b_ref[...])


def base_ae_kernel(
    x_ref,
    # encoder params (bf16 weights, f32 biases)
    ew1, eb1, ew2, eb2, ew3, eb3, ew4, eb4,
    # decoder params (matches _define_decoder: fc_1..fc_4)
    dw1, db1, dw2, db2, dw3, db3, dw4, db4,
    # outputs
    xhat_ref, mu_ref,
):
    # x arrives as f32 straight from HBM; cast on the VPU (huge slack here).
    x = x_ref[...].astype(jnp.bfloat16)                      # (TB, 4096) bf16

    # ---- encoder: 4096 -> W -> W -> W -> latent (padded to 128 lanes) ----
    h = jnp.maximum(_dense(x, ew1, eb1), 0.0).astype(jnp.bfloat16)
    h = jnp.maximum(_dense(h, ew2, eb2), 0.0).astype(jnp.bfloat16)
    h = jnp.maximum(_dense(h, ew3, eb3), 0.0).astype(jnp.bfloat16)
    mu_pad = _dense(h, ew4, eb4)      # (TB, 128) f32; cols >= LATENT_DIM == 0
    mu_ref[...] = mu_pad.astype(mu_ref.dtype)                # lane-dense store

    # ---- decoder: latent -> W -> W -> W -> 4096 (no activation on fc_4) ----
    d = jnp.maximum(_dense(mu_pad.astype(jnp.bfloat16), dw1, db1),
                    0.0).astype(jnp.bfloat16)
    d = jnp.maximum(_dense(d, dw2, db2), 0.0).astype(jnp.bfloat16)
    d = jnp.maximum(_dense(d, dw3, db3), 0.0).astype(jnp.bfloat16)
    xhat_ref[...] = _dense(d, dw4, db4).astype(xhat_ref.dtype)


# ----------------------------------------------------------------------------
# One-time parameter preparation (hoisted out of the per-call hot path)
# ----------------------------------------------------------------------------
def prepare_params(params):
    """Convert params to kernel layout ONCE: bf16 weights, f32 biases, and the
    latent dimension zero-padded to 128 lanes (ew4/eb4 columns, dw1 rows).
    The zero padding is what makes mu_pad columns >= LATENT_DIM exactly zero,
    which the decoder path relies on — preserve it in any refactor."""
    bf16, f32 = jnp.bfloat16, jnp.float32
    pad_l = LATENT_PAD - LATENT_DIM
    return (
        params["ew1"].astype(bf16), params["eb1"].astype(f32),
        params["ew2"].astype(bf16), params["eb2"].astype(f32),
        params["ew3"].astype(bf16), params["eb3"].astype(f32),
        jnp.pad(params["ew4"].astype(bf16), ((0, 0), (0, pad_l))),   # (W, 128)
        jnp.pad(params["eb4"].astype(f32), ((0, 0), (0, pad_l))),    # (1, 128)
        jnp.pad(params["dw1"].astype(bf16), ((0, pad_l), (0, 0))),   # (128, W)
        params["db1"].astype(f32),
        params["dw2"].astype(bf16), params["db2"].astype(f32),
        params["dw3"].astype(bf16), params["db3"].astype(f32),
        params["dw4"].astype(bf16), params["db4"].astype(f32),
    )


# ----------------------------------------------------------------------------
# Wrapper
# ----------------------------------------------------------------------------
def _rep_spec(shape):
    # Weights/biases: constant index_map -> DMA'd once, resident across grid.
    return pl.BlockSpec(shape, lambda i: (0,) * len(shape))


@jax.jit
def base_ae_forward(x, prepared_params):
    """x: (B, 1, 64, 64) float32 (NCHW); prepared_params: prepare_params(...).
    Returns {'xhat': (B,1,64,64) f32, 'mu': (B, latent) f32}."""
    B = x.shape[0]
    tb = _pick_tile(B)
    grid = -(-B // tb)                           # ragged last block handled
                                                 # by Pallas (OOB rows dropped)

    x2d = x.reshape(B, IN_FEATURES)              # f32, no cast / no pad

    in_specs = [pl.BlockSpec((tb, IN_FEATURES), lambda i: (i, 0))]
    in_specs += [_rep_spec(p.shape) for p in prepared_params]

    out_specs = [
        pl.BlockSpec((tb, IN_FEATURES), lambda i: (i, 0)),   # xhat (lane-dense)
        pl.BlockSpec((tb, LATENT_PAD), lambda i: (i, 0)),    # mu (padded)
    ]
    out_shapes = [
        jax.ShapeDtypeStruct((B, IN_FEATURES), jnp.float32),
        jax.ShapeDtypeStruct((B, LATENT_PAD), jnp.float32),
    ]

    xhat_flat, mu_padded = pl.pallas_call(
        base_ae_kernel,
        grid_spec=pltpu.PrefetchScalarGridSpec(
            num_scalar_prefetch=0,
            grid=(grid,),
            in_specs=in_specs,
            out_specs=out_specs,
        ),
        out_shape=out_shapes,
        compiler_params=pltpu.CompilerParams(
            dimension_semantics=("parallel",),
            vmem_limit_bytes=_VMEM_LIMIT,
        ),
    )(x2d, *prepared_params)

    xhat = xhat_flat.reshape(B, 1, PIXEL_H, PIXEL_W)         # free reshape
    mu = mu_padded[:, :LATENT_DIM]                           # tiny slice
    return {"xhat": xhat, "mu": mu}


# ----------------------------------------------------------------------------
# Deterministic parameter init (PyTorch nn.Linear style: U(-1/sqrt(fan_in), ...))
# ----------------------------------------------------------------------------
def init_params(key):
    def linear(key, fan_in, fan_out):
        kw, kb = jax.random.split(key)
        bound = 1.0 / jnp.sqrt(fan_in)
        w = jax.random.uniform(kw, (fan_in, fan_out), jnp.float32, -bound, bound)
        b = jax.random.uniform(kb, (1, fan_out), jnp.float32, -bound, bound)
        return w, b

    keys = jax.random.split(key, 8)
    p = {}
    # encoder: 4096 -> W -> W -> W -> latent
    p["ew1"], p["eb1"] = linear(keys[0], IN_FEATURES, LAYER_WIDTH)
    p["ew2"], p["eb2"] = linear(keys[1], LAYER_WIDTH, LAYER_WIDTH)
    p["ew3"], p["eb3"] = linear(keys[2], LAYER_WIDTH, LAYER_WIDTH)
    p["ew4"], p["eb4"] = linear(keys[3], LAYER_WIDTH, LATENT_DIM)
    # decoder (_define_decoder): latent -> W -> W -> W -> 4096
    p["dw1"], p["db1"] = linear(keys[4], LATENT_DIM, LAYER_WIDTH)
    p["dw2"], p["db2"] = linear(keys[5], LAYER_WIDTH, LAYER_WIDTH)
    p["dw3"], p["db3"] = linear(keys[6], LAYER_WIDTH, LAYER_WIDTH)
    p["dw4"], p["db4"] = linear(keys[7], LAYER_WIDTH, IN_FEATURES)
    return p


# Pure-JAX reference that uses the same bf16-inputs / f32-accumulation recipe
# as the kernel (validates the kernel's logic at matching precision).
def reference_forward(x, p):
    B = x.shape[0]

    def dense(h, w, b):
        return jnp.dot(h.astype(jnp.bfloat16), w.astype(jnp.bfloat16),
                       preferred_element_type=jnp.float32) + b

    h = x.reshape(B, IN_FEATURES).astype(jnp.float32)
    h1 = jnp.maximum(dense(h, p["ew1"], p["eb1"]), 0.0)
    h2 = jnp.maximum(dense(h1, p["ew2"], p["eb2"]), 0.0)
    h3 = jnp.maximum(dense(h2, p["ew3"], p["eb3"]), 0.0)
    mu = dense(h3, p["ew4"], p["eb4"])
    d1 = jnp.maximum(dense(mu, p["dw1"], p["db1"]), 0.0)
    d2 = jnp.maximum(dense(d1, p["dw2"], p["db2"]), 0.0)
    d3 = jnp.maximum(dense(d2, p["dw3"], p["db3"]), 0.0)
    z = dense(d3, p["dw4"], p["db4"])
    return {"xhat": z.reshape(B, 1, PIXEL_H, PIXEL_W), "mu": mu}


if __name__ == "__main__":
    key = jax.random.PRNGKey(0)
    k_x, k_p = jax.random.split(key)

    B = 8
    x = jax.random.uniform(k_x, (B, 1, PIXEL_H, PIXEL_W), jnp.float32)  # NCHW
    params = init_params(k_p)

    prepared = prepare_params(params)          # one-time, outside the hot path
    prepared = jax.block_until_ready(prepared)

    out = base_ae_forward(x, prepared)
    jax.block_until_ready(out)

    ref = reference_forward(x, params)
    assert out["xhat"].shape == (B, 1, PIXEL_H, PIXEL_W)
    assert out["mu"].shape == (B, LATENT_DIM)
    assert out["xhat"].dtype == jnp.float32 and out["mu"].dtype == jnp.float32
    assert jnp.allclose(out["mu"], ref["mu"], atol=1e-2, rtol=1e-2)
    assert jnp.allclose(out["xhat"], ref["xhat"], atol=1e-2, rtol=1e-2)

    print("KERNEL_OK")
</pallas_src>

<mosaic_0001>
module attributes {stable_mosaic.version = 11 : i64} {
  func.func @base_ae_kernel(%arg0: i32, %arg1: memref<8x4096xf32, #tpu.memory_space<vmem>>, %arg2: memref<4096x128xbf16, #tpu.memory_space<vmem>>, %arg3: memref<1x128xf32, #tpu.memory_space<vmem>>, %arg4: memref<128x128xbf16, #tpu.memory_space<vmem>>, %arg5: memref<1x128xf32, #tpu.memory_space<vmem>>, %arg6: memref<128x128xbf16, #tpu.memory_space<vmem>>, %arg7: memref<1x128xf32, #tpu.memory_space<vmem>>, %arg8: memref<128x128xbf16, #tpu.memory_space<vmem>>, %arg9: memref<1x128xf32, #tpu.memory_space<vmem>>, %arg10: memref<128x128xbf16, #tpu.memory_space<vmem>>, %arg11: memref<1x128xf32, #tpu.memory_space<vmem>>, %arg12: memref<128x128xbf16, #tpu.memory_space<vmem>>, %arg13: memref<1x128xf32, #tpu.memory_space<vmem>>, %arg14: memref<128x128xbf16, #tpu.memory_space<vmem>>, %arg15: memref<1x128xf32, #tpu.memory_space<vmem>>, %arg16: memref<128x4096xbf16, #tpu.memory_space<vmem>>, %arg17: memref<1x4096xf32, #tpu.memory_space<vmem>>, %arg18: memref<8x4096xf32, #tpu.memory_space<vmem>>, %arg19: memref<8x128xf32, #tpu.memory_space<vmem>>) attributes {dimension_semantics = [#tpu.dimension_semantics<parallel>], iteration_bounds = array<i64: 1>, scalar_prefetch = 0 : i64, scratch_operands = 0 : i64, tpu.core_type = #tpu.core_type<tc>, window_params = [{transform_indices = @transform_0, window_bounds = array<i64: 8, 4096>}, {pipeline_mode = #tpu.pipeline_mode<synchronous>, transform_indices = @transform_1, window_bounds = array<i64: 4096, 128>}, {pipeline_mode = #tpu.pipeline_mode<synchronous>, transform_indices = @transform_2, window_bounds = array<i64: 1, 128>}, {pipeline_mode = #tpu.pipeline_mode<synchronous>, transform_indices = @transform_3, window_bounds = array<i64: 128, 128>}, {pipeline_mode = #tpu.pipeline_mode<synchronous>, transform_indices = @transform_4, window_bounds = array<i64: 1, 128>}, {pipeline_mode = #tpu.pipeline_mode<synchronous>, transform_indices = @transform_5, window_bounds = array<i64: 128, 128>}, {pipeline_mode = #tpu.pipeline_mode<synchronous>, transform_indices = @transform_6, window_bounds = array<i64: 1, 128>}, {pipeline_mode = #tpu.pipeline_mode<synchronous>, transform_indices = @transform_7, window_bounds = array<i64: 128, 128>}, {pipeline_mode = #tpu.pipeline_mode<synchronous>, transform_indices = @transform_8, window_bounds = array<i64: 1, 128>}, {pipeline_mode = #tpu.pipeline_mode<synchronous>, transform_indices = @transform_9, window_bounds = array<i64: 128, 128>}, {pipeline_mode = #tpu.pipeline_mode<synchronous>, transform_indices = @transform_10, window_bounds = array<i64: 1, 128>}, {pipeline_mode = #tpu.pipeline_mode<synchronous>, transform_indices = @transform_11, window_bounds = array<i64: 128, 128>}, {pipeline_mode = #tpu.pipeline_mode<synchronous>, transform_indices = @transform_12, window_bounds = array<i64: 1, 128>}, {pipeline_mode = #tpu.pipeline_mode<synchronous>, transform_indices = @transform_13, window_bounds = array<i64: 128, 128>}, {pipeline_mode = #tpu.pipeline_mode<synchronous>, transform_indices = @transform_14, window_bounds = array<i64: 1, 128>}, {pipeline_mode = #tpu.pipeline_mode<synchronous>, transform_indices = @transform_15, window_bounds = array<i64: 128, 4096>}, {pipeline_mode = #tpu.pipeline_mode<synchronous>, transform_indices = @transform_16, window_bounds = array<i64: 1, 4096>}, {transform_indices = @transform_17, window_bounds = array<i64: 8, 4096>}, {transform_indices = @transform_18, window_bounds = array<i64: 8, 128>}]} {
    %c0 = arith.constant 0 : index
    %c0_0 = arith.constant 0 : index
    %0 = vector.load %arg1[%c0, %c0_0] : memref<8x4096xf32, #tpu.memory_space<vmem>>, vector<8x4096xf32>
    %1 = arith.truncf %0 : vector<8x4096xf32> to vector<8x4096xbf16>
    %c0_1 = arith.constant 0 : index
    %c0_2 = arith.constant 0 : index
    %2 = vector.load %arg2[%c0_1, %c0_2] : memref<4096x128xbf16, #tpu.memory_space<vmem>>, vector<4096x128xbf16>
    %cst = arith.constant dense<0.000000e+00> : vector<8x128xf32>
    %3 = tpu.matmul %1, %2, %cst {dimension_numbers = #tpu.dot_dimension_numbers<[1], [0], [0], [1], [0, 0, 1, 1], [], []>} : vector<8x4096xbf16>, vector<4096x128xbf16>, vector<8x128xf32> -> vector<8x128xf32>
    %c0_3 = arith.constant 0 : index
    %c0_4 = arith.constant 0 : index
    %4 = vector.load %arg3[%c0_3, %c0_4] : memref<1x128xf32, #tpu.memory_space<vmem>>, vector<1x128xf32>
    %5 = vector.broadcast %4 : vector<1x128xf32> to vector<8x128xf32>
    %6 = arith.addf %3, %5 : vector<8x128xf32>
    %cst_5 = arith.constant 0.000000e+00 : f32
    %7 = vector.broadcast %cst_5 : f32 to vector<8x128xf32>
    %8 = arith.maximumf %6, %7 : vector<8x128xf32>
    %9 = arith.truncf %8 : vector<8x128xf32> to vector<8x128xbf16>
    %c0_6 = arith.constant 0 : index
    %c0_7 = arith.constant 0 : index
    %10 = vector.load %arg4[%c0_6, %c0_7] : memref<128x128xbf16, #tpu.memory_space<vmem>>, vector<128x128xbf16>
    %cst_8 = arith.constant dense<0.000000e+00> : vector<8x128xf32>
    %11 = tpu.matmul %9, %10, %cst_8 {dimension_numbers = #tpu.dot_dimension_numbers<[1], [0], [0], [1], [0, 0, 1, 1], [], []>} : vector<8x128xbf16>, vector<128x128xbf16>, vector<8x128xf32> -> vector<8x128xf32>
    %c0_9 = arith.constant 0 : index
    %c0_10 = arith.constant 0 : index
    %12 = vector.load %arg5[%c0_9, %c0_10] : memref<1x128xf32, #tpu.memory_space<vmem>>, vector<1x128xf32>
    %13 = vector.broadcast %12 : vector<1x128xf32> to vector<8x128xf32>
    %14 = arith.addf %11, %13 : vector<8x128xf32>
    %cst_11 = arith.constant 0.000000e+00 : f32
    %15 = vector.broadcast %cst_11 : f32 to vector<8x128xf32>
    %16 = arith.maximumf %14, %15 : vector<8x128xf32>
    %17 = arith.truncf %16 : vector<8x128xf32> to vector<8x128xbf16>
    %c0_12 = arith.constant 0 : index
    %c0_13 = arith.constant 0 : index
    %18 = vector.load %arg6[%c0_12, %c0_13] : memref<128x128xbf16, #tpu.memory_space<vmem>>, vector<128x128xbf16>
    %cst_14 = arith.constant dense<0.000000e+00> : vector<8x128xf32>
    %19 = tpu.matmul %17, %18, %cst_14 {dimension_numbers = #tpu.dot_dimension_numbers<[1], [0], [0], [1], [0, 0, 1, 1], [], []>} : vector<8x128xbf16>, vector<128x128xbf16>, vector<8x128xf32> -> vector<8x128xf32>
    %c0_15 = arith.constant 0 : index
    %c0_16 = arith.constant 0 : index
    %20 = vector.load %arg7[%c0_15, %c0_16] : memref<1x128xf32, #tpu.memory_space<vmem>>, vector<1x128xf32>
    %21 = vector.broadcast %20 : vector<1x128xf32> to vector<8x128xf32>
    %22 = arith.addf %19, %21 : vector<8x128xf32>
    %cst_17 = arith.constant 0.000000e+00 : f32
    %23 = vector.broadcast %cst_17 : f32 to vector<8x128xf32>
    %24 = arith.maximumf %22, %23 : vector<8x128xf32>
    %25 = arith.truncf %24 : vector<8x128xf32> to vector<8x128xbf16>
    %c0_18 = arith.constant 0 : index
    %c0_19 = arith.constant 0 : index
    %26 = vector.load %arg8[%c0_18, %c0_19] : memref<128x128xbf16, #tpu.memory_space<vmem>>, vector<128x128xbf16>
    %cst_20 = arith.constant dense<0.000000e+00> : vector<8x128xf32>
    %27 = tpu.matmul %25, %26, %cst_20 {dimension_numbers = #tpu.dot_dimension_numbers<[1], [0], [0], [1], [0, 0, 1, 1], [], []>} : vector<8x128xbf16>, vector<128x128xbf16>, vector<8x128xf32> -> vector<8x128xf32>
    %c0_21 = arith.constant 0 : index
    %c0_22 = arith.constant 0 : index
    %28 = vector.load %arg9[%c0_21, %c0_22] : memref<1x128xf32, #tpu.memory_space<vmem>>, vector<1x128xf32>
    %29 = vector.broadcast %28 : vector<1x128xf32> to vector<8x128xf32>
    %30 = arith.addf %27, %29 : vector<8x128xf32>
    %c0_23 = arith.constant 0 : index
    %c0_24 = arith.constant 0 : index
    %31 = vector.load %arg19[%c0_23, %c0_24] : memref<8x128xf32, #tpu.memory_space<vmem>>, vector<8x128xf32>
    tpu.vector_store %arg19[%c0_23, %c0_24], %30 {strides = array<i32>} : memref<8x128xf32, #tpu.memory_space<vmem>>, vector<8x128xf32>,
    %32 = arith.truncf %30 : vector<8x128xf32> to vector<8x128xbf16>
    %c0_25 = arith.constant 0 : index
    %c0_26 = arith.constant 0 : index
    %33 = vector.load %arg10[%c0_25, %c0_26] : memref<128x128xbf16, #tpu.memory_space<vmem>>, vector<128x128xbf16>
    %cst_27 = arith.constant dense<0.000000e+00> : vector<8x128xf32>
    %34 = tpu.matmul %32, %33, %cst_27 {dimension_numbers = #tpu.dot_dimension_numbers<[1], [0], [0], [1], [0, 0, 1, 1], [], []>} : vector<8x128xbf16>, vector<128x128xbf16>, vector<8x128xf32> -> vector<8x128xf32>
    %c0_28 = arith.constant 0 : index
    %c0_29 = arith.constant 0 : index
    %35 = vector.load %arg11[%c0_28, %c0_29] : memref<1x128xf32, #tpu.memory_space<vmem>>, vector<1x128xf32>
    %36 = vector.broadcast %35 : vector<1x128xf32> to vector<8x128xf32>
    %37 = arith.addf %34, %36 : vector<8x128xf32>
    %cst_30 = arith.constant 0.000000e+00 : f32
    %38 = vector.broadcast %cst_30 : f32 to vector<8x128xf32>
    %39 = arith.maximumf %37, %38 : vector<8x128xf32>
    %40 = arith.truncf %39 : vector<8x128xf32> to vector<8x128xbf16>
    %c0_31 = arith.constant 0 : index
    %c0_32 = arith.constant 0 : index
    %41 = vector.load %arg12[%c0_31, %c0_32] : memref<128x128xbf16, #tpu.memory_space<vmem>>, vector<128x128xbf16>
    %cst_33 = arith.constant dense<0.000000e+00> : vector<8x128xf32>
    %42 = tpu.matmul %40, %41, %cst_33 {dimension_numbers = #tpu.dot_dimension_numbers<[1], [0], [0], [1], [0, 0, 1, 1], [], []>} : vector<8x128xbf16>, vector<128x128xbf16>, vector<8x128xf32> -> vector<8x128xf32>
    %c0_34 = arith.constant 0 : index
    %c0_35 = arith.constant 0 : index
    %43 = vector.load %arg13[%c0_34, %c0_35] : memref<1x128xf32, #tpu.memory_space<vmem>>, vector<1x128xf32>
    %44 = vector.broadcast %43 : vector<1x128xf32> to vector<8x128xf32>
    %45 = arith.addf %42, %44 : vector<8x128xf32>
    %cst_36 = arith.constant 0.000000e+00 : f32
    %46 = vector.broadcast %cst_36 : f32 to vector<8x128xf32>
    %47 = arith.maximumf %45, %46 : vector<8x128xf32>
    %48 = arith.truncf %47 : vector<8x128xf32> to vector<8x128xbf16>
    %c0_37 = arith.constant 0 : index
    %c0_38 = arith.constant 0 : index
    %49 = vector.load %arg14[%c0_37, %c0_38] : memref<128x128xbf16, #tpu.memory_space<vmem>>, vector<128x128xbf16>
    %cst_39 = arith.constant dense<0.000000e+00> : vector<8x128xf32>
    %50 = tpu.matmul %48, %49, %cst_39 {dimension_numbers = #tpu.dot_dimension_numbers<[1], [0], [0], [1], [0, 0, 1, 1], [], []>} : vector<8x128xbf16>, vector<128x128xbf16>, vector<8x128xf32> -> vector<8x128xf32>
    %c0_40 = arith.constant 0 : index
    %c0_41 = arith.constant 0 : index
    %51 = vector.load %arg15[%c0_40, %c0_41] : memref<1x128xf32, #tpu.memory_space<vmem>>, vector<1x128xf32>
    %52 = vector.broadcast %51 : vector<1x128xf32> to vector<8x128xf32>
    %53 = arith.addf %50, %52 : vector<8x128xf32>
    %cst_42 = arith.constant 0.000000e+00 : f32
    %54 = vector.broadcast %cst_42 : f32 to vector<8x128xf32>
    %55 = arith.maximumf %53, %54 : vector<8x128xf32>
    %56 = arith.truncf %55 : vector<8x128xf32> to vector<8x128xbf16>
    %c0_43 = arith.constant 0 : index
    %c0_44 = arith.constant 0 : index
    %57 = vector.load %arg16[%c0_43, %c0_44] : memref<128x4096xbf16, #tpu.memory_space<vmem>>, vector<128x4096xbf16>
    %cst_45 = arith.constant dense<0.000000e+00> : vector<8x4096xf32>
    %58 = tpu.matmul %56, %57, %cst_45 {dimension_numbers = #tpu.dot_dimension_numbers<[1], [0], [0], [1], [0, 0, 1, 1], [], []>} : vector<8x128xbf16>, vector<128x4096xbf16>, vector<8x4096xf32> -> vector<8x4096xf32>
    %c0_46 = arith.constant 0 : index
    %c0_47 = arith.constant 0 : index
    %59 = vector.load %arg17[%c0_46, %c0_47] : memref<1x4096xf32, #tpu.memory_space<vmem>>, vector<1x4096xf32>
    %60 = vector.broadcast %59 : vector<1x4096xf32> to vector<8x4096xf32>
    %61 = arith.addf %58, %60 : vector<8x4096xf32>
    %c0_48 = arith.constant 0 : index
    %c0_49 = arith.constant 0 : index
    %62 = vector.load %arg18[%c0_48, %c0_49] : memref<8x4096xf32, #tpu.memory_space<vmem>>, vector<8x4096xf32>
    tpu.vector_store %arg18[%c0_48, %c0_49], %61 {strides = array<i32>} : memref<8x4096xf32, #tpu.memory_space<vmem>>, vector<8x4096xf32>,
    return
  }
  func.func @transform_0(%arg0: i32) -> (i32, i32) {
    %c0_i32 = arith.constant 0 : i32
    %c0_i32_0 = arith.constant 0 : i32
    return %arg0, %c0_i32 : i32, i32
  }
  func.func @transform_1(%arg0: i32) -> (i32, i32) {
    %c0_i32 = arith.constant 0 : i32
    %c0_i32_0 = arith.constant 0 : i32
    %c0_i32_1 = arith.constant 0 : i32
    return %c0_i32, %c0_i32_0 : i32, i32
  }
  func.func @transform_2(%arg0: i32) -> (i32, i32) {
    %c0_i32 = arith.constant 0 : i32
    %c0_i32_0 = arith.constant 0 : i32
    %c0_i32_1 = arith.constant 0 : i32
    return %c0_i32, %c0_i32_0 : i32, i32
  }
  func.func @transform_3(%arg0: i32) -> (i32, i32) {
    %c0_i32 = arith.constant 0 : i32
    %c0_i32_0 = arith.constant 0 : i32
    %c0_i32_1 = arith.constant 0 : i32
    return %c0_i32, %c0_i32_0 : i32, i32
  }
  func.func @transform_4(%arg0: i32) -> (i32, i32) {
    %c0_i32 = arith.constant 0 : i32
    %c0_i32_0 = arith.constant 0 : i32
    %c0_i32_1 = arith.constant 0 : i32
    return %c0_i32, %c0_i32_0 : i32, i32
  }
  func.func @transform_5(%arg0: i32) -> (i32, i32) {
    %c0_i32 = arith.constant 0 : i32
    %c0_i32_0 = arith.constant 0 : i32
    %c0_i32_1 = arith.constant 0 : i32
    return %c0_i32, %c0_i32_0 : i32, i32
  }
  func.func @transform_6(%arg0: i32) -> (i32, i32) {
    %c0_i32 = arith.constant 0 : i32
    %c0_i32_0 = arith.constant 0 : i32
    %c0_i32_1 = arith.constant 0 : i32
    return %c0_i32, %c0_i32_0 : i32, i32
  }
  func.func @transform_7(%arg0: i32) -> (i32, i32) {
    %c0_i32 = arith.constant 0 : i32
    %c0_i32_0 = arith.constant 0 : i32
    %c0_i32_1 = arith.constant 0 : i32
    return %c0_i32, %c0_i32_0 : i32, i32
  }
  func.func @transform_8(%arg0: i32) -> (i32, i32) {
    %c0_i32 = arith.constant 0 : i32
    %c0_i32_0 = arith.constant 0 : i32
    %c0_i32_1 = arith.constant 0 : i32
    return %c0_i32, %c0_i32_0 : i32, i32
  }
  func.func @transform_9(%arg0: i32) -> (i32, i32) {
    %c0_i32 = arith.constant 0 : i32
    %c0_i32_0 = arith.constant 0 : i32
    %c0_i32_1 = arith.constant 0 : i32
    return %c0_i32, %c0_i32_0 : i32, i32
  }
  func.func @transform_10(%arg0: i32) -> (i32, i32) {
    %c0_i32 = arith.constant 0 : i32
    %c0_i32_0 = arith.constant 0 : i32
    %c0_i32_1 = arith.constant 0 : i32
    return %c0_i32, %c0_i32_0 : i32, i32
  }
  func.func @transform_11(%arg0: i32) -> (i32, i32) {
    %c0_i32 = arith.constant 0 : i32
    %c0_i32_0 = arith.constant 0 : i32
    %c0_i32_1 = arith.constant 0 : i32
    return %c0_i32, %c0_i32_0 : i32, i32
  }
  func.func @transform_12(%arg0: i32) -> (i32, i32) {
    %c0_i32 = arith.constant 0 : i32
    %c0_i32_0 = arith.constant 0 : i32
    %c0_i32_1 = arith.constant 0 : i32
    return %c0_i32, %c0_i32_0 : i32, i32
  }
  func.func @transform_13(%arg0: i32) -> (i32, i32) {
    %c0_i32 = arith.constant 0 : i32
    %c0_i32_0 = arith.constant 0 : i32
    %c0_i32_1 = arith.constant 0 : i32
    return %c0_i32, %c0_i32_0 : i32, i32
  }
  func.func @transform_14(%arg0: i32) -> (i32, i32) {
    %c0_i32 = arith.constant 0 : i32
    %c0_i32_0 = arith.constant 0 : i32
    %c0_i32_1 = arith.constant 0 : i32
    return %c0_i32, %c0_i32_0 : i32, i32
  }
  func.func @transform_15(%arg0: i32) -> (i32, i32) {
    %c0_i32 = arith.constant 0 : i32
    %c0_i32_0 = arith.constant 0 : i32
    %c0_i32_1 = arith.constant 0 : i32
    return %c0_i32, %c0_i32_0 : i32, i32
  }
  func.func @transform_16(%arg0: i32) -> (i32, i32) {
    %c0_i32 = arith.constant 0 : i32
    %c0_i32_0 = arith.constant 0 : i32
    %c0_i32_1 = arith.constant 0 : i32
    return %c0_i32, %c0_i32_0 : i32, i32
  }
  func.func @transform_17(%arg0: i32) -> (i32, i32) {
    %c0_i32 = arith.constant 0 : i32
    %c0_i32_0 = arith.constant 0 : i32
    return %arg0, %c0_i32 : i32, i32
  }
  func.func @transform_18(%arg0: i32) -> (i32, i32) {
    %c0_i32 = arith.constant 0 : i32
    %c0_i32_0 = arith.constant 0 : i32
    return %arg0, %c0_i32 : i32, i32
  }
}

</mosaic_0001>

<llo_original>
// kernel: base_ae_forward.1
$region0: #{base_ae_forward.1}
  #allocation0 [shape = 'u32[]', space=smem, size = 0x4, offset = 0x4, fixed_abs, tag = 'smem constant byte address 0x4 - core index']
  #allocation1 [shape = 'u32[144,128]{1,0:T(1,128)}', space=vmem, size = 0x12000, scoped, tag = 'internal scratch']
  %s0 = inlined_call_operand.vmem [shape: f32[8,4096], index: 0, kind: input, shape index: {}]
  %s1 = inlined_call_operand.hbm [shape: bf16[4096,128], index: 1, kind: input, shape index: {}]
  %s2 = inlined_call_operand.vmem [shape: f32[1,128], index: 2, kind: input, shape index: {}]
  %s3 = inlined_call_operand.vmem [shape: bf16[128,128], index: 3, kind: input, shape index: {}]
  %s4 = inlined_call_operand.vmem [shape: f32[1,128], index: 4, kind: input, shape index: {}]
  %s5 = inlined_call_operand.vmem [shape: bf16[128,128], index: 5, kind: input, shape index: {}]
  %s6 = inlined_call_operand.vmem [shape: f32[1,128], index: 6, kind: input, shape index: {}]
  %s7 = inlined_call_operand.vmem [shape: bf16[128,128], index: 7, kind: input, shape index: {}]
  %s8 = inlined_call_operand.vmem [shape: f32[1,128], index: 8, kind: input, shape index: {}]
  %s9 = inlined_call_operand.vmem [shape: bf16[128,128], index: 9, kind: input, shape index: {}]
  %s10 = inlined_call_operand.vmem [shape: f32[1,128], index: 10, kind: input, shape index: {}]
  %s11 = inlined_call_operand.vmem [shape: bf16[128,128], index: 11, kind: input, shape index: {}]
  %s12 = inlined_call_operand.vmem [shape: f32[1,128], index: 12, kind: input, shape index: {}]
  %s13 = inlined_call_operand.vmem [shape: bf16[128,128], index: 13, kind: input, shape index: {}]
  %s14 = inlined_call_operand.vmem [shape: f32[1,128], index: 14, kind: input, shape index: {}]
  %s15 = inlined_call_operand.hbm [shape: bf16[128,4096], index: 15, kind: input, shape index: {}]
  %s16 = inlined_call_operand.vmem [shape: f32[1,4096], index: 16, kind: input, shape index: {}]
  %s17 = inlined_call_operand.vmem [shape: f32[8,4096], index: 17, kind: output, shape index: {0}]
  %s18 = inlined_call_operand.hbm [shape: f32[8,128], index: 18, kind: output, shape index: {1}]
  %19 = xla_tuple %s17, %s18
  %s20 = sld [smem:[#allocation0]]
  $region94: #{base_ae_forward.1} parent=0
    _
  %s22 = ssub.s32 1, %s20
  %s23 = scalar_select 0, %s22, %s20
  $region1: #{base_ae_forward.1} parent=0
    #allocation2 [shape = 'u8[1048576]{0}', space=vmem, size = 0x100000, scoped, tag = 'input window, operand 1, single buffered']
    #allocation3 [shape = 's32[1]{0}', space=sflag, size = 0x4, scoped, tag = 'scoped memory for base_ae_forward.1']
    #allocation4 [shape = 's32[1]{0}', space=sflag, size = 0x4, scoped, tag = 'scoped memory for base_ae_forward.1']
    #allocation5 [shape = 'u8[1048576]{0}', space=vmem, size = 0x100000, scoped, tag = 'input window, operand 15, single buffered']
    #allocation6 [shape = 's32[1]{0}', space=sflag, size = 0x4, scoped, tag = 'scoped memory for base_ae_forward.1']
    #allocation7 [shape = 'u8[4096]{0}', space=vmem, size = 0x1000, scoped, tag = 'output window, operand 1, single buffered']
    %24 = vsyncpa [#allocation3], 0
    %25 = vsyncpa [#allocation6], 0
    %26 = vsyncpa [#allocation4], 0
    // Predicated region
    $region2: #{base_ae_forward.1} parent=1 // pred_check
      _
    $region3: #{base_ae_forward.1} parent=1 // pred_check_branch
      %28 = sbr.rel (0) target = $region5
    $region4: #{base_ae_forward.1} parent=1 // pred_region
      _
    $region5: #{base_ae_forward.1} parent=1 // pred_fallthru
      _
    // Predicated region
    $region6: #{base_ae_forward.1} parent=1 // pred_check
      _
    $region7: #{base_ae_forward.1} parent=1 // pred_check_branch
      %30 = sbr.rel (0) target = $region9
    $region8: #{base_ae_forward.1} parent=1 // pred_region
      %s32 = ssub.s32 32768, 32768
      %33 = vsyncadd [#allocation3], %s32
      %s34 = sshll.u32 [#allocation2], 4
      %s35 = int_to_ptr.vmem [resolvable:$true] %s34
      %40 = dma.hbm_to_vmem [thread:$0]  %s1, 32768, %s35, [#allocation3], 64, 64, 4
    $region9: #{base_ae_forward.1} parent=1 // pred_fallthru
      _
    // Predicated region
    $region10: #{base_ae_forward.1} parent=1 // pred_check
      _
    $region11: #{base_ae_forward.1} parent=1 // pred_check_branch
      %42 = sbr.rel (0) target = $region13
    $region12: #{base_ae_forward.1} parent=1 // pred_region
      _
    $region13: #{base_ae_forward.1} parent=1 // pred_fallthru
      _
    // Predicated region
    $region14: #{base_ae_forward.1} parent=1 // pred_check
      _
    $region15: #{base_ae_forward.1} parent=1 // pred_check_branch
      %44 = sbr.rel (0) target = $region17
    $region16: #{base_ae_forward.1} parent=1 // pred_region
      _
    $region17: #{base_ae_forward.1} parent=1 // pred_fallthru
      _
    // Predicated region
    $region18: #{base_ae_forward.1} parent=1 // pred_check
      _
    $region19: #{base_ae_forward.1} parent=1 // pred_check_branch
      %46 = sbr.rel (0) target = $region21
    $region20: #{base_ae_forward.1} parent=1 // pred_region
      _
    $region21: #{base_ae_forward.1} parent=1 // pred_fallthru
      _
    // Predicated region
    $region22: #{base_ae_forward.1} parent=1 // pred_check
      _
    $region23: #{base_ae_forward.1} parent=1 // pred_check_branch
      %48 = sbr.rel (0) target = $region25
    $region24: #{base_ae_forward.1} parent=1 // pred_region
      _
    $region25: #{base_ae_forward.1} parent=1 // pred_fallthru
      _
    // Predicated region
    $region26: #{base_ae_forward.1} parent=1 // pred_check
      _
    $region27: #{base_ae_forward.1} parent=1 // pred_check_branch
      %50 = sbr.rel (0) target = $region29
    $region28: #{base_ae_forward.1} parent=1 // pred_region
      _
    $region29: #{base_ae_forward.1} parent=1 // pred_fallthru
      _
    // Predicated region
    $region30: #{base_ae_forward.1} parent=1 // pred_check
      _
    $region31: #{base_ae_forward.1} parent=1 // pred_check_branch
      %52 = sbr.rel (0) target = $region33
    $region32: #{base_ae_forward.1} parent=1 // pred_region
      _
    $region33: #{base_ae_forward.1} parent=1 // pred_fallthru
      _
    // Predicated region
    $region34: #{base_ae_forward.1} parent=1 // pred_check
      _
    $region35: #{base_ae_forward.1} parent=1 // pred_check_branch
      %54 = sbr.rel (0) target = $region37
    $region36: #{base_ae_forward.1} parent=1 // pred_region
      _
    $region37: #{base_ae_forward.1} parent=1 // pred_fallthru
      _
    // Predicated region
    $region38: #{base_ae_forward.1} parent=1 // pred_check
      _
    $region39: #{base_ae_forward.1} parent=1 // pred_check_branch
      %56 = sbr.rel (0) target = $region41
    $region40: #{base_ae_forward.1} parent=1 // pred_region
      _
    $region41: #{base_ae_forward.1} parent=1 // pred_fallthru
      _
    // Predicated region
    $region42: #{base_ae_forward.1} parent=1 // pred_check
      _
    $region43: #{base_ae_forward.1} parent=1 // pred_check_branch
      %58 = sbr.rel (0) target = $region45
    $region44: #{base_ae_forward.1} parent=1 // pred_region
      _
    $region45: #{base_ae_forward.1} parent=1 // pred_fallthru
      _
    // Predicated region
    $region46: #{base_ae_forward.1} parent=1 // pred_check
      _
    $region47: #{base_ae_forward.1} parent=1 // pred_check_branch
      %60 = sbr.rel (0) target = $region49
    $region48: #{base_ae_forward.1} parent=1 // pred_region
      _
    $region49: #{base_ae_forward.1} parent=1 // pred_fallthru
      _
    // Predicated region
    $region50: #{base_ae_forward.1} parent=1 // pred_check
      _
    $region51: #{base_ae_forward.1} parent=1 // pred_check_branch
      %62 = sbr.rel (0) target = $region53
    $region52: #{base_ae_forward.1} parent=1 // pred_region
      _
    $region53: #{base_ae_forward.1} parent=1 // pred_fallthru
      _
    // Predicated region
    $region54: #{base_ae_forward.1} parent=1 // pred_check
      _
    $region55: #{base_ae_forward.1} parent=1 // pred_check_branch
      %64 = sbr.rel (0) target = $region57
    $region56: #{base_ae_forward.1} parent=1 // pred_region
      _
    $region57: #{base_ae_forward.1} parent=1 // pred_fallthru
      _
    // Predicated region
    $region58: #{base_ae_forward.1} parent=1 // pred_check
      _
    $region59: #{base_ae_forward.1} parent=1 // pred_check_branch
      %66 = sbr.rel (0) target = $region61
    $region60: #{base_ae_forward.1} parent=1 // pred_region
      _
    $region61: #{base_ae_forward.1} parent=1 // pred_fallthru
      _
    // Predicated region
    $region62: #{base_ae_forward.1} parent=1 // pred_check
      _
    $region63: #{base_ae_forward.1} parent=1 // pred_check_branch
      %68 = sbr.rel (0) target = $region65
    $region64: #{base_ae_forward.1} parent=1 // pred_region
      %s70 = ssub.s32 32768, 32768
      %71 = vsyncadd [#allocation6], %s70
      %s72 = sshll.u32 [#allocation5], 4
      %s73 = int_to_ptr.vmem [resolvable:$true] %s72
      %78 = dma.hbm_to_vmem [thread:$0]  %s15, 32768, %s73, [#allocation6], 2048, 2048, 128
    $region65: #{base_ae_forward.1} parent=1 // pred_fallthru
      _
    // Predicated region
    $region66: #{base_ae_forward.1} parent=1 // pred_check
      _
    $region67: #{base_ae_forward.1} parent=1 // pred_check_branch
      %80 = sbr.rel (0) target = $region69
    $region68: #{base_ae_forward.1} parent=1 // pred_region
      _
    $region69: #{base_ae_forward.1} parent=1 // pred_fallthru
      _
    // Predicated region
    $region70: #{base_ae_forward.1} parent=1 // pred_check
      _
    $region71: #{base_ae_forward.1} parent=1 // pred_check_branch
      %82 = sbr.rel (0) target = $region73
    $region72: #{base_ae_forward.1} parent=1 // pred_region
      %83 = dma.done [#allocation3], 32768
    $region73: #{base_ae_forward.1} parent=1 // pred_fallthru
      _
    // Predicated region
    $region74: #{base_ae_forward.1} parent=1 // pred_check
      _
    $region75: #{base_ae_forward.1} parent=1 // pred_check_branch
      %85 = sbr.rel (0) target = $region77
    $region76: #{base_ae_forward.1} parent=1 // pred_region
      %86 = dma.done [#allocation6], 32768
    $region77: #{base_ae_forward.1} parent=1 // pred_fallthru
      _
    %v88 = vld [vmem:[%s0] sm:$0xff]
    %v89 = vld [vmem:[%s0 + $0x8] sm:$0xff]
    %v90 = vld [vmem:[%s0 + $0x10] sm:$0xff]
    %v91 = vld [vmem:[%s0 + $0x18] sm:$0xff]
    %v92 = vld [vmem:[%s0 + $0x20] sm:$0xff]
    %v93 = vld [vmem:[%s0 + $0x28] sm:$0xff]
    %v94 = vld [vmem:[%s0 + $0x30] sm:$0xff]
    %v95 = vld [vmem:[%s0 + $0x38] sm:$0xff]
    %v96 = vld [vmem:[%s0 + $0x40] sm:$0xff]
    %v97 = vld [vmem:[%s0 + $0x48] sm:$0xff]
    %v98 = vld [vmem:[%s0 + $0x50] sm:$0xff]
    %v99 = vld [vmem:[%s0 + $0x58] sm:$0xff]
    %v100 = vld [vmem:[%s0 + $0x60] sm:$0xff]
    %v101 = vld [vmem:[%s0 + $0x68] sm:$0xff]
    %v102 = vld [vmem:[%s0 + $0x70] sm:$0xff]
    %v103 = vld [vmem:[%s0 + $0x78] sm:$0xff]
    %v104 = vld [vmem:[%s0 + $0x80] sm:$0xff]
    %v105 = vld [vmem:[%s0 + $0x88] sm:$0xff]
    %v106 = vld [vmem:[%s0 + $0x90] sm:$0xff]
    %v107 = vld [vmem:[%s0 + $0x98] sm:$0xff]
    %v108 = vld [vmem:[%s0 + $0xa0] sm:$0xff]
    %v109 = vld [vmem:[%s0 + $0xa8] sm:$0xff]
    %v110 = vld [vmem:[%s0 + $0xb0] sm:$0xff]
    %v111 = vld [vmem:[%s0 + $0xb8] sm:$0xff]
    %v112 = vld [vmem:[%s0 + $0xc0] sm:$0xff]
    %v113 = vld [vmem:[%s0 + $0xc8] sm:$0xff]
    %v114 = vld [vmem:[%s0 + $0xd0] sm:$0xff]
    %v115 = vld [vmem:[%s0 + $0xd8] sm:$0xff]
    %v116 = vld [vmem:[%s0 + $0xe0] sm:$0xff]
    %v117 = vld [vmem:[%s0 + $0xe8] sm:$0xff]
    %v118 = vld [vmem:[%s0 + $0xf0] sm:$0xff]
    %v119 = vld [vmem:[%s0 + $0xf8] sm:$0xff]
    %v120 = vpack.c.bf16 %v88, %v88
    %v121 = vpack.c.bf16 %v89, %v89
    %v122 = vpack.c.bf16 %v90, %v90
    %v123 = vpack.c.bf16 %v91, %v91
    %v124 = vpack.c.bf16 %v92, %v92
    %v125 = vpack.c.bf16 %v93, %v93
    %v126 = vpack.c.bf16 %v94, %v94
    %v127 = vpack.c.bf16 %v95, %v95
    %v128 = vpack.c.bf16 %v96, %v96
    %v129 = vpack.c.bf16 %v97, %v97
    %v130 = vpack.c.bf16 %v98, %v98
    %v131 = vpack.c.bf16 %v99, %v99
    %v132 = vpack.c.bf16 %v100, %v100
    %v133 = vpack.c.bf16 %v101, %v101
    %v134 = vpack.c.bf16 %v102, %v102
    %v135 = vpack.c.bf16 %v103, %v103
    %v136 = vpack.c.bf16 %v104, %v104
    %v137 = vpack.c.bf16 %v105, %v105
    %v138 = vpack.c.bf16 %v106, %v106
    %v139 = vpack.c.bf16 %v107, %v107
    %v140 = vpack.c.bf16 %v108, %v108
    %v141 = vpack.c.bf16 %v109, %v109
    %v142 = vpack.c.bf16 %v110, %v110
    %v143 = vpack.c.bf16 %v111, %v111
    %v144 = vpack.c.bf16 %v112, %v112
    %v145 = vpack.c.bf16 %v113, %v113
    %v146 = vpack.c.bf16 %v114, %v114
    %v147 = vpack.c.bf16 %v115, %v115
    %v148 = vpack.c.bf16 %v116, %v116
    %v149 = vpack.c.bf16 %v117, %v117
    %v150 = vpack.c.bf16 %v118, %v118
    %v151 = vpack.c.bf16 %v119, %v119
    %v152 = vld [vmem:[#allocation2] sm:$0xf]
    %v153 = vld [vmem:[#allocation2 + $0x4] sm:$0xf]
    %v154 = vld [vmem:[#allocation2 + $0x8] sm:$0xf]
    %v155 = vld [vmem:[#allocation2 + $0xc] sm:$0xf]
    %v156 = vld [vmem:[#allocation2 + $0x10] sm:$0xf]
    %v157 = vld [vmem:[#allocation2 + $0x14] sm:$0xf]
    %v158 = vld [vmem:[#allocation2 + $0x18] sm:$0xf]
    %v159 = vld [vmem:[#allocation2 + $0x1c] sm:$0xf]
    %v160 = vld [vmem:[#allocation2 + $0x20] sm:$0xf]
    %v161 = vld [vmem:[#allocation2 + $0x24] sm:$0xf]
    %v162 = vld [vmem:[#allocation2 + $0x28] sm:$0xf]
    %v163 = vld [vmem:[#allocation2 + $0x2c] sm:$0xf]
    %v164 = vld [vmem:[#allocation2 + $0x30] sm:$0xf]
    %v165 = vld [vmem:[#allocation2 + $0x34] sm:$0xf]
    %v166 = vld [vmem:[#allocation2 + $0x38] sm:$0xf]
    %v167 = vld [vmem:[#allocation2 + $0x3c] sm:$0xf]
    %v168 = vld [vmem:[#allocation2 + $0x40] sm:$0xf]
    %v169 = vld [vmem:[#allocation2 + $0x44] sm:$0xf]
    %v170 = vld [vmem:[#allocation2 + $0x48] sm:$0xf]
    %v171 = vld [vmem:[#allocation2 + $0x4c] sm:$0xf]
    %v172 = vld [vmem:[#allocation2 + $0x50] sm:$0xf]
    %v173 = vld [vmem:[#allocation2 + $0x54] sm:$0xf]
    %v174 = vld [vmem:[#allocation2 + $0x58] sm:$0xf]
    %v175 = vld [vmem:[#allocation2 + $0x5c] sm:$0xf]
    %v176 = vld [vmem:[#allocation2 + $0x60] sm:$0xf]
    %v177 = vld [vmem:[#allocation2 + $0x64] sm:$0xf]
    %v178 = vld [vmem:[#allocation2 + $0x68] sm:$0xf]
    %v179 = vld [vmem:[#allocation2 + $0x6c] sm:$0xf]
    %v180 = vld [vmem:[#allocation2 + $0x70] sm:$0xf]
    %v181 = vld [vmem:[#allocation2 + $0x74] sm:$0xf]
    %v182 = vld [vmem:[#allocation2 + $0x78] sm:$0xf]
    %v183 = vld [vmem:[#allocation2 + $0x7c] sm:$0xf]
    %v184 = vld [vmem:[#allocation2 + $0x80] sm:$0xf]
    %v185 = vld [vmem:[#allocation2 + $0x84] sm:$0xf]
    %v186 = vld [vmem:[#allocation2 + $0x88] sm:$0xf]
    %v187 = vld [vmem:[#allocation2 + $0x8c] sm:$0xf]
    %v188 = vld [vmem:[#allocation2 + $0x90] sm:$0xf]
    %v189 = vld [vmem:[#allocation2 + $0x94] sm:$0xf]
    %v190 = vld [vmem:[#allocation2 + $0x98] sm:$0xf]
    %v191 = vld [vmem:[#allocation2 + $0x9c] sm:$0xf]
    %v192 = vld [vmem:[#allocation2 + $0xa0] sm:$0xf]
    %v193 = vld [vmem:[#allocation2 + $0xa4] sm:$0xf]
    %v194 = vld [vmem:[#allocation2 + $0xa8] sm:$0xf]
    %v195 = vld [vmem:[#allocation2 + $0xac] sm:$0xf]
    %v196 = vld [vmem:[#allocation2 + $0xb0] sm:$0xf]
    %v197 = vld [vmem:[#allocation2 + $0xb4] sm:$0xf]
    %v198 = vld [vmem:[#allocation2 + $0xb8] sm:$0xf]
    %v199 = vld [vmem:[#allocation2 + $0xbc] sm:$0xf]
    %v200 = vld [vmem:[#allocation2 + $0xc0] sm:$0xf]
    %v201 = vld [vmem:[#allocation2 + $0xc4] sm:$0xf]
    %v202 = vld [vmem:[#allocation2 + $0xc8] sm:$0xf]
    %v203 = vld [vmem:[#allocation2 + $0xcc] sm:$0xf]
    %v204 = vld [vmem:[#allocation2 + $0xd0] sm:$0xf]
    %v205 = vld [vmem:[#allocation2 + $0xd4] sm:$0xf]
    %v206 = vld [vmem:[#allocation2 + $0xd8] sm:$0xf]
    %v207 = vld [vmem:[#allocation2 + $0xdc] sm:$0xf]
    %v208 = vld [vmem:[#allocation2 + $0xe0] sm:$0xf]
    %v209 = vld [vmem:[#allocation2 + $0xe4] sm:$0xf]
    %v210 = vld [vmem:[#allocation2 + $0xe8] sm:$0xf]
    %v211 = vld [vmem:[#allocation2 + $0xec] sm:$0xf]
    %v212 = vld [vmem:[#allocation2 + $0xf0] sm:$0xf]
    %v213 = vld [vmem:[#allocation2 + $0xf4] sm:$0xf]
    %v214 = vld [vmem:[#allocation2 + $0xf8] sm:$0xf]
    %v215 = vld [vmem:[#allocation2 + $0xfc] sm:$0xf]
    %v216 = vld [vmem:[#allocation2 + $0x100] sm:$0xf]
    %v217 = vld [vmem:[#allocation2 + $0x104] sm:$0xf]
    %v218 = vld [vmem:[#allocation2 + $0x108] sm:$0xf]
    %v219 = vld [vmem:[#allocation2 + $0x10c] sm:$0xf]
    %v220 = vld [vmem:[#allocation2 + $0x110] sm:$0xf]
    %v221 = vld [vmem:[#allocation2 + $0x114] sm:$0xf]
    %v222 = vld [vmem:[#allocation2 + $0x118] sm:$0xf]
    %v223 = vld [vmem:[#allocation2 + $0x11c] sm:$0xf]
    %v224 = vld [vmem:[#allocation2 + $0x120] sm:$0xf]
    %v225 = vld [vmem:[#allocation2 + $0x124] sm:$0xf]
    %v226 = vld [vmem:[#allocation2 + $0x128] sm:$0xf]
    %v227 = vld [vmem:[#allocation2 + $0x12c] sm:$0xf]
    %v228 = vld [vmem:[#allocation2 + $0x130] sm:$0xf]
    %v229 = vld [vmem:[#allocation2 + $0x134] sm:$0xf]
    %v230 = vld [vmem:[#allocation2 + $0x138] sm:$0xf]
    %v231 = vld [vmem:[#allocation2 + $0x13c] sm:$0xf]
    %v232 = vld [vmem:[#allocation2 + $0x140] sm:$0xf]
    %v233 = vld [vmem:[#allocation2 + $0x144] sm:$0xf]
    %v234 = vld [vmem:[#allocation2 + $0x148] sm:$0xf]
    %v235 = vld [vmem:[#allocation2 + $0x14c] sm:$0xf]
    %v236 = vld [vmem:[#allocation2 + $0x150] sm:$0xf]
    %v237 = vld [vmem:[#allocation2 + $0x154] sm:$0xf]
    %v238 = vld [vmem:[#allocation2 + $0x158] sm:$0xf]
    %v239 = vld [vmem:[#allocation2 + $0x15c] sm:$0xf]
    %v240 = vld [vmem:[#allocation2 + $0x160] sm:$0xf]
    %v241 = vld [vmem:[#allocation2 + $0x164] sm:$0xf]
    %v242 = vld [vmem:[#allocation2 + $0x168] sm:$0xf]
    %v243 = vld [vmem:[#allocation2 + $0x16c] sm:$0xf]
    %v244 = vld [vmem:[#allocation2 + $0x170] sm:$0xf]
    %v245 = vld [vmem:[#allocation2 + $0x174] sm:$0xf]
    %v246 = vld [vmem:[#allocation2 + $0x178] sm:$0xf]
    %v247 = vld [vmem:[#allocation2 + $0x17c] sm:$0xf]
    %v248 = vld [vmem:[#allocation2 + $0x180] sm:$0xf]
    %v249 = vld [vmem:[#allocation2 + $0x184] sm:$0xf]
    %v250 = vld [vmem:[#allocation2 + $0x188] sm:$0xf]
    %v251 = vld [vmem:[#allocation2 + $0x18c] sm:$0xf]
    %v252 = vld [vmem:[#allocation2 + $0x190] sm:$0xf]
    %v253 = vld [vmem:[#allocation2 + $0x194] sm:$0xf]
    %v254 = vld [vmem:[#allocation2 + $0x198] sm:$0xf]
    %v255 = vld [vmem:[#allocation2 + $0x19c] sm:$0xf]
    %v256 = vld [vmem:[#allocation2 + $0x1a0] sm:$0xf]
    %v257 = vld [vmem:[#allocation2 + $0x1a4] sm:$0xf]
    %v258 = vld [vmem:[#allocation2 + $0x1a8] sm:$0xf]
    %v259 = vld [vmem:[#allocation2 + $0x1ac] sm:$0xf]
    %v260 = vld [vmem:[#allocation2 + $0x1b0] sm:$0xf]
    %v261 = vld [vmem:[#allocation2 + $0x1b4] sm:$0xf]
    %v262 = vld [vmem:[#allocation2 + $0x1b8] sm:$0xf]
    %v263 = vld [vmem:[#allocation2 + $0x1bc] sm:$0xf]
    %v264 = vld [vmem:[#allocation2 + $0x1c0] sm:$0xf]
    %v265 = vld [vmem:[#allocation2 + $0x1c4] sm:$0xf]
    %v266 = vld [vmem:[#allocation2 + $0x1c8] sm:$0xf]
    %v267 = vld [vmem:[#allocation2 + $0x1cc] sm:$0xf]
    %v268 = vld [vmem:[#allocation2 + $0x1d0] sm:$0xf]
    %v269 = vld [vmem:[#allocation2 + $0x1d4] sm:$0xf]
    %v270 = vld [vmem:[#allocation2 + $0x1d8] sm:$0xf]
    %v271 = vld [vmem:[#allocation2 + $0x1dc] sm:$0xf]
    %v272 = vld [vmem:[#allocation2 + $0x1e0] sm:$0xf]
    %v273 = vld [vmem:[#allocation2 + $0x1e4] sm:$0xf]
    %v274 = vld [vmem:[#allocation2 + $0x1e8] sm:$0xf]
    %v275 = vld [vmem:[#allocation2 + $0x1ec] sm:$0xf]
    %v276 = vld [vmem:[#allocation2 + $0x1f0] sm:$0xf]
    %v277 = vld [vmem:[#allocation2 + $0x1f4] sm:$0xf]
    %v278 = vld [vmem:[#allocation2 + $0x1f8] sm:$0xf]
    %v279 = vld [vmem:[#allocation2 + $0x1fc] sm:$0xf]
    %v280 = vld [vmem:[#allocation2 + $0x200] sm:$0xf]
    %v281 = vld [vmem:[#allocation2 + $0x204] sm:$0xf]
    %v282 = vld [vmem:[#allocation2 + $0x208] sm:$0xf]
    %v283 = vld [vmem:[#allocation2 + $0x20c] sm:$0xf]
    %v284 = vld [vmem:[#allocation2 + $0x210] sm:$0xf]
    %v285 = vld [vmem:[#allocation2 + $0x214] sm:$0xf]
    %v286 = vld [vmem:[#allocation2 + $0x218] sm:$0xf]
    %v287 = vld [vmem:[#allocation2 + $0x21c] sm:$0xf]
    %v288 = vld [vmem:[#allocation2 + $0x220] sm:$0xf]
    %v289 = vld [vmem:[#allocation2 + $0x224] sm:$0xf]
    %v290 = vld [vmem:[#allocation2 + $0x228] sm:$0xf]
    %v291 = vld [vmem:[#allocation2 + $0x22c] sm:$0xf]
    %v292 = vld [vmem:[#allocation2 + $0x230] sm:$0xf]
    %v293 = vld [vmem:[#allocation2 + $0x234] sm:$0xf]
    %v294 = vld [vmem:[#allocation2 + $0x238] sm:$0xf]
    %v295 = vld [vmem:[#allocation2 + $0x23c] sm:$0xf]
    %v296 = vld [vmem:[#allocation2 + $0x240] sm:$0xf]
    %v297 = vld [vmem:[#allocation2 + $0x244] sm:$0xf]
    %v298 = vld [vmem:[#allocation2 + $0x248] sm:$0xf]
    %v299 = vld [vmem:[#allocation2 + $0x24c] sm:$0xf]
    %v300 = vld [vmem:[#allocation2 + $0x250] sm:$0xf]
    %v301 = vld [vmem:[#allocation2 + $0x254] sm:$0xf]
    %v302 = vld [vmem:[#allocation2 + $0x258] sm:$0xf]
    %v303 = vld [vmem:[#allocation2 + $0x25c] sm:$0xf]
    %v304 = vld [vmem:[#allocation2 + $0x260] sm:$0xf]
    %v305 = vld [vmem:[#allocation2 + $0x264] sm:$0xf]
    %v306 = vld [vmem:[#allocation2 + $0x268] sm:$0xf]
    %v307 = vld [vmem:[#allocation2 + $0x26c] sm:$0xf]
    %v308 = vld [vmem:[#allocation2 + $0x270] sm:$0xf]
    %v309 = vld [vmem:[#allocation2 + $0x274] sm:$0xf]
    %v310 = vld [vmem:[#allocation2 + $0x278] sm:$0xf]
    %v311 = vld [vmem:[#allocation2 + $0x27c] sm:$0xf]
    %v312 = vld [vmem:[#allocation2 + $0x280] sm:$0xf]
    %v313 = vld [vmem:[#allocation2 + $0x284] sm:$0xf]
    %v314 = vld [vmem:[#allocation2 + $0x288] sm:$0xf]
    %v315 = vld [vmem:[#allocation2 + $0x28c] sm:$0xf]
    %v316 = vld [vmem:[#allocation2 + $0x290] sm:$0xf]
    %v317 = vld [vmem:[#allocation2 + $0x294] sm:$0xf]
    %v318 = vld [vmem:[#allocation2 + $0x298] sm:$0xf]
    %v319 = vld [vmem:[#allocation2 + $0x29c] sm:$0xf]
    %v320 = vld [vmem:[#allocation2 + $0x2a0] sm:$0xf]
    %v321 = vld [vmem:[#allocation2 + $0x2a4] sm:$0xf]
    %v322 = vld [vmem:[#allocation2 + $0x2a8] sm:$0xf]
    %v323 = vld [vmem:[#allocation2 + $0x2ac] sm:$0xf]
    %v324 = vld [vmem:[#allocation2 + $0x2b0] sm:$0xf]
    %v325 = vld [vmem:[#allocation2 + $0x2b4] sm:$0xf]
    %v326 = vld [vmem:[#allocation2 + $0x2b8] sm:$0xf]
    %v327 = vld [vmem:[#allocation2 + $0x2bc] sm:$0xf]
    %v328 = vld [vmem:[#allocation2 + $0x2c0] sm:$0xf]
    %v329 = vld [vmem:[#allocation2 + $0x2c4] sm:$0xf]
    %v330 = vld [vmem:[#allocation2 + $0x2c8] sm:$0xf]
    %v331 = vld [vmem:[#allocation2 + $0x2cc] sm:$0xf]
    %v332 = vld [vmem:[#allocation2 + $0x2d0] sm:$0xf]
    %v333 = vld [vmem:[#allocation2 + $0x2d4] sm:$0xf]
    %v334 = vld [vmem:[#allocation2 + $0x2d8] sm:$0xf]
    %v335 = vld [vmem:[#allocation2 + $0x2dc] sm:$0xf]
    %v336 = vld [vmem:[#allocation2 + $0x2e0] sm:$0xf]
    %v337 = vld [vmem:[#allocation2 + $0x2e4] sm:$0xf]
    %v338 = vld [vmem:[#allocation2 + $0x2e8] sm:$0xf]
    %v339 = vld [vmem:[#allocation2 + $0x2ec] sm:$0xf]
    %v340 = vld [vmem:[#allocation2 + $0x2f0] sm:$0xf]
    %v341 = vld [vmem:[#allocation2 + $0x2f4] sm:$0xf]
    %v342 = vld [vmem:[#allocation2 + $0x2f8] sm:$0xf]
    %v343 = vld [vmem:[#allocation2 + $0x2fc] sm:$0xf]
    %v344 = vld [vmem:[#allocation2 + $0x300] sm:$0xf]
    %v345 = vld [vmem:[#allocation2 + $0x304] sm:$0xf]
    %v346 = vld [vmem:[#allocation2 + $0x308] sm:$0xf]
    %v347 = vld [vmem:[#allocation2 + $0x30c] sm:$0xf]
    %v348 = vld [vmem:[#allocation2 + $0x310] sm:$0xf]
    %v349 = vld [vmem:[#allocation2 + $0x314] sm:$0xf]
    %v350 = vld [vmem:[#allocation2 + $0x318] sm:$0xf]
    %v351 = vld [vmem:[#allocation2 + $0x31c] sm:$0xf]
    %v352 = vld [vmem:[#allocation2 + $0x320] sm:$0xf]
    %v353 = vld [vmem:[#allocation2 + $0x324] sm:$0xf]
    %v354 = vld [vmem:[#allocation2 + $0x328] sm:$0xf]
    %v355 = vld [vmem:[#allocation2 + $0x32c] sm:$0xf]
    %v356 = vld [vmem:[#allocation2 + $0x330] sm:$0xf]
    %v357 = vld [vmem:[#allocation2 + $0x334] sm:$0xf]
    %v358 = vld [vmem:[#allocation2 + $0x338] sm:$0xf]
    %v359 = vld [vmem:[#allocation2 + $0x33c] sm:$0xf]
    %v360 = vld [vmem:[#allocation2 + $0x340] sm:$0xf]
    %v361 = vld [vmem:[#allocation2 + $0x344] sm:$0xf]
    %v362 = vld [vmem:[#allocation2 + $0x348] sm:$0xf]
    %v363 = vld [vmem:[#allocation2 + $0x34c] sm:$0xf]
    %v364 = vld [vmem:[#allocation2 + $0x350] sm:$0xf]
    %v365 = vld [vmem:[#allocation2 + $0x354] sm:$0xf]
    %v366 = vld [vmem:[#allocation2 + $0x358] sm:$0xf]
    %v367 = vld [vmem:[#allocation2 + $0x35c] sm:$0xf]
    %v368 = vld [vmem:[#allocation2 + $0x360] sm:$0xf]
    %v369 = vld [vmem:[#allocation2 + $0x364] sm:$0xf]
    %v370 = vld [vmem:[#allocation2 + $0x368] sm:$0xf]
    %v371 = vld [vmem:[#allocation2 + $0x36c] sm:$0xf]
    %v372 = vld [vmem:[#allocation2 + $0x370] sm:$0xf]
    %v373 = vld [vmem:[#allocation2 + $0x374] sm:$0xf]
    %v374 = vld [vmem:[#allocation2 + $0x378] sm:$0xf]
    %v375 = vld [vmem:[#allocation2 + $0x37c] sm:$0xf]
    %v376 = vld [vmem:[#allocation2 + $0x380] sm:$0xf]
    %v377 = vld [vmem:[#allocation2 + $0x384] sm:$0xf]
    %v378 = vld [vmem:[#allocation2 + $0x388] sm:$0xf]
    %v379 = vld [vmem:[#allocation2 + $0x38c] sm:$0xf]
    %v380 = vld [vmem:[#allocation2 + $0x390] sm:$0xf]
    %v381 = vld [vmem:[#allocation2 + $0x394] sm:$0xf]
    %v382 = vld [vmem:[#allocation2 + $0x398] sm:$0xf]
    %v383 = vld [vmem:[#allocation2 + $0x39c] sm:$0xf]
    %v384 = vld [vmem:[#allocation2 + $0x3a0] sm:$0xf]
    %v385 = vld [vmem:[#allocation2 + $0x3a4] sm:$0xf]
    %v386 = vld [vmem:[#allocation2 + $0x3a8] sm:$0xf]
    %v387 = vld [vmem:[#allocation2 + $0x3ac] sm:$0xf]
    %v388 = vld [vmem:[#allocation2 + $0x3b0] sm:$0xf]
    %v389 = vld [vmem:[#allocation2 + $0x3b4] sm:$0xf]
    %v390 = vld [vmem:[#allocation2 + $0x3b8] sm:$0xf]
    %v391 = vld [vmem:[#allocation2 + $0x3bc] sm:$0xf]
    %v392 = vld [vmem:[#allocation2 + $0x3c0] sm:$0xf]
    %v393 = vld [vmem:[#allocation2 + $0x3c4] sm:$0xf]
    %v394 = vld [vmem:[#allocation2 + $0x3c8] sm:$0xf]
    %v395 = vld [vmem:[#allocation2 + $0x3cc] sm:$0xf]
    %v396 = vld [vmem:[#allocation2 + $0x3d0] sm:$0xf]
    %v397 = vld [vmem:[#allocation2 + $0x3d4] sm:$0xf]
    %v398 = vld [vmem:[#allocation2 + $0x3d8] sm:$0xf]
    %v399 = vld [vmem:[#allocation2 + $0x3dc] sm:$0xf]
    %v400 = vld [vmem:[#allocation2 + $0x3e0] sm:$0xf]
    %v401 = vld [vmem:[#allocation2 + $0x3e4] sm:$0xf]
    %v402 = vld [vmem:[#allocation2 + $0x3e8] sm:$0xf]
    %v403 = vld [vmem:[#allocation2 + $0x3ec] sm:$0xf]
    %v404 = vld [vmem:[#allocation2 + $0x3f0] sm:$0xf]
    %v405 = vld [vmem:[#allocation2 + $0x3f4] sm:$0xf]
    %v406 = vld [vmem:[#allocation2 + $0x3f8] sm:$0xf]
    %v407 = vld [vmem:[#allocation2 + $0x3fc] sm:$0xf]
    %v408 = vld [vmem:[#allocation2 + $0x400] sm:$0xf]
    %v409 = vld [vmem:[#allocation2 + $0x404] sm:$0xf]
    %v410 = vld [vmem:[#allocation2 + $0x408] sm:$0xf]
    %v411 = vld [vmem:[#allocation2 + $0x40c] sm:$0xf]
    %v412 = vld [vmem:[#allocation2 + $0x410] sm:$0xf]
    %v413 = vld [vmem:[#allocation2 + $0x414] sm:$0xf]
    %v414 = vld [vmem:[#allocation2 + $0x418] sm:$0xf]
    %v415 = vld [vmem:[#allocation2 + $0x41c] sm:$0xf]
    %v416 = vld [vmem:[#allocation2 + $0x420] sm:$0xf]
    %v417 = vld [vmem:[#allocation2 + $0x424] sm:$0xf]
    %v418 = vld [vmem:[#allocation2 + $0x428] sm:$0xf]
    %v419 = vld [vmem:[#allocation2 + $0x42c] sm:$0xf]
    %v420 = vld [vmem:[#allocation2 + $0x430] sm:$0xf]
    %v421 = vld [vmem:[#allocation2 + $0x434] sm:$0xf]
    %v422 = vld [vmem:[#allocation2 + $0x438] sm:$0xf]
    %v423 = vld [vmem:[#allocation2 + $0x43c] sm:$0xf]
    %v424 = vld [vmem:[#allocation2 + $0x440] sm:$0xf]
    %v425 = vld [vmem:[#allocation2 + $0x444] sm:$0xf]
    %v426 = vld [vmem:[#allocation2 + $0x448] sm:$0xf]
    %v427 = vld [vmem:[#allocation2 + $0x44c] sm:$0xf]
    %v428 = vld [vmem:[#allocation2 + $0x450] sm:$0xf]
    %v429 = vld [vmem:[#allocation2 + $0x454] sm:$0xf]
    %v430 = vld [vmem:[#allocation2 + $0x458] sm:$0xf]
    %v431 = vld [vmem:[#allocation2 + $0x45c] sm:$0xf]
    %v432 = vld [vmem:[#allocation2 + $0x460] sm:$0xf]
    %v433 = vld [vmem:[#allocation2 + $0x464] sm:$0xf]
    %v434 = vld [vmem:[#allocation2 + $0x468] sm:$0xf]
    %v435 = vld [vmem:[#allocation2 + $0x46c] sm:$0xf]
    %v436 = vld [vmem:[#allocation2 + $0x470] sm:$0xf]
    %v437 = vld [vmem:[#allocation2 + $0x474] sm:$0xf]
    %v438 = vld [vmem:[#allocation2 + $0x478] sm:$0xf]
    %v439 = vld [vmem:[#allocation2 + $0x47c] sm:$0xf]
    %v440 = vld [vmem:[#allocation2 + $0x480] sm:$0xf]
    %v441 = vld [vmem:[#allocation2 + $0x484] sm:$0xf]
    %v442 = vld [vmem:[#allocation2 + $0x488] sm:$0xf]
    %v443 = vld [vmem:[#allocation2 + $0x48c] sm:$0xf]
    %v444 = vld [vmem:[#allocation2 + $0x490] sm:$0xf]
    %v445 = vld [vmem:[#allocation2 + $0x494] sm:$0xf]
    %v446 = vld [vmem:[#allocation2 + $0x498] sm:$0xf]
    %v447 = vld [vmem:[#allocation2 + $0x49c] sm:$0xf]
    %v448 = vld [vmem:[#allocation2 + $0x4a0] sm:$0xf]
    %v449 = vld [vmem:[#allocation2 + $0x4a4] sm:$0xf]
    %v450 = vld [vmem:[#allocation2 + $0x4a8] sm:$0xf]
    %v451 = vld [vmem:[#allocation2 + $0x4ac] sm:$0xf]
    %v452 = vld [vmem:[#allocation2 + $0x4b0] sm:$0xf]
    %v453 = vld [vmem:[#allocation2 + $0x4b4] sm:$0xf]
    %v454 = vld [vmem:[#allocation2 + $0x4b8] sm:$0xf]
    %v455 = vld [vmem:[#allocation2 + $0x4bc] sm:$0xf]
    %v456 = vld [vmem:[#allocation2 + $0x4c0] sm:$0xf]
    %v457 = vld [vmem:[#allocation2 + $0x4c4] sm:$0xf]
    %v458 = vld [vmem:[#allocation2 + $0x4c8] sm:$0xf]
    %v459 = vld [vmem:[#allocation2 + $0x4cc] sm:$0xf]
    %v460 = vld [vmem:[#allocation2 + $0x4d0] sm:$0xf]
    %v461 = vld [vmem:[#allocation2 + $0x4d4] sm:$0xf]
    %v462 = vld [vmem:[#allocation2 + $0x4d8] sm:$0xf]
    %v463 = vld [vmem:[#allocation2 + $0x4dc] sm:$0xf]
    %v464 = vld [vmem:[#allocation2 + $0x4e0] sm:$0xf]
    %v465 = vld [vmem:[#allocation2 + $0x4e4] sm:$0xf]
    %v466 = vld [vmem:[#allocation2 + $0x4e8] sm:$0xf]
    %v467 = vld [vmem:[#allocation2 + $0x4ec] sm:$0xf]
    %v468 = vld [vmem:[#allocation2 + $0x4f0] sm:$0xf]
    %v469 = vld [vmem:[#allocation2 + $0x4f4] sm:$0xf]
    %v470 = vld [vmem:[#allocation2 + $0x4f8] sm:$0xf]
    %v471 = vld [vmem:[#allocation2 + $0x4fc] sm:$0xf]
    %v472 = vld [vmem:[#allocation2 + $0x500] sm:$0xf]
    %v473 = vld [vmem:[#allocation2 + $0x504] sm:$0xf]
    %v474 = vld [vmem:[#allocation2 + $0x508] sm:$0xf]
    %v475 = vld [vmem:[#allocation2 + $0x50c] sm:$0xf]
    %v476 = vld [vmem:[#allocation2 + $0x510] sm:$0xf]
    %v477 = vld [vmem:[#allocation2 + $0x514] sm:$0xf]
    %v478 = vld [vmem:[#allocation2 + $0x518] sm:$0xf]
    %v479 = vld [vmem:[#allocation2 + $0x51c] sm:$0xf]
    %v480 = vld [vmem:[#allocation2 + $0x520] sm:$0xf]
    %v481 = vld [vmem:[#allocation2 + $0x524] sm:$0xf]
    %v482 = vld [vmem:[#allocation2 + $0x528] sm:$0xf]
    %v483 = vld [vmem:[#allocation2 + $0x52c] sm:$0xf]
    %v484 = vld [vmem:[#allocation2 + $0x530] sm:$0xf]
    %v485 = vld [vmem:[#allocation2 + $0x534] sm:$0xf]
    %v486 = vld [vmem:[#allocation2 + $0x538] sm:$0xf]
    %v487 = vld [vmem:[#allocation2 + $0x53c] sm:$0xf]
    %v488 = vld [vmem:[#allocation2 + $0x540] sm:$0xf]
    %v489 = vld [vmem:[#allocation2 + $0x544] sm:$0xf]
    %v490 = vld [vmem:[#allocation2 + $0x548] sm:$0xf]
    %v491 = vld [vmem:[#allocation2 + $0x54c] sm:$0xf]
    %v492 = vld [vmem:[#allocation2 + $0x550] sm:$0xf]
    %v493 = vld [vmem:[#allocation2 + $0x554] sm:$0xf]
    %v494 = vld [vmem:[#allocation2 + $0x558] sm:$0xf]
    %v495 = vld [vmem:[#allocation2 + $0x55c] sm:$0xf]
    %v496 = vld [vmem:[#allocation2 + $0x560] sm:$0xf]
    %v497 = vld [vmem:[#allocation2 + $0x564] sm:$0xf]
    %v498 = vld [vmem:[#allocation2 + $0x568] sm:$0xf]
    %v499 = vld [vmem:[#allocation2 + $0x56c] sm:$0xf]
    %v500 = vld [vmem:[#allocation2 + $0x570] sm:$0xf]
    %v501 = vld [vmem:[#allocation2 + $0x574] sm:$0xf]
    %v502 = vld [vmem:[#allocation2 + $0x578] sm:$0xf]
    %v503 = vld [vmem:[#allocation2 + $0x57c] sm:$0xf]
    %v504 = vld [vmem:[#allocation2 + $0x580] sm:$0xf]
    %v505 = vld [vmem:[#allocation2 + $0x584] sm:$0xf]
    %v506 = vld [vmem:[#allocation2 + $0x588] sm:$0xf]
    %v507 = vld [vmem:[#allocation2 + $0x58c] sm:$0xf]
    %v508 = vld [vmem:[#allocation2 + $0x590] sm:$0xf]
    %v509 = vld [vmem:[#allocation2 + $0x594] sm:$0xf]
    %v510 = vld [vmem:[#allocation2 + $0x598] sm:$0xf]
    %v511 = vld [vmem:[#allocation2 + $0x59c] sm:$0xf]
    %v512 = vld [vmem:[#allocation2 + $0x5a0] sm:$0xf]
    %v513 = vld [vmem:[#allocation2 + $0x5a4] sm:$0xf]
    %v514 = vld [vmem:[#allocation2 + $0x5a8] sm:$0xf]
    %v515 = vld [vmem:[#allocation2 + $0x5ac] sm:$0xf]
    %v516 = vld [vmem:[#allocation2 + $0x5b0] sm:$0xf]
    %v517 = vld [vmem:[#allocation2 + $0x5b4] sm:$0xf]
    %v518 = vld [vmem:[#allocation2 + $0x5b8] sm:$0xf]
    %v519 = vld [vmem:[#allocation2 + $0x5bc] sm:$0xf]
    %v520 = vld [vmem:[#allocation2 + $0x5c0] sm:$0xf]
    %v521 = vld [vmem:[#allocation2 + $0x5c4] sm:$0xf]
    %v522 = vld [vmem:[#allocation2 + $0x5c8] sm:$0xf]
    %v523 = vld [vmem:[#allocation2 + $0x5cc] sm:$0xf]
    %v524 = vld [vmem:[#allocation2 + $0x5d0] sm:$0xf]
    %v525 = vld [vmem:[#allocation2 + $0x5d4] sm:$0xf]
    %v526 = vld [vmem:[#allocation2 + $0x5d8] sm:$0xf]
    %v527 = vld [vmem:[#allocation2 + $0x5dc] sm:$0xf]
    %v528 = vld [vmem:[#allocation2 + $0x5e0] sm:$0xf]
    %v529 = vld [vmem:[#allocation2 + $0x5e4] sm:$0xf]
    %v530 = vld [vmem:[#allocation2 + $0x5e8] sm:$0xf]
    %v531 = vld [vmem:[#allocation2 + $0x5ec] sm:$0xf]
    %v532 = vld [vmem:[#allocation2 + $0x5f0] sm:$0xf]
    %v533 = vld [vmem:[#allocation2 + $0x5f4] sm:$0xf]
    %v534 = vld [vmem:[#allocation2 + $0x5f8] sm:$0xf]
    %v535 = vld [vmem:[#allocation2 + $0x5fc] sm:$0xf]
    %v536 = vld [vmem:[#allocation2 + $0x600] sm:$0xf]
    %v537 = vld [vmem:[#allocation2 + $0x604] sm:$0xf]
    %v538 = vld [vmem:[#allocation2 + $0x608] sm:$0xf]
    %v539 = vld [vmem:[#allocation2 + $0x60c] sm:$0xf]
    %v540 = vld [vmem:[#allocation2 + $0x610] sm:$0xf]
    %v541 = vld [vmem:[#allocation2 + $0x614] sm:$0xf]
    %v542 = vld [vmem:[#allocation2 + $0x618] sm:$0xf]
    %v543 = vld [vmem:[#allocation2 + $0x61c] sm:$0xf]
    %v544 = vld [vmem:[#allocation2 + $0x620] sm:$0xf]
    %v545 = vld [vmem:[#allocation2 + $0x624] sm:$0xf]
    %v546 = vld [vmem:[#allocation2 + $0x628] sm:$0xf]
    %v547 = vld [vmem:[#allocation2 + $0x62c] sm:$0xf]
    %v548 = vld [vmem:[#allocation2 + $0x630] sm:$0xf]
    %v549 = vld [vmem:[#allocation2 + $0x634] sm:$0xf]
    %v550 = vld [vmem:[#allocation2 + $0x638] sm:$0xf]
    %v551 = vld [vmem:[#allocation2 + $0x63c] sm:$0xf]
    %v552 = vld [vmem:[#allocation2 + $0x640] sm:$0xf]
    %v553 = vld [vmem:[#allocation2 + $0x644] sm:$0xf]
    %v554 = vld [vmem:[#allocation2 + $0x648] sm:$0xf]
    %v555 = vld [vmem:[#allocation2 + $0x64c] sm:$0xf]
    %v556 = vld [vmem:[#allocation2 + $0x650] sm:$0xf]
    %v557 = vld [vmem:[#allocation2 + $0x654] sm:$0xf]
    %v558 = vld [vmem:[#allocation2 + $0x658] sm:$0xf]
    %v559 = vld [vmem:[#allocation2 + $0x65c] sm:$0xf]
    %v560 = vld [vmem:[#allocation2 + $0x660] sm:$0xf]
    %v561 = vld [vmem:[#allocation2 + $0x664] sm:$0xf]
    %v562 = vld [vmem:[#allocation2 + $0x668] sm:$0xf]
    %v563 = vld [vmem:[#allocation2 + $0x66c] sm:$0xf]
    %v564 = vld [vmem:[#allocation2 + $0x670] sm:$0xf]
    %v565 = vld [vmem:[#allocation2 + $0x674] sm:$0xf]
    %v566 = vld [vmem:[#allocation2 + $0x678] sm:$0xf]
    %v567 = vld [vmem:[#allocation2 + $0x67c] sm:$0xf]
    %v568 = vld [vmem:[#allocation2 + $0x680] sm:$0xf]
    %v569 = vld [vmem:[#allocation2 + $0x684] sm:$0xf]
    %v570 = vld [vmem:[#allocation2 + $0x688] sm:$0xf]
    %v571 = vld [vmem:[#allocation2 + $0x68c] sm:$0xf]
    %v572 = vld [vmem:[#allocation2 + $0x690] sm:$0xf]
    %v573 = vld [vmem:[#allocation2 + $0x694] sm:$0xf]
    %v574 = vld [vmem:[#allocation2 + $0x698] sm:$0xf]
    %v575 = vld [vmem:[#allocation2 + $0x69c] sm:$0xf]
    %v576 = vld [vmem:[#allocation2 + $0x6a0] sm:$0xf]
    %v577 = vld [vmem:[#allocation2 + $0x6a4] sm:$0xf]
    %v578 = vld [vmem:[#allocation2 + $0x6a8] sm:$0xf]
    %v579 = vld [vmem:[#allocation2 + $0x6ac] sm:$0xf]
    %v580 = vld [vmem:[#allocation2 + $0x6b0] sm:$0xf]
    %v581 = vld [vmem:[#allocation2 + $0x6b4] sm:$0xf]
    %v582 = vld [vmem:[#allocation2 + $0x6b8] sm:$0xf]
    %v583 = vld [vmem:[#allocation2 + $0x6bc] sm:$0xf]
    %v584 = vld [vmem:[#allocation2 + $0x6c0] sm:$0xf]
    %v585 = vld [vmem:[#allocation2 + $0x6c4] sm:$0xf]
    %v586 = vld [vmem:[#allocation2 + $0x6c8] sm:$0xf]
    %v587 = vld [vmem:[#allocation2 + $0x6cc] sm:$0xf]
    %v588 = vld [vmem:[#allocation2 + $0x6d0] sm:$0xf]
    %v589 = vld [vmem:[#allocation2 + $0x6d4] sm:$0xf]
    %v590 = vld [vmem:[#allocation2 + $0x6d8] sm:$0xf]
    %v591 = vld [vmem:[#allocation2 + $0x6dc] sm:$0xf]
    %v592 = vld [vmem:[#allocation2 + $0x6e0] sm:$0xf]
    %v593 = vld [vmem:[#allocation2 + $0x6e4] sm:$0xf]
    %v594 = vld [vmem:[#allocation2 + $0x6e8] sm:$0xf]
    %v595 = vld [vmem:[#allocation2 + $0x6ec] sm:$0xf]
    %v596 = vld [vmem:[#allocation2 + $0x6f0] sm:$0xf]
    %v597 = vld [vmem:[#allocation2 + $0x6f4] sm:$0xf]
    %v598 = vld [vmem:[#allocation2 + $0x6f8] sm:$0xf]
    %v599 = vld [vmem:[#allocation2 + $0x6fc] sm:$0xf]
    %v600 = vld [vmem:[#allocation2 + $0x700] sm:$0xf]
    %v601 = vld [vmem:[#allocation2 + $0x704] sm:$0xf]
    %v602 = vld [vmem:[#allocation2 + $0x708] sm:$0xf]
    %v603 = vld [vmem:[#allocation2 + $0x70c] sm:$0xf]
    %v604 = vld [vmem:[#allocation2 + $0x710] sm:$0xf]
    %v605 = vld [vmem:[#allocation2 + $0x714] sm:$0xf]
    %v606 = vld [vmem:[#allocation2 + $0x718] sm:$0xf]
    %v607 = vld [vmem:[#allocation2 + $0x71c] sm:$0xf]
    %v608 = vld [vmem:[#allocation2 + $0x720] sm:$0xf]
    %v609 = vld [vmem:[#allocation2 + $0x724] sm:$0xf]
    %v610 = vld [vmem:[#allocation2 + $0x728] sm:$0xf]
    %v611 = vld [vmem:[#allocation2 + $0x72c] sm:$0xf]
    %v612 = vld [vmem:[#allocation2 + $0x730] sm:$0xf]
    %v613 = vld [vmem:[#allocation2 + $0x734] sm:$0xf]
    %v614 = vld [vmem:[#allocation2 + $0x738] sm:$0xf]
    %v615 = vld [vmem:[#allocation2 + $0x73c] sm:$0xf]
    %v616 = vld [vmem:[#allocation2 + $0x740] sm:$0xf]
    %v617 = vld [vmem:[#allocation2 + $0x744] sm:$0xf]
    %v618 = vld [vmem:[#allocation2 + $0x748] sm:$0xf]
    %v619 = vld [vmem:[#allocation2 + $0x74c] sm:$0xf]
    %v620 = vld [vmem:[#allocation2 + $0x750] sm:$0xf]
    %v621 = vld [vmem:[#allocation2 + $0x754] sm:$0xf]
    %v622 = vld [vmem:[#allocation2 + $0x758] sm:$0xf]
    %v623 = vld [vmem:[#allocation2 + $0x75c] sm:$0xf]
    %v624 = vld [vmem:[#allocation2 + $0x760] sm:$0xf]
    %v625 = vld [vmem:[#allocation2 + $0x764] sm:$0xf]
    %v626 = vld [vmem:[#allocation2 + $0x768] sm:$0xf]
    %v627 = vld [vmem:[#allocation2 + $0x76c] sm:$0xf]
    %v628 = vld [vmem:[#allocation2 + $0x770] sm:$0xf]
    %v629 = vld [vmem:[#allocation2 + $0x774] sm:$0xf]
    %v630 = vld [vmem:[#allocation2 + $0x778] sm:$0xf]
    %v631 = vld [vmem:[#allocation2 + $0x77c] sm:$0xf]
    %v632 = vld [vmem:[#allocation2 + $0x780] sm:$0xf]
    %v633 = vld [vmem:[#allocation2 + $0x784] sm:$0xf]
    %v634 = vld [vmem:[#allocation2 + $0x788] sm:$0xf]
    %v635 = vld [vmem:[#allocation2 + $0x78c] sm:$0xf]
    %v636 = vld [vmem:[#allocation2 + $0x790] sm:$0xf]
    %v637 = vld [vmem:[#allocation2 + $0x794] sm:$0xf]
    %v638 = vld [vmem:[#allocation2 + $0x798] sm:$0xf]
    %v639 = vld [vmem:[#allocation2 + $0x79c] sm:$0xf]
    %v640 = vld [vmem:[#allocation2 + $0x7a0] sm:$0xf]
    %v641 = vld [vmem:[#allocation2 + $0x7a4] sm:$0xf]
    %v642 = vld [vmem:[#allocation2 + $0x7a8] sm:$0xf]
    %v643 = vld [vmem:[#allocation2 + $0x7ac] sm:$0xf]
    %v644 = vld [vmem:[#allocation2 + $0x7b0] sm:$0xf]
    %v645 = vld [vmem:[#allocation2 + $0x7b4] sm:$0xf]
    %v646 = vld [vmem:[#allocation2 + $0x7b8] sm:$0xf]
    %v647 = vld [vmem:[#allocation2 + $0x7bc] sm:$0xf]
    %v648 = vld [vmem:[#allocation2 + $0x7c0] sm:$0xf]
    %v649 = vld [vmem:[#allocation2 + $0x7c4] sm:$0xf]
    %v650 = vld [vmem:[#allocation2 + $0x7c8] sm:$0xf]
    %v651 = vld [vmem:[#allocation2 + $0x7cc] sm:$0xf]
    %v652 = vld [vmem:[#allocation2 + $0x7d0] sm:$0xf]
    %v653 = vld [vmem:[#allocation2 + $0x7d4] sm:$0xf]
    %v654 = vld [vmem:[#allocation2 + $0x7d8] sm:$0xf]
    %v655 = vld [vmem:[#allocation2 + $0x7dc] sm:$0xf]
    %v656 = vld [vmem:[#allocation2 + $0x7e0] sm:$0xf]
    %v657 = vld [vmem:[#allocation2 + $0x7e4] sm:$0xf]
    %v658 = vld [vmem:[#allocation2 + $0x7e8] sm:$0xf]
    %v659 = vld [vmem:[#allocation2 + $0x7ec] sm:$0xf]
    %v660 = vld [vmem:[#allocation2 + $0x7f0] sm:$0xf]
    %v661 = vld [vmem:[#allocation2 + $0x7f4] sm:$0xf]
    %v662 = vld [vmem:[#allocation2 + $0x7f8] sm:$0xf]
    %v663 = vld [vmem:[#allocation2 + $0x7fc] sm:$0xf]
    %v664 = vld [vmem:[%s2] sm:$0x1]
    %v666 = vlaneseq
    %v667 = vshrl.u32 %v666, 7
    %v668 = vsub.s32 0, %v667
    %v669 = vrot.slane %v664, %v668
    %v1183 = vunpack.c.l.b16 %v152
    %v1184 = vunpack.c.l.b16 %v153
    %v1185 = vunpack.c.l.b16 %v154
    %v1186 = vunpack.c.l.b16 %v155
    %v1187 = vunpack.c.l.b16 %v156
    %v1188 = vunpack.c.l.b16 %v157
    %v1189 = vunpack.c.l.b16 %v158
    %v1190 = vunpack.c.l.b16 %v159
    %v1191 = vunpack.c.l.b16 %v160
    %v1192 = vunpack.c.l.b16 %v161
    %v1193 = vunpack.c.l.b16 %v162
    %v1194 = vunpack.c.l.b16 %v163
    %v1195 = vunpack.c.l.b16 %v164
    %v1196 = vunpack.c.l.b16 %v165
    %v1197 = vunpack.c.l.b16 %v166
    %v1198 = vunpack.c.l.b16 %v167
    %v1199 = vunpack.c.l.b16 %v168
    %v1200 = vunpack.c.l.b16 %v169
    %v1201 = vunpack.c.l.b16 %v170
    %v1202 = vunpack.c.l.b16 %v171
    %v1203 = vunpack.c.l.b16 %v172
    %v1204 = vunpack.c.l.b16 %v173
    %v1205 = vunpack.c.l.b16 %v174
    %v1206 = vunpack.c.l.b16 %v175
    %v1207 = vunpack.c.l.b16 %v176
    %v1208 = vunpack.c.l.b16 %v177
    %v1209 = vunpack.c.l.b16 %v178
    %v1210 = vunpack.c.l.b16 %v179
    %v1211 = vunpack.c.l.b16 %v180
    %v1212 = vunpack.c.l.b16 %v181
    %v1213 = vunpack.c.l.b16 %v182
    %v1214 = vunpack.c.l.b16 %v183
    %v1215 = vunpack.c.l.b16 %v184
    %v1216 = vunpack.c.l.b16 %v185
    %v1217 = vunpack.c.l.b16 %v186
    %v1218 = vunpack.c.l.b16 %v187
    %v1219 = vunpack.c.l.b16 %v188
    %v1220 = vunpack.c.l.b16 %v189
    %v1221 = vunpack.c.l.b16 %v190
    %v1222 = vunpack.c.l.b16 %v191
    %v1223 = vunpack.c.l.b16 %v192
    %v1224 = vunpack.c.l.b16 %v193
    %v1225 = vunpack.c.l.b16 %v194
    %v1226 = vunpack.c.l.b16 %v195
    %v1227 = vunpack.c.l.b16 %v196
    %v1228 = vunpack.c.l.b16 %v197
    %v1229 = vunpack.c.l.b16 %v198
    %v1230 = vunpack.c.l.b16 %v199
    %v1231 = vunpack.c.l.b16 %v200
    %v1232 = vunpack.c.l.b16 %v201
    %v1233 = vunpack.c.l.b16 %v202
    %v1234 = vunpack.c.l.b16 %v203
    %v1235 = vunpack.c.l.b16 %v204
    %v1236 = vunpack.c.l.b16 %v205
    %v1237 = vunpack.c.l.b16 %v206
    %v1238 = vunpack.c.l.b16 %v207
    %v1239 = vunpack.c.l.b16 %v208
    %v1240 = vunpack.c.l.b16 %v209
    %v1241 = vunpack.c.l.b16 %v210
    %v1242 = vunpack.c.l.b16 %v211
    %v1243 = vunpack.c.l.b16 %v212
    %v1244 = vunpack.c.l.b16 %v213
    %v1245 = vunpack.c.l.b16 %v214
    %v1246 = vunpack.c.l.b16 %v215
    %v1247 = vunpack.c.l.b16 %v216
    %v1248 = vunpack.c.l.b16 %v217
    %v1249 = vunpack.c.l.b16 %v218
    %v1250 = vunpack.c.l.b16 %v219
    %v1251 = vunpack.c.l.b16 %v220
    %v1252 = vunpack.c.l.b16 %v221
    %v1253 = vunpack.c.l.b16 %v222
    %v1254 = vunpack.c.l.b16 %v223
    %v1255 = vunpack.c.l.b16 %v224
    %v1256 = vunpack.c.l.b16 %v225
    %v1257 = vunpack.c.l.b16 %v226
    %v1258 = vunpack.c.l.b16 %v227
    %v1259 = vunpack.c.l.b16 %v228
    %v1260 = vunpack.c.l.b16 %v229
    %v1261 = vunpack.c.l.b16 %v230
    %v1262 = vunpack.c.l.b16 %v231
    %v1263 = vunpack.c.l.b16 %v232
    %v1264 = vunpack.c.l.b16 %v233
    %v1265 = vunpack.c.l.b16 %v234
    %v1266 = vunpack.c.l.b16 %v235
    %v1267 = vunpack.c.l.b16 %v236
    %v1268 = vunpack.c.l.b16 %v237
    %v1269 = vunpack.c.l.b16 %v238
    %v1270 = vunpack.c.l.b16 %v239
    %v1271 = vunpack.c.l.b16 %v240
    %v1272 = vunpack.c.l.b16 %v241
    %v1273 = vunpack.c.l.b16 %v242
    %v1274 = vunpack.c.l.b16 %v243
    %v1275 = vunpack.c.l.b16 %v244
    %v1276 = vunpack.c.l.b16 %v245
    %v1277 = vunpack.c.l.b16 %v246
    %v1278 = vunpack.c.l.b16 %v247
    %v1279 = vunpack.c.l.b16 %v248
    %v1280 = vunpack.c.l.b16 %v249
    %v1281 = vunpack.c.l.b16 %v250
    %v1282 = vunpack.c.l.b16 %v251
    %v1283 = vunpack.c.l.b16 %v252
    %v1284 = vunpack.c.l.b16 %v253
    %v1285 = vunpack.c.l.b16 %v254
    %v1286 = vunpack.c.l.b16 %v255
    %v1287 = vunpack.c.l.b16 %v256
    %v1288 = vunpack.c.l.b16 %v257
    %v1289 = vunpack.c.l.b16 %v258
    %v1290 = vunpack.c.l.b16 %v259
    %v1291 = vunpack.c.l.b16 %v260
    %v1292 = vunpack.c.l.b16 %v261
    %v1293 = vunpack.c.l.b16 %v262
    %v1294 = vunpack.c.l.b16 %v263
    %v1295 = vunpack.c.l.b16 %v264
    %v1296 = vunpack.c.l.b16 %v265
    %v1297 = vunpack.c.l.b16 %v266
    %v1298 = vunpack.c.l.b16 %v267
    %v1299 = vunpack.c.l.b16 %v268
    %v1300 = vunpack.c.l.b16 %v269
    %v1301 = vunpack.c.l.b16 %v270
    %v1302 = vunpack.c.l.b16 %v271
    %v1303 = vunpack.c.l.b16 %v272
    %v1304 = vunpack.c.l.b16 %v273
    %v1305 = vunpack.c.l.b16 %v274
    %v1306 = vunpack.c.l.b16 %v275
    %v1307 = vunpack.c.l.b16 %v276
    %v1308 = vunpack.c.l.b16 %v277
    %v1309 = vunpack.c.l.b16 %v278
    %v1310 = vunpack.c.l.b16 %v279
    %v1311 = vunpack.c.l.b16 %v280
    %v1312 = vunpack.c.l.b16 %v281
    %v1313 = vunpack.c.l.b16 %v282
    %v1314 = vunpack.c.l.b16 %v283
    %v1315 = vunpack.c.l.b16 %v284
    %v1316 = vunpack.c.l.b16 %v285
    %v1317 = vunpack.c.l.b16 %v286
    %v1318 = vunpack.c.l.b16 %v287
    %v1319 = vunpack.c.l.b16 %v288
    %v1320 = vunpack.c.l.b16 %v289
    %v1321 = vunpack.c.l.b16 %v290
    %v1322 = vunpack.c.l.b16 %v291
    %v1323 = vunpack.c.l.b16 %v292
    %v1324 = vunpack.c.l.b16 %v293
    %v1325 = vunpack.c.l.b16 %v294
    %v1326 = vunpack.c.l.b16 %v295
    %v1327 = vunpack.c.l.b16 %v296
    %v1328 = vunpack.c.l.b16 %v297
    %v1329 = vunpack.c.l.b16 %v298
    %v1330 = vunpack.c.l.b16 %v299
    %v1331 = vunpack.c.l.b16 %v300
    %v1332 = vunpack.c.l.b16 %v301
    %v1333 = vunpack.c.l.b16 %v302
    %v1334 = vunpack.c.l.b16 %v303
    %v1335 = vunpack.c.l.b16 %v304
    %v1336 = vunpack.c.l.b16 %v305
    %v1337 = vunpack.c.l.b16 %v306
    %v1338 = vunpack.c.l.b16 %v307
    %v1339 = vunpack.c.l.b16 %v308
    %v1340 = vunpack.c.l.b16 %v309
    %v1341 = vunpack.c.l.b16 %v310
    %v1342 = vunpack.c.l.b16 %v311
    %v1343 = vunpack.c.l.b16 %v312
    %v1344 = vunpack.c.l.b16 %v313
    %v1345 = vunpack.c.l.b16 %v314
    %v1346 = vunpack.c.l.b16 %v315
    %v1347 = vunpack.c.l.b16 %v316
    %v1348 = vunpack.c.l.b16 %v317
    %v1349 = vunpack.c.l.b16 %v318
    %v1350 = vunpack.c.l.b16 %v319
    %v1351 = vunpack.c.l.b16 %v320
    %v1352 = vunpack.c.l.b16 %v321
    %v1353 = vunpack.c.l.b16 %v322
    %v1354 = vunpack.c.l.b16 %v323
    %v1355 = vunpack.c.l.b16 %v324
    %v1356 = vunpack.c.l.b16 %v325
    %v1357 = vunpack.c.l.b16 %v326
    %v1358 = vunpack.c.l.b16 %v327
    %v1359 = vunpack.c.l.b16 %v328
    %v1360 = vunpack.c.l.b16 %v329
    %v1361 = vunpack.c.l.b16 %v330
    %v1362 = vunpack.c.l.b16 %v331
    %v1363 = vunpack.c.l.b16 %v332
    %v1364 = vunpack.c.l.b16 %v333
    %v1365 = vunpack.c.l.b16 %v334
    %v1366 = vunpack.c.l.b16 %v335
    %v1367 = vunpack.c.l.b16 %v336
    %v1368 = vunpack.c.l.b16 %v337
    %v1369 = vunpack.c.l.b16 %v338
    %v1370 = vunpack.c.l.b16 %v339
    %v1371 = vunpack.c.l.b16 %v340
    %v1372 = vunpack.c.l.b16 %v341
    %v1373 = vunpack.c.l.b16 %v342
    %v1374 = vunpack.c.l.b16 %v343
    %v1375 = vunpack.c.l.b16 %v344
    %v1376 = vunpack.c.l.b16 %v345
    %v1377 = vunpack.c.l.b16 %v346
    %v1378 = vunpack.c.l.b16 %v347
    %v1379 = vunpack.c.l.b16 %v348
    %v1380 = vunpack.c.l.b16 %v349
    %v1381 = vunpack.c.l.b16 %v350
    %v1382 = vunpack.c.l.b16 %v351
    %v1383 = vunpack.c.l.b16 %v352
    %v1384 = vunpack.c.l.b16 %v353
    %v1385 = vunpack.c.l.b16 %v354
    %v1386 = vunpack.c.l.b16 %v355
    %v1387 = vunpack.c.l.b16 %v356
    %v1388 = vunpack.c.l.b16 %v357
    %v1389 = vunpack.c.l.b16 %v358
    %v1390 = vunpack.c.l.b16 %v359
    %v1391 = vunpack.c.l.b16 %v360
    %v1392 = vunpack.c.l.b16 %v361
    %v1393 = vunpack.c.l.b16 %v362
    %v1394 = vunpack.c.l.b16 %v363
    %v1395 = vunpack.c.l.b16 %v364
    %v1396 = vunpack.c.l.b16 %v365
    %v1397 = vunpack.c.l.b16 %v366
    %v1398 = vunpack.c.l.b16 %v367
    %v1399 = vunpack.c.l.b16 %v368
    %v1400 = vunpack.c.l.b16 %v369
    %v1401 = vunpack.c.l.b16 %v370
    %v1402 = vunpack.c.l.b16 %v371
    %v1403 = vunpack.c.l.b16 %v372
    %v1404 = vunpack.c.l.b16 %v373
    %v1405 = vunpack.c.l.b16 %v374
    %v1406 = vunpack.c.l.b16 %v375
    %v1407 = vunpack.c.l.b16 %v376
    %v1408 = vunpack.c.l.b16 %v377
    %v1409 = vunpack.c.l.b16 %v378
    %v1410 = vunpack.c.l.b16 %v379
    %v1411 = vunpack.c.l.b16 %v380
    %v1412 = vunpack.c.l.b16 %v381
    %v1413 = vunpack.c.l.b16 %v382
    %v1414 = vunpack.c.l.b16 %v383
    %v1415 = vunpack.c.l.b16 %v384
    %v1416 = vunpack.c.l.b16 %v385
    %v1417 = vunpack.c.l.b16 %v386
    %v1418 = vunpack.c.l.b16 %v387
    %v1419 = vunpack.c.l.b16 %v388
    %v1420 = vunpack.c.l.b16 %v389
    %v1421 = vunpack.c.l.b16 %v390
    %v1422 = vunpack.c.l.b16 %v391
    %v1423 = vunpack.c.l.b16 %v392
    %v1424 = vunpack.c.l.b16 %v393
    %v1425 = vunpack.c.l.b16 %v394
    %v1426 = vunpack.c.l.b16 %v395
    %v1427 = vunpack.c.l.b16 %v396
    %v1428 = vunpack.c.l.b16 %v397
    %v1429 = vunpack.c.l.b16 %v398
    %v1430 = vunpack.c.l.b16 %v399
    %v1431 = vunpack.c.l.b16 %v400
    %v1432 = vunpack.c.l.b16 %v401
    %v1433 = vunpack.c.l.b16 %v402
    %v1434 = vunpack.c.l.b16 %v403
    %v1435 = vunpack.c.l.b16 %v404
    %v1436 = vunpack.c.l.b16 %v405
    %v1437 = vunpack.c.l.b16 %v406
    %v1438 = vunpack.c.l.b16 %v407
    %v1439 = vunpack.c.l.b16 %v408
    %v1440 = vunpack.c.l.b16 %v409
    %v1441 = vunpack.c.l.b16 %v410
    %v1442 = vunpack.c.l.b16 %v411
    %v1443 = vunpack.c.l.b16 %v412
    %v1444 = vunpack.c.l.b16 %v413
    %v1445 = vunpack.c.l.b16 %v414
    %v1446 = vunpack.c.l.b16 %v415
    %v1447 = vunpack.c.l.b16 %v416
    %v1448 = vunpack.c.l.b16 %v417
    %v1449 = vunpack.c.l.b16 %v418
    %v1450 = vunpack.c.l.b16 %v419
    %v1451 = vunpack.c.l.b16 %v420
    %v1452 = vunpack.c.l.b16 %v421
    %v1453 = vunpack.c.l.b16 %v422
    %v1454 = vunpack.c.l.b16 %v423
    %v1455 = vunpack.c.l.b16 %v424
    %v1456 = vunpack.c.l.b16 %v425
    %v1457 = vunpack.c.l.b16 %v426
    %v1458 = vunpack.c.l.b16 %v427
    %v1459 = vunpack.c.l.b16 %v428
    %v1460 = vunpack.c.l.b16 %v429
    %v1461 = vunpack.c.l.b16 %v430
    %v1462 = vunpack.c.l.b16 %v431
    %v1463 = vunpack.c.l.b16 %v432
    %v1464 = vunpack.c.l.b16 %v433
    %v1465 = vunpack.c.l.b16 %v434
    %v1466 = vunpack.c.l.b16 %v435
    %v1467 = vunpack.c.l.b16 %v436
    %v1468 = vunpack.c.l.b16 %v437
    %v1469 = vunpack.c.l.b16 %v438
    %v1470 = vunpack.c.l.b16 %v439
    %v1471 = vunpack.c.l.b16 %v440
    %v1472 = vunpack.c.l.b16 %v441
    %v1473 = vunpack.c.l.b16 %v442
    %v1474 = vunpack.c.l.b16 %v443
    %v1475 = vunpack.c.l.b16 %v444
    %v1476 = vunpack.c.l.b16 %v445
    %v1477 = vunpack.c.l.b16 %v446
    %v1478 = vunpack.c.l.b16 %v447
    %v1479 = vunpack.c.l.b16 %v448
    %v1480 = vunpack.c.l.b16 %v449
    %v1481 = vunpack.c.l.b16 %v450
    %v1482 = vunpack.c.l.b16 %v451
    %v1483 = vunpack.c.l.b16 %v452
    %v1484 = vunpack.c.l.b16 %v453
    %v1485 = vunpack.c.l.b16 %v454
    %v1486 = vunpack.c.l.b16 %v455
    %v1487 = vunpack.c.l.b16 %v456
    %v1488 = vunpack.c.l.b16 %v457
    %v1489 = vunpack.c.l.b16 %v458
    %v1490 = vunpack.c.l.b16 %v459
    %v1491 = vunpack.c.l.b16 %v460
    %v1492 = vunpack.c.l.b16 %v461
    %v1493 = vunpack.c.l.b16 %v462
    %v1494 = vunpack.c.l.b16 %v463
    %v1495 = vunpack.c.l.b16 %v464
    %v1496 = vunpack.c.l.b16 %v465
    %v1497 = vunpack.c.l.b16 %v466
    %v1498 = vunpack.c.l.b16 %v467
    %v1499 = vunpack.c.l.b16 %v468
    %v1500 = vunpack.c.l.b16 %v469
    %v1501 = vunpack.c.l.b16 %v470
    %v1502 = vunpack.c.l.b16 %v471
    %v1503 = vunpack.c.l.b16 %v472
    %v1504 = vunpack.c.l.b16 %v473
    %v1505 = vunpack.c.l.b16 %v474
    %v1506 = vunpack.c.l.b16 %v475
    %v1507 = vunpack.c.l.b16 %v476
    %v1508 = vunpack.c.l.b16 %v477
    %v1509 = vunpack.c.l.b16 %v478
    %v1510 = vunpack.c.l.b16 %v479
    %v1511 = vunpack.c.l.b16 %v480
    %v1512 = vunpack.c.l.b16 %v481
    %v1513 = vunpack.c.l.b16 %v482
    %v1514 = vunpack.c.l.b16 %v483
    %v1515 = vunpack.c.l.b16 %v484
    %v1516 = vunpack.c.l.b16 %v485
    %v1517 = vunpack.c.l.b16 %v486
    %v1518 = vunpack.c.l.b16 %v487
    %v1519 = vunpack.c.l.b16 %v488
    %v1520 = vunpack.c.l.b16 %v489
    %v1521 = vunpack.c.l.b16 %v490
    %v1522 = vunpack.c.l.b16 %v491
    %v1523 = vunpack.c.l.b16 %v492
    %v1524 = vunpack.c.l.b16 %v493
    %v1525 = vunpack.c.l.b16 %v494
    %v1526 = vunpack.c.l.b16 %v495
    %v1527 = vunpack.c.l.b16 %v496
    %v1528 = vunpack.c.l.b16 %v497
    %v1529 = vunpack.c.l.b16 %v498
    %v1530 = vunpack.c.l.b16 %v499
    %v1531 = vunpack.c.l.b16 %v500
    %v1532 = vunpack.c.l.b16 %v501
    %v1533 = vunpack.c.l.b16 %v502
    %v1534 = vunpack.c.l.b16 %v503
    %v1535 = vunpack.c.l.b16 %v504
    %v1536 = vunpack.c.l.b16 %v505
    %v1537 = vunpack.c.l.b16 %v506
    %v1538 = vunpack.c.l.b16 %v507
    %v1539 = vunpack.c.l.b16 %v508
    %v1540 = vunpack.c.l.b16 %v509
    %v1541 = vunpack.c.l.b16 %v510
    %v1542 = vunpack.c.l.b16 %v511
    %v1543 = vunpack.c.l.b16 %v512
    %v1544 = vunpack.c.l.b16 %v513
    %v1545 = vunpack.c.l.b16 %v514
    %v1546 = vunpack.c.l.b16 %v515
    %v1547 = vunpack.c.l.b16 %v516
    %v1548 = vunpack.c.l.b16 %v517
    %v1549 = vunpack.c.l.b16 %v518
    %v1550 = vunpack.c.l.b16 %v519
    %v1551 = vunpack.c.l.b16 %v520
    %v1552 = vunpack.c.l.b16 %v521
    %v1553 = vunpack.c.l.b16 %v522
    %v1554 = vunpack.c.l.b16 %v523
    %v1555 = vunpack.c.l.b16 %v524
    %v1556 = vunpack.c.l.b16 %v525
    %v1557 = vunpack.c.l.b16 %v526
    %v1558 = vunpack.c.l.b16 %v527
    %v1559 = vunpack.c.l.b16 %v528
    %v1560 = vunpack.c.l.b16 %v529
    %v1561 = vunpack.c.l.b16 %v530
    %v1562 = vunpack.c.l.b16 %v531
    %v1563 = vunpack.c.l.b16 %v532
    %v1564 = vunpack.c.l.b16 %v533
    %v1565 = vunpack.c.l.b16 %v534
    %v1566 = vunpack.c.l.b16 %v535
    %v1567 = vunpack.c.l.b16 %v536
    %v1568 = vunpack.c.l.b16 %v537
    %v1569 = vunpack.c.l.b16 %v538
    %v1570 = vunpack.c.l.b16 %v539
    %v1571 = vunpack.c.l.b16 %v540
    %v1572 = vunpack.c.l.b16 %v541
    %v1573 = vunpack.c.l.b16 %v542
    %v1574 = vunpack.c.l.b16 %v543
    %v1575 = vunpack.c.l.b16 %v544
    %v1576 = vunpack.c.l.b16 %v545
    %v1577 = vunpack.c.l.b16 %v546
    %v1578 = vunpack.c.l.b16 %v547
    %v1579 = vunpack.c.l.b16 %v548
    %v1580 = vunpack.c.l.b16 %v549
    %v1581 = vunpack.c.l.b16 %v550
    %v1582 = vunpack.c.l.b16 %v551
    %v1583 = vunpack.c.l.b16 %v552
    %v1584 = vunpack.c.l.b16 %v553
    %v1585 = vunpack.c.l.b16 %v554
    %v1586 = vunpack.c.l.b16 %v555
    %v1587 = vunpack.c.l.b16 %v556
    %v1588 = vunpack.c.l.b16 %v557
    %v1589 = vunpack.c.l.b16 %v558
    %v1590 = vunpack.c.l.b16 %v559
    %v1591 = vunpack.c.l.b16 %v560
    %v1592 = vunpack.c.l.b16 %v561
    %v1593 = vunpack.c.l.b16 %v562
    %v1594 = vunpack.c.l.b16 %v563
    %v1595 = vunpack.c.l.b16 %v564
    %v1596 = vunpack.c.l.b16 %v565
    %v1597 = vunpack.c.l.b16 %v566
    %v1598 = vunpack.c.l.b16 %v567
    %v1599 = vunpack.c.l.b16 %v568
    %v1600 = vunpack.c.l.b16 %v569
    %v1601 = vunpack.c.l.b16 %v570
    %v1602 = vunpack.c.l.b16 %v571
    %v1603 = vunpack.c.l.b16 %v572
    %v1604 = vunpack.c.l.b16 %v573
    %v1605 = vunpack.c.l.b16 %v574
    %v1606 = vunpack.c.l.b16 %v575
    %v1607 = vunpack.c.l.b16 %v576
    %v1608 = vunpack.c.l.b16 %v577
    %v1609 = vunpack.c.l.b16 %v578
    %v1610 = vunpack.c.l.b16 %v579
    %v1611 = vunpack.c.l.b16 %v580
    %v1612 = vunpack.c.l.b16 %v581
    %v1613 = vunpack.c.l.b16 %v582
    %v1614 = vunpack.c.l.b16 %v583
    %v1615 = vunpack.c.l.b16 %v584
    %v1616 = vunpack.c.l.b16 %v585
    %v1617 = vunpack.c.l.b16 %v586
    %v1618 = vunpack.c.l.b16 %v587
    %v1619 = vunpack.c.l.b16 %v588
    %v1620 = vunpack.c.l.b16 %v589
    %v1621 = vunpack.c.l.b16 %v590
    %v1622 = vunpack.c.l.b16 %v591
    %v1623 = vunpack.c.l.b16 %v592
    %v1624 = vunpack.c.l.b16 %v593
    %v1625 = vunpack.c.l.b16 %v594
    %v1626 = vunpack.c.l.b16 %v595
    %v1627 = vunpack.c.l.b16 %v596
    %v1628 = vunpack.c.l.b16 %v597
    %v1629 = vunpack.c.l.b16 %v598
    %v1630 = vunpack.c.l.b16 %v599
    %v1631 = vunpack.c.l.b16 %v600
    %v1632 = vunpack.c.l.b16 %v601
    %v1633 = vunpack.c.l.b16 %v602
    %v1634 = vunpack.c.l.b16 %v603
    %v1635 = vunpack.c.l.b16 %v604
    %v1636 = vunpack.c.l.b16 %v605
    %v1637 = vunpack.c.l.b16 %v606
    %v1638 = vunpack.c.l.b16 %v607
    %v1639 = vunpack.c.l.b16 %v608
    %v1640 = vunpack.c.l.b16 %v609
    %v1641 = vunpack.c.l.b16 %v610
    %v1642 = vunpack.c.l.b16 %v611
    %v1643 = vunpack.c.l.b16 %v612
    %v1644 = vunpack.c.l.b16 %v613
    %v1645 = vunpack.c.l.b16 %v614
    %v1646 = vunpack.c.l.b16 %v615
    %v1647 = vunpack.c.l.b16 %v616
    %v1648 = vunpack.c.l.b16 %v617
    %v1649 = vunpack.c.l.b16 %v618
    %v1650 = vunpack.c.l.b16 %v619
    %v1651 = vunpack.c.l.b16 %v620
    %v1652 = vunpack.c.l.b16 %v621
    %v1653 = vunpack.c.l.b16 %v622
    %v1654 = vunpack.c.l.b16 %v623
    %v1655 = vunpack.c.l.b16 %v624
    %v1656 = vunpack.c.l.b16 %v625
    %v1657 = vunpack.c.l.b16 %v626
    %v1658 = vunpack.c.l.b16 %v627
    %v1659 = vunpack.c.l.b16 %v628
    %v1660 = vunpack.c.l.b16 %v629
    %v1661 = vunpack.c.l.b16 %v630
    %v1662 = vunpack.c.l.b16 %v631
    %v1663 = vunpack.c.l.b16 %v632
    %v1664 = vunpack.c.l.b16 %v633
    %v1665 = vunpack.c.l.b16 %v634
    %v1666 = vunpack.c.l.b16 %v635
    %v1667 = vunpack.c.l.b16 %v636
    %v1668 = vunpack.c.l.b16 %v637
    %v1669 = vunpack.c.l.b16 %v638
    %v1670 = vunpack.c.l.b16 %v639
    %v1671 = vunpack.c.l.b16 %v640
    %v1672 = vunpack.c.l.b16 %v641
    %v1673 = vunpack.c.l.b16 %v642
    %v1674 = vunpack.c.l.b16 %v643
    %v1675 = vunpack.c.l.b16 %v644
    %v1676 = vunpack.c.l.b16 %v645
    %v1677 = vunpack.c.l.b16 %v646
    %v1678 = vunpack.c.l.b16 %v647
    %v1679 = vunpack.c.l.b16 %v648
    %v1680 = vunpack.c.l.b16 %v649
    %v1681 = vunpack.c.l.b16 %v650
    %v1682 = vunpack.c.l.b16 %v651
    %v1683 = vunpack.c.l.b16 %v652
    %v1684 = vunpack.c.l.b16 %v653
    %v1685 = vunpack.c.l.b16 %v654
    %v1686 = vunpack.c.l.b16 %v655
    %v1687 = vunpack.c.l.b16 %v656
    %v1688 = vunpack.c.l.b16 %v657
    %v1689 = vunpack.c.l.b16 %v658
    %v1690 = vunpack.c.l.b16 %v659
    %v1691 = vunpack.c.l.b16 %v660
    %v1692 = vunpack.c.l.b16 %v661
    %v1693 = vunpack.c.l.b16 %v662
    %v1694 = vunpack.c.l.b16 %v663
    %v1695 = vpack.c.b16 %v1184, %v1183
    %v1696 = vpack.c.b16 %v1186, %v1185
    %v1697 = vpack.c.b16 %v1188, %v1187
    %v1698 = vpack.c.b16 %v1190, %v1189
    %v1699 = vpack.c.b16 %v1192, %v1191
    %v1700 = vpack.c.b16 %v1194, %v1193
    %v1701 = vpack.c.b16 %v1196, %v1195
    %v1702 = vpack.c.b16 %v1198, %v1197
    %v1703 = vpack.c.b16 %v1200, %v1199
    %v1704 = vpack.c.b16 %v1202, %v1201
    %v1705 = vpack.c.b16 %v1204, %v1203
    %v1706 = vpack.c.b16 %v1206, %v1205
    %v1707 = vpack.c.b16 %v1208, %v1207
    %v1708 = vpack.c.b16 %v1210, %v1209
    %v1709 = vpack.c.b16 %v1212, %v1211
    %v1710 = vpack.c.b16 %v1214, %v1213
    %v1711 = vpack.c.b16 %v1216, %v1215
    %v1712 = vpack.c.b16 %v1218, %v1217
    %v1713 = vpack.c.b16 %v1220, %v1219
    %v1714 = vpack.c.b16 %v1222, %v1221
    %v1715 = vpack.c.b16 %v1224, %v1223
    %v1716 = vpack.c.b16 %v1226, %v1225
    %v1717 = vpack.c.b16 %v1228, %v1227
    %v1718 = vpack.c.b16 %v1230, %v1229
    %v1719 = vpack.c.b16 %v1232, %v1231
    %v1720 = vpack.c.b16 %v1234, %v1233
    %v1721 = vpack.c.b16 %v1236, %v1235
    %v1722 = vpack.c.b16 %v1238, %v1237
    %v1723 = vpack.c.b16 %v1240, %v1239
    %v1724 = vpack.c.b16 %v1242, %v1241
    %v1725 = vpack.c.b16 %v1244, %v1243
    %v1726 = vpack.c.b16 %v1246, %v1245
    %v1727 = vpack.c.b16 %v1248, %v1247
    %v1728 = vpack.c.b16 %v1250, %v1249
    %v1729 = vpack.c.b16 %v1252, %v1251
    %v1730 = vpack.c.b16 %v1254, %v1253
    %v1731 = vpack.c.b16 %v1256, %v1255
    %v1732 = vpack.c.b16 %v1258, %v1257
    %v1733 = vpack.c.b16 %v1260, %v1259
    %v1734 = vpack.c.b16 %v1262, %v1261
    %v1735 = vpack.c.b16 %v1264, %v1263
    %v1736 = vpack.c.b16 %v1266, %v1265
    %v1737 = vpack.c.b16 %v1268, %v1267
    %v1738 = vpack.c.b16 %v1270, %v1269
    %v1739 = vpack.c.b16 %v1272, %v1271
    %v1740 = vpack.c.b16 %v1274, %v1273
    %v1741 = vpack.c.b16 %v1276, %v1275
    %v1742 = vpack.c.b16 %v1278, %v1277
    %v1743 = vpack.c.b16 %v1280, %v1279
    %v1744 = vpack.c.b16 %v1282, %v1281
    %v1745 = vpack.c.b16 %v1284, %v1283
    %v1746 = vpack.c.b16 %v1286, %v1285
    %v1747 = vpack.c.b16 %v1288, %v1287
    %v1748 = vpack.c.b16 %v1290, %v1289
    %v1749 = vpack.c.b16 %v1292, %v1291
    %v1750 = vpack.c.b16 %v1294, %v1293
    %v1751 = vpack.c.b16 %v1296, %v1295
    %v1752 = vpack.c.b16 %v1298, %v1297
    %v1753 = vpack.c.b16 %v1300, %v1299
    %v1754 = vpack.c.b16 %v1302, %v1301
    %v1755 = vpack.c.b16 %v1304, %v1303
    %v1756 = vpack.c.b16 %v1306, %v1305
    %v1757 = vpack.c.b16 %v1308, %v1307
    %v1758 = vpack.c.b16 %v1310, %v1309
    %v1759 = vpack.c.b16 %v1312, %v1311
    %v1760 = vpack.c.b16 %v1314, %v1313
    %v1761 = vpack.c.b16 %v1316, %v1315
    %v1762 = vpack.c.b16 %v1318, %v1317
    %v1763 = vpack.c.b16 %v1320, %v1319
    %v1764 = vpack.c.b16 %v1322, %v1321
    %v1765 = vpack.c.b16 %v1324, %v1323
    %v1766 = vpack.c.b16 %v1326, %v1325
    %v1767 = vpack.c.b16 %v1328, %v1327
    %v1768 = vpack.c.b16 %v1330, %v1329
    %v1769 = vpack.c.b16 %v1332, %v1331
    %v1770 = vpack.c.b16 %v1334, %v1333
    %v1771 = vpack.c.b16 %v1336, %v1335
    %v1772 = vpack.c.b16 %v1338, %v1337
    %v1773 = vpack.c.b16 %v1340, %v1339
    %v1774 = vpack.c.b16 %v1342, %v1341
    %v1775 = vpack.c.b16 %v1344, %v1343
    %v1776 = vpack.c.b16 %v1346, %v1345
    %v1777 = vpack.c.b16 %v1348, %v1347
    %v1778 = vpack.c.b16 %v1350, %v1349
    %v1779 = vpack.c.b16 %v1352, %v1351
    %v1780 = vpack.c.b16 %v1354, %v1353
    %v1781 = vpack.c.b16 %v1356, %v1355
    %v1782 = vpack.c.b16 %v1358, %v1357
    %v1783 = vpack.c.b16 %v1360, %v1359
    %v1784 = vpack.c.b16 %v1362, %v1361
    %v1785 = vpack.c.b16 %v1364, %v1363
    %v1786 = vpack.c.b16 %v1366, %v1365
    %v1787 = vpack.c.b16 %v1368, %v1367
    %v1788 = vpack.c.b16 %v1370, %v1369
    %v1789 = vpack.c.b16 %v1372, %v1371
    %v1790 = vpack.c.b16 %v1374, %v1373
    %v1791 = vpack.c.b16 %v1376, %v1375
    %v1792 = vpack.c.b16 %v1378, %v1377
    %v1793 = vpack.c.b16 %v1380, %v1379
    %v1794 = vpack.c.b16 %v1382, %v1381
    %v1795 = vpack.c.b16 %v1384, %v1383
    %v1796 = vpack.c.b16 %v1386, %v1385
    %v1797 = vpack.c.b16 %v1388, %v1387
    %v1798 = vpack.c.b16 %v1390, %v1389
    %v1799 = vpack.c.b16 %v1392, %v1391
    %v1800 = vpack.c.b16 %v1394, %v1393
    %v1801 = vpack.c.b16 %v1396, %v1395
    %v1802 = vpack.c.b16 %v1398, %v1397
    %v1803 = vpack.c.b16 %v1400, %v1399
    %v1804 = vpack.c.b16 %v1402, %v1401
    %v1805 = vpack.c.b16 %v1404, %v1403
    %v1806 = vpack.c.b16 %v1406, %v1405
    %v1807 = vpack.c.b16 %v1408, %v1407
    %v1808 = vpack.c.b16 %v1410, %v1409
    %v1809 = vpack.c.b16 %v1412, %v1411
    %v1810 = vpack.c.b16 %v1414, %v1413
    %v1811 = vpack.c.b16 %v1416, %v1415
    %v1812 = vpack.c.b16 %v1418, %v1417
    %v1813 = vpack.c.b16 %v1420, %v1419
    %v1814 = vpack.c.b16 %v1422, %v1421
    %v1815 = vpack.c.b16 %v1424, %v1423
    %v1816 = vpack.c.b16 %v1426, %v1425
    %v1817 = vpack.c.b16 %v1428, %v1427
    %v1818 = vpack.c.b16 %v1430, %v1429
    %v1819 = vpack.c.b16 %v1432, %v1431
    %v1820 = vpack.c.b16 %v1434, %v1433
    %v1821 = vpack.c.b16 %v1436, %v1435
    %v1822 = vpack.c.b16 %v1438, %v1437
    %v1823 = vpack.c.b16 %v1440, %v1439
    %v1824 = vpack.c.b16 %v1442, %v1441
    %v1825 = vpack.c.b16 %v1444, %v1443
    %v1826 = vpack.c.b16 %v1446, %v1445
    %v1827 = vpack.c.b16 %v1448, %v1447
    %v1828 = vpack.c.b16 %v1450, %v1449
    %v1829 = vpack.c.b16 %v1452, %v1451
    %v1830 = vpack.c.b16 %v1454, %v1453
    %v1831 = vpack.c.b16 %v1456, %v1455
    %v1832 = vpack.c.b16 %v1458, %v1457
    %v1833 = vpack.c.b16 %v1460, %v1459
    %v1834 = vpack.c.b16 %v1462, %v1461
    %v1835 = vpack.c.b16 %v1464, %v1463
    %v1836 = vpack.c.b16 %v1466, %v1465
    %v1837 = vpack.c.b16 %v1468, %v1467
    %v1838 = vpack.c.b16 %v1470, %v1469
    %v1839 = vpack.c.b16 %v1472, %v1471
    %v1840 = vpack.c.b16 %v1474, %v1473
    %v1841 = vpack.c.b16 %v1476, %v1475
    %v1842 = vpack.c.b16 %v1478, %v1477
    %v1843 = vpack.c.b16 %v1480, %v1479
    %v1844 = vpack.c.b16 %v1482, %v1481
    %v1845 = vpack.c.b16 %v1484, %v1483
    %v1846 = vpack.c.b16 %v1486, %v1485
    %v1847 = vpack.c.b16 %v1488, %v1487
    %v1848 = vpack.c.b16 %v1490, %v1489
    %v1849 = vpack.c.b16 %v1492, %v1491
    %v1850 = vpack.c.b16 %v1494, %v1493
    %v1851 = vpack.c.b16 %v1496, %v1495
    %v1852 = vpack.c.b16 %v1498, %v1497
    %v1853 = vpack.c.b16 %v1500, %v1499
    %v1854 = vpack.c.b16 %v1502, %v1501
    %v1855 = vpack.c.b16 %v1504, %v1503
    %v1856 = vpack.c.b16 %v1506, %v1505
    %v1857 = vpack.c.b16 %v1508, %v1507
    %v1858 = vpack.c.b16 %v1510, %v1509
    %v1859 = vpack.c.b16 %v1512, %v1511
    %v1860 = vpack.c.b16 %v1514, %v1513
    %v1861 = vpack.c.b16 %v1516, %v1515
    %v1862 = vpack.c.b16 %v1518, %v1517
    %v1863 = vpack.c.b16 %v1520, %v1519
    %v1864 = vpack.c.b16 %v1522, %v1521
    %v1865 = vpack.c.b16 %v1524, %v1523
    %v1866 = vpack.c.b16 %v1526, %v1525
    %v1867 = vpack.c.b16 %v1528, %v1527
    %v1868 = vpack.c.b16 %v1530, %v1529
    %v1869 = vpack.c.b16 %v1532, %v1531
    %v1870 = vpack.c.b16 %v1534, %v1533
    %v1871 = vpack.c.b16 %v1536, %v1535
    %v1872 = vpack.c.b16 %v1538, %v1537
    %v1873 = vpack.c.b16 %v1540, %v1539
    %v1874 = vpack.c.b16 %v1542, %v1541
    %v1875 = vpack.c.b16 %v1544, %v1543
    %v1876 = vpack.c.b16 %v1546, %v1545
    %v1877 = vpack.c.b16 %v1548, %v1547
    %v1878 = vpack.c.b16 %v1550, %v1549
    %v1879 = vpack.c.b16 %v1552, %v1551
    %v1880 = vpack.c.b16 %v1554, %v1553
    %v1881 = vpack.c.b16 %v1556, %v1555
    %v1882 = vpack.c.b16 %v1558, %v1557
    %v1883 = vpack.c.b16 %v1560, %v1559
    %v1884 = vpack.c.b16 %v1562, %v1561
    %v1885 = vpack.c.b16 %v1564, %v1563
    %v1886 = vpack.c.b16 %v1566, %v1565
    %v1887 = vpack.c.b16 %v1568, %v1567
    %v1888 = vpack.c.b16 %v1570, %v1569
    %v1889 = vpack.c.b16 %v1572, %v1571
    %v1890 = vpack.c.b16 %v1574, %v1573
    %v1891 = vpack.c.b16 %v1576, %v1575
    %v1892 = vpack.c.b16 %v1578, %v1577
    %v1893 = vpack.c.b16 %v1580, %v1579
    %v1894 = vpack.c.b16 %v1582, %v1581
    %v1895 = vpack.c.b16 %v1584, %v1583
    %v1896 = vpack.c.b16 %v1586, %v1585
    %v1897 = vpack.c.b16 %v1588, %v1587
    %v1898 = vpack.c.b16 %v1590, %v1589
    %v1899 = vpack.c.b16 %v1592, %v1591
    %v1900 = vpack.c.b16 %v1594, %v1593
    %v1901 = vpack.c.b16 %v1596, %v1595
    %v1902 = vpack.c.b16 %v1598, %v1597
    %v1903 = vpack.c.b16 %v1600, %v1599
    %v1904 = vpack.c.b16 %v1602, %v1601
    %v1905 = vpack.c.b16 %v1604, %v1603
    %v1906 = vpack.c.b16 %v1606, %v1605
    %v1907 = vpack.c.b16 %v1608, %v1607
    %v1908 = vpack.c.b16 %v1610, %v1609
    %v1909 = vpack.c.b16 %v1612, %v1611
    %v1910 = vpack.c.b16 %v1614, %v1613
    %v1911 = vpack.c.b16 %v1616, %v1615
    %v1912 = vpack.c.b16 %v1618, %v1617
    %v1913 = vpack.c.b16 %v1620, %v1619
    %v1914 = vpack.c.b16 %v1622, %v1621
    %v1915 = vpack.c.b16 %v1624, %v1623
    %v1916 = vpack.c.b16 %v1626, %v1625
    %v1917 = vpack.c.b16 %v1628, %v1627
    %v1918 = vpack.c.b16 %v1630, %v1629
    %v1919 = vpack.c.b16 %v1632, %v1631
    %v1920 = vpack.c.b16 %v1634, %v1633
    %v1921 = vpack.c.b16 %v1636, %v1635
    %v1922 = vpack.c.b16 %v1638, %v1637
    %v1923 = vpack.c.b16 %v1640, %v1639
    %v1924 = vpack.c.b16 %v1642, %v1641
    %v1925 = vpack.c.b16 %v1644, %v1643
    %v1926 = vpack.c.b16 %v1646, %v1645
    %v1927 = vpack.c.b16 %v1648, %v1647
    %v1928 = vpack.c.b16 %v1650, %v1649
    %v1929 = vpack.c.b16 %v1652, %v1651
    %v1930 = vpack.c.b16 %v1654, %v1653
    %v1931 = vpack.c.b16 %v1656, %v1655
    %v1932 = vpack.c.b16 %v1658, %v1657
    %v1933 = vpack.c.b16 %v1660, %v1659
    %v1934 = vpack.c.b16 %v1662, %v1661
    %v1935 = vpack.c.b16 %v1664, %v1663
    %v1936 = vpack.c.b16 %v1666, %v1665
    %v1937 = vpack.c.b16 %v1668, %v1667
    %v1938 = vpack.c.b16 %v1670, %v1669
    %v1939 = vpack.c.b16 %v1672, %v1671
    %v1940 = vpack.c.b16 %v1674, %v1673
    %v1941 = vpack.c.b16 %v1676, %v1675
    %v1942 = vpack.c.b16 %v1678, %v1677
    %v1943 = vpack.c.b16 %v1680, %v1679
    %v1944 = vpack.c.b16 %v1682, %v1681
    %v1945 = vpack.c.b16 %v1684, %v1683
    %v1946 = vpack.c.b16 %v1686, %v1685
    %v1947 = vpack.c.b16 %v1688, %v1687
    %v1948 = vpack.c.b16 %v1690, %v1689
    %v1949 = vpack.c.b16 %v1692, %v1691
    %v1950 = vpack.c.b16 %v1694, %v1693
    %2207 = vmatprep.subr.bf16.mxu0 0
    %2208 = vmatpush1.bf16.msra.mxu0 %v1695
    %2209 = vmatprep.subr.bf16.mxu0 0
    %2210 = vmatpush1.bf16.msra.mxu0 %v1696
    %2211 = vmatprep.subr.bf16.mxu0 0
    %2212 = vmatpush1.bf16.msra.mxu0 %v1697
    %2213 = vmatprep.subr.bf16.mxu0 0
    %2214 = vmatpush1.bf16.msra.mxu0 %v1698
    %2215 = vmatprep.subr.bf16.mxu0 0
    %2216 = vmatpush1.bf16.msra.mxu0 %v1699
    %2217 = vmatprep.subr.bf16.mxu0 0
    %2218 = vmatpush1.bf16.msra.mxu0 %v1700
    %2219 = vmatprep.subr.bf16.mxu0 0
    %2220 = vmatpush1.bf16.msra.mxu0 %v1701
    %2221 = vmatprep.subr.bf16.mxu0 0
    %2222 = vmatpush1.bf16.msra.mxu0 %v1702
    %2223 = vmatprep.subr.bf16.mxu0 0
    %2224 = vmatpush1.bf16.msra.mxu0 %v1703
    %2225 = vmatprep.subr.bf16.mxu0 0
    %2226 = vmatpush1.bf16.msra.mxu0 %v1704
    %2227 = vmatprep.subr.bf16.mxu0 0
    %2228 = vmatpush1.bf16.msra.mxu0 %v1705
    %2229 = vmatprep.subr.bf16.mxu0 0
    %2230 = vmatpush1.bf16.msra.mxu0 %v1706
    %2231 = vmatprep.subr.bf16.mxu0 0
    %2232 = vmatpush1.bf16.msra.mxu0 %v1707
    %2233 = vmatprep.subr.bf16.mxu0 0
    %2234 = vmatpush1.bf16.msra.mxu0 %v1708
    %2235 = vmatprep.subr.bf16.mxu0 0
    %2236 = vmatpush1.bf16.msra.mxu0 %v1709
    %2237 = vmatprep.subr.bf16.mxu0 0
    %2238 = vmatpush1.bf16.msra.mxu0 %v1710
    %2239 = vmatprep.mubr.bf16.mxu0 %v121
    %2240 = vmatmul.mubr.bf16.gmra.mrb[0].mxu0 %v120
    %v2241 = vpop.f32.mrb[0].mxu0
    %v2242 = vadd.f32 %v669, %v2241
    %v2243 = vpop.f32.mrb[0].mxu0
    %v2244 = vpop.f32.mrb[0].mxu0
    %v2245 = vpop.f32.mrb[0].mxu0
    %2246 = vdwg.mxu0
    %2247 = vmatprep.subr.bf16.mxu0 0
    %2248 = vmatpush1.bf16.msra.mxu0 %v1711
    %2249 = vmatprep.subr.bf16.mxu0 0
    %2250 = vmatpush1.bf16.msra.mxu0 %v1712
    %2251 = vmatprep.subr.bf16.mxu0 0
    %2252 = vmatpush1.bf16.msra.mxu0 %v1713
    %2253 = vmatprep.subr.bf16.mxu0 0
    %2254 = vmatpush1.bf16.msra.mxu0 %v1714
    %2255 = vmatprep.subr.bf16.mxu0 0
    %2256 = vmatpush1.bf16.msra.mxu0 %v1715
    %2257 = vmatprep.subr.bf16.mxu0 0
    %2258 = vmatpush1.bf16.msra.mxu0 %v1716
    %2259 = vmatprep.subr.bf16.mxu0 0
    %2260 = vmatpush1.bf16.msra.mxu0 %v1717
    %2261 = vmatprep.subr.bf16.mxu0 0
    %2262 = vmatpush1.bf16.msra.mxu0 %v1718
    %2263 = vmatprep.subr.bf16.mxu0 0
    %2264 = vmatpush1.bf16.msra.mxu0 %v1719
    %2265 = vmatprep.subr.bf16.mxu0 0
    %2266 = vmatpush1.bf16.msra.mxu0 %v1720
    %2267 = vmatprep.subr.bf16.mxu0 0
    %2268 = vmatpush1.bf16.msra.mxu0 %v1721
    %2269 = vmatprep.subr.bf16.mxu0 0
    %2270 = vmatpush1.bf16.msra.mxu0 %v1722
    %2271 = vmatprep.subr.bf16.mxu0 0
    %2272 = vmatpush1.bf16.msra.mxu0 %v1723
    %2273 = vmatprep.subr.bf16.mxu0 0
    %2274 = vmatpush1.bf16.msra.mxu0 %v1724
    %2275 = vmatprep.subr.bf16.mxu0 0
    %2276 = vmatpush1.bf16.msra.mxu0 %v1725
    %2277 = vmatprep.subr.bf16.mxu0 0
    %2278 = vmatpush1.bf16.msra.mxu0 %v1726
    %2279 = vmatprep.mubr.bf16.mxu0 %v123
    %2280 = vmatmul.mubr.bf16.gmra.mrb[0].mxu0 %v122
    %v2281 = vpop.f32.mrb[0].mxu0
    %v2282 = vadd.f32 %v2242, %v2281
    %v2283 = vpop.f32.mrb[0].mxu0
    %v2284 = vpop.f32.mrb[0].mxu0
    %v2285 = vpop.f32.mrb[0].mxu0
    %2286 = vdwg.mxu0
    %2287 = vmatprep.subr.bf16.mxu0 0
    %2288 = vmatpush1.bf16.msra.mxu0 %v1727
    %2289 = vmatprep.subr.bf16.mxu0 0
    %2290 = vmatpush1.bf16.msra.mxu0 %v1728
    %2291 = vmatprep.subr.bf16.mxu0 0
    %2292 = vmatpush1.bf16.msra.mxu0 %v1729
    %2293 = vmatprep.subr.bf16.mxu0 0
    %2294 = vmatpush1.bf16.msra.mxu0 %v1730
    %2295 = vmatprep.subr.bf16.mxu0 0
    %2296 = vmatpush1.bf16.msra.mxu0 %v1731
    %2297 = vmatprep.subr.bf16.mxu0 0
    %2298 = vmatpush1.bf16.msra.mxu0 %v1732
    %2299 = vmatprep.subr.bf16.mxu0 0
    %2300 = vmatpush1.bf16.msra.mxu0 %v1733
    %2301 = vmatprep.subr.bf16.mxu0 0
    %2302 = vmatpush1.bf16.msra.mxu0 %v1734
    %2303 = vmatprep.subr.bf16.mxu0 0
    %2304 = vmatpush1.bf16.msra.mxu0 %v1735
    %2305 = vmatprep.subr.bf16.mxu0 0
    %2306 = vmatpush1.bf16.msra.mxu0 %v1736
    %2307 = vmatprep.subr.bf16.mxu0 0
    %2308 = vmatpush1.bf16.msra.mxu0 %v1737
    %2309 = vmatprep.subr.bf16.mxu0 0
    %2310 = vmatpush1.bf16.msra.mxu0 %v1738
    %2311 = vmatprep.subr.bf16.mxu0 0
    %2312 = vmatpush1.bf16.msra.mxu0 %v1739
    %2313 = vmatprep.subr.bf16.mxu0 0
    %2314 = vmatpush1.bf16.msra.mxu0 %v1740
    %2315 = vmatprep.subr.bf16.mxu0 0
    %2316 = vmatpush1.bf16.msra.mxu0 %v1741
    %2317 = vmatprep.subr.bf16.mxu0 0
    %2318 = vmatpush1.bf16.msra.mxu0 %v1742
    %2319 = vmatprep.mubr.bf16.mxu0 %v125
    %2320 = vmatmul.mubr.bf16.gmra.mrb[0].mxu0 %v124
    %v2321 = vpop.f32.mrb[0].mxu0
    %v2322 = vadd.f32 %v2282, %v2321
    %v2323 = vpop.f32.mrb[0].mxu0
    %v2324 = vpop.f32.mrb[0].mxu0
    %v2325 = vpop.f32.mrb[0].mxu0
    %2326 = vdwg.mxu0
    %2327 = vmatprep.subr.bf16.mxu0 0
    %2328 = vmatpush1.bf16.msra.mxu0 %v1743
    %2329 = vmatprep.subr.bf16.mxu0 0
    %2330 = vmatpush1.bf16.msra.mxu0 %v1744
    %2331 = vmatprep.subr.bf16.mxu0 0
    %2332 = vmatpush1.bf16.msra.mxu0 %v1745
    %2333 = vmatprep.subr.bf16.mxu0 0
    %2334 = vmatpush1.bf16.msra.mxu0 %v1746
    %2335 = vmatprep.subr.bf16.mxu0 0
    %2336 = vmatpush1.bf16.msra.mxu0 %v1747
    %2337 = vmatprep.subr.bf16.mxu0 0
    %2338 = vmatpush1.bf16.msra.mxu0 %v1748
    %2339 = vmatprep.subr.bf16.mxu0 0
    %2340 = vmatpush1.bf16.msra.mxu0 %v1749
    %2341 = vmatprep.subr.bf16.mxu0 0
    %2342 = vmatpush1.bf16.msra.mxu0 %v1750
    %2343 = vmatprep.subr.bf16.mxu0 0
    %2344 = vmatpush1.bf16.msra.mxu0 %v1751
    %2345 = vmatprep.subr.bf16.mxu0 0
    %2346 = vmatpush1.bf16.msra.mxu0 %v1752
    %2347 = vmatprep.subr.bf16.mxu0 0
    %2348 = vmatpush1.bf16.msra.mxu0 %v1753
    %2349 = vmatprep.subr.bf16.mxu0 0
    %2350 = vmatpush1.bf16.msra.mxu0 %v1754
    %2351 = vmatprep.subr.bf16.mxu0 0
    %2352 = vmatpush1.bf16.msra.mxu0 %v1755
    %2353 = vmatprep.subr.bf16.mxu0 0
    %2354 = vmatpush1.bf16.msra.mxu0 %v1756
    %2355 = vmatprep.subr.bf16.mxu0 0
    %2356 = vmatpush1.bf16.msra.mxu0 %v1757
    %2357 = vmatprep.subr.bf16.mxu0 0
    %2358 = vmatpush1.bf16.msra.mxu0 %v1758
    %2359 = vmatprep.mubr.bf16.mxu0 %v127
    %2360 = vmatmul.mubr.bf16.gmra.mrb[0].mxu0 %v126
    %v2361 = vpop.f32.mrb[0].mxu0
    %v2362 = vadd.f32 %v2322, %v2361
    %v2363 = vpop.f32.mrb[0].mxu0
    %v2364 = vpop.f32.mrb[0].mxu0
    %v2365 = vpop.f32.mrb[0].mxu0
    %2366 = vdwg.mxu0
    %2367 = vmatprep.subr.bf16.mxu0 0
    %2368 = vmatpush1.bf16.msra.mxu0 %v1759
    %2369 = vmatprep.subr.bf16.mxu0 0
    %2370 = vmatpush1.bf16.msra.mxu0 %v1760
    %2371 = vmatprep.subr.bf16.mxu0 0
    %2372 = vmatpush1.bf16.msra.mxu0 %v1761
    %2373 = vmatprep.subr.bf16.mxu0 0
    %2374 = vmatpush1.bf16.msra.mxu0 %v1762
    %2375 = vmatprep.subr.bf16.mxu0 0
    %2376 = vmatpush1.bf16.msra.mxu0 %v1763
    %2377 = vmatprep.subr.bf16.mxu0 0
    %2378 = vmatpush1.bf16.msra.mxu0 %v1764
    %2379 = vmatprep.subr.bf16.mxu0 0
    %2380 = vmatpush1.bf16.msra.mxu0 %v1765
    %2381 = vmatprep.subr.bf16.mxu0 0
    %2382 = vmatpush1.bf16.msra.mxu0 %v1766
    %2383 = vmatprep.subr.bf16.mxu0 0
    %2384 = vmatpush1.bf16.msra.mxu0 %v1767
    %2385 = vmatprep.subr.bf16.mxu0 0
    %2386 = vmatpush1.bf16.msra.mxu0 %v1768
    %2387 = vmatprep.subr.bf16.mxu0 0
    %2388 = vmatpush1.bf16.msra.mxu0 %v1769
    %2389 = vmatprep.subr.bf16.mxu0 0
    %2390 = vmatpush1.bf16.msra.mxu0 %v1770
    %2391 = vmatprep.subr.bf16.mxu0 0
    %2392 = vmatpush1.bf16.msra.mxu0 %v1771
    %2393 = vmatprep.subr.bf16.mxu0 0
    %2394 = vmatpush1.bf16.msra.mxu0 %v1772
    %2395 = vmatprep.subr.bf16.mxu0 0
    %2396 = vmatpush1.bf16.msra.mxu0 %v1773
    %2397 = vmatprep.subr.bf16.mxu0 0
    %2398 = vmatpush1.bf16.msra.mxu0 %v1774
    %2399 = vmatprep.mubr.bf16.mxu0 %v129
    %2400 = vmatmul.mubr.bf16.gmra.mrb[0].mxu0 %v128
    %v2401 = vpop.f32.mrb[0].mxu0
    %v2402 = vadd.f32 %v2362, %v2401
    %v2403 = vpop.f32.mrb[0].mxu0
    %v2404 = vpop.f32.mrb[0].mxu0
    %v2405 = vpop.f32.mrb[0].mxu0
    %2406 = vdwg.mxu0
    %2407 = vmatprep.subr.bf16.mxu0 0
    %2408 = vmatpush1.bf16.msra.mxu0 %v1775
    %2409 = vmatprep.subr.bf16.mxu0 0
    %2410 = vmatpush1.bf16.msra.mxu0 %v1776
    %2411 = vmatprep.subr.bf16.mxu0 0
    %2412 = vmatpush1.bf16.msra.mxu0 %v1777
    %2413 = vmatprep.subr.bf16.mxu0 0
    %2414 = vmatpush1.bf16.msra.mxu0 %v1778
    %2415 = vmatprep.subr.bf16.mxu0 0
    %2416 = vmatpush1.bf16.msra.mxu0 %v1779
    %2417 = vmatprep.subr.bf16.mxu0 0
    %2418 = vmatpush1.bf16.msra.mxu0 %v1780
    %2419 = vmatprep.subr.bf16.mxu0 0
    %2420 = vmatpush1.bf16.msra.mxu0 %v1781
    %2421 = vmatprep.subr.bf16.mxu0 0
    %2422 = vmatpush1.bf16.msra.mxu0 %v1782
    %2423 = vmatprep.subr.bf16.mxu0 0
    %2424 = vmatpush1.bf16.msra.mxu0 %v1783
    %2425 = vmatprep.subr.bf16.mxu0 0
    %2426 = vmatpush1.bf16.msra.mxu0 %v1784
    %2427 = vmatprep.subr.bf16.mxu0 0
    %2428 = vmatpush1.bf16.msra.mxu0 %v1785
    %2429 = vmatprep.subr.bf16.mxu0 0
    %2430 = vmatpush1.bf16.msra.mxu0 %v1786
    %2431 = vmatprep.subr.bf16.mxu0 0
    %2432 = vmatpush1.bf16.msra.mxu0 %v1787
    %2433 = vmatprep.subr.bf16.mxu0 0
    %2434 = vmatpush1.bf16.msra.mxu0 %v1788
    %2435 = vmatprep.subr.bf16.mxu0 0
    %2436 = vmatpush1.bf16.msra.mxu0 %v1789
    %2437 = vmatprep.subr.bf16.mxu0 0
    %2438 = vmatpush1.bf16.msra.mxu0 %v1790
    %2439 = vmatprep.mubr.bf16.mxu0 %v131
    %2440 = vmatmul.mubr.bf16.gmra.mrb[0].mxu0 %v130
    %v2441 = vpop.f32.mrb[0].mxu0
    %v2442 = vadd.f32 %v2402, %v2441
    %v2443 = vpop.f32.mrb[0].mxu0
    %v2444 = vpop.f32.mrb[0].mxu0
    %v2445 = vpop.f32.mrb[0].mxu0
    %2446 = vdwg.mxu0
    %2447 = vmatprep.subr.bf16.mxu0 0
    %2448 = vmatpush1.bf16.msra.mxu0 %v1791
    %2449 = vmatprep.subr.bf16.mxu0 0
    %2450 = vmatpush1.bf16.msra.mxu0 %v1792
    %2451 = vmatprep.subr.bf16.mxu0 0
    %2452 = vmatpush1.bf16.msra.mxu0 %v1793
    %2453 = vmatprep.subr.bf16.mxu0 0
    %2454 = vmatpush1.bf16.msra.mxu0 %v1794
    %2455 = vmatprep.subr.bf16.mxu0 0
    %2456 = vmatpush1.bf16.msra.mxu0 %v1795
    %2457 = vmatprep.subr.bf16.mxu0 0
    %2458 = vmatpush1.bf16.msra.mxu0 %v1796
    %2459 = vmatprep.subr.bf16.mxu0 0
    %2460 = vmatpush1.bf16.msra.mxu0 %v1797
    %2461 = vmatprep.subr.bf16.mxu0 0
    %2462 = vmatpush1.bf16.msra.mxu0 %v1798
    %2463 = vmatprep.subr.bf16.mxu0 0
    %2464 = vmatpush1.bf16.msra.mxu0 %v1799
    %2465 = vmatprep.subr.bf16.mxu0 0
    %2466 = vmatpush1.bf16.msra.mxu0 %v1800
    %2467 = vmatprep.subr.bf16.mxu0 0
    %2468 = vmatpush1.bf16.msra.mxu0 %v1801
    %2469 = vmatprep.subr.bf16.mxu0 0
    %2470 = vmatpush1.bf16.msra.mxu0 %v1802
    %2471 = vmatprep.subr.bf16.mxu0 0
    %2472 = vmatpush1.bf16.msra.mxu0 %v1803
    %2473 = vmatprep.subr.bf16.mxu0 0
    %2474 = vmatpush1.bf16.msra.mxu0 %v1804
    %2475 = vmatprep.subr.bf16.mxu0 0
    %2476 = vmatpush1.bf16.msra.mxu0 %v1805
    %2477 = vmatprep.subr.bf16.mxu0 0
    %2478 = vmatpush1.bf16.msra.mxu0 %v1806
    %2479 = vmatprep.mubr.bf16.mxu0 %v133
    %2480 = vmatmul.mubr.bf16.gmra.mrb[0].mxu0 %v132
    %v2481 = vpop.f32.mrb[0].mxu0
    %v2482 = vadd.f32 %v2442, %v2481
    %v2483 = vpop.f32.mrb[0].mxu0
    %v2484 = vpop.f32.mrb[0].mxu0
    %v2485 = vpop.f32.mrb[0].mxu0
    %2486 = vdwg.mxu0
    %2487 = vmatprep.subr.bf16.mxu0 0
    %2488 = vmatpush1.bf16.msra.mxu0 %v1807
    %2489 = vmatprep.subr.bf16.mxu0 0
    %2490 = vmatpush1.bf16.msra.mxu0 %v1808
    %2491 = vmatprep.subr.bf16.mxu0 0
    %2492 = vmatpush1.bf16.msra.mxu0 %v1809
    %2493 = vmatprep.subr.bf16.mxu0 0
    %2494 = vmatpush1.bf16.msra.mxu0 %v1810
    %2495 = vmatprep.subr.bf16.mxu0 0
    %2496 = vmatpush1.bf16.msra.mxu0 %v1811
    %2497 = vmatprep.subr.bf16.mxu0 0
    %2498 = vmatpush1.bf16.msra.mxu0 %v1812
    %2499 = vmatprep.subr.bf16.mxu0 0
    %2500 = vmatpush1.bf16.msra.mxu0 %v1813
    %2501 = vmatprep.subr.bf16.mxu0 0
    %2502 = vmatpush1.bf16.msra.mxu0 %v1814
    %2503 = vmatprep.subr.bf16.mxu0 0
    %2504 = vmatpush1.bf16.msra.mxu0 %v1815
    %2505 = vmatprep.subr.bf16.mxu0 0
    %2506 = vmatpush1.bf16.msra.mxu0 %v1816
    %2507 = vmatprep.subr.bf16.mxu0 0
    %2508 = vmatpush1.bf16.msra.mxu0 %v1817
    %2509 = vmatprep.subr.bf16.mxu0 0
    %2510 = vmatpush1.bf16.msra.mxu0 %v1818
    %2511 = vmatprep.subr.bf16.mxu0 0
    %2512 = vmatpush1.bf16.msra.mxu0 %v1819
    %2513 = vmatprep.subr.bf16.mxu0 0
    %2514 = vmatpush1.bf16.msra.mxu0 %v1820
    %2515 = vmatprep.subr.bf16.mxu0 0
    %2516 = vmatpush1.bf16.msra.mxu0 %v1821
    %2517 = vmatprep.subr.bf16.mxu0 0
    %2518 = vmatpush1.bf16.msra.mxu0 %v1822
    %2519 = vmatprep.mubr.bf16.mxu0 %v135
    %2520 = vmatmul.mubr.bf16.gmra.mrb[0].mxu0 %v134
    %v2521 = vpop.f32.mrb[0].mxu0
    %v2522 = vadd.f32 %v2482, %v2521
    %v2523 = vpop.f32.mrb[0].mxu0
    %v2524 = vpop.f32.mrb[0].mxu0
    %v2525 = vpop.f32.mrb[0].mxu0
    %2526 = vdwg.mxu0
    %2527 = vmatprep.subr.bf16.mxu0 0
    %2528 = vmatpush1.bf16.msra.mxu0 %v1823
    %2529 = vmatprep.subr.bf16.mxu0 0
    %2530 = vmatpush1.bf16.msra.mxu0 %v1824
    %2531 = vmatprep.subr.bf16.mxu0 0
    %2532 = vmatpush1.bf16.msra.mxu0 %v1825
    %2533 = vmatprep.subr.bf16.mxu0 0
    %2534 = vmatpush1.bf16.msra.mxu0 %v1826
    %2535 = vmatprep.subr.bf16.mxu0 0
    %2536 = vmatpush1.bf16.msra.mxu0 %v1827
    %2537 = vmatprep.subr.bf16.mxu0 0
    %2538 = vmatpush1.bf16.msra.mxu0 %v1828
    %2539 = vmatprep.subr.bf16.mxu0 0
    %2540 = vmatpush1.bf16.msra.mxu0 %v1829
    %2541 = vmatprep.subr.bf16.mxu0 0
    %2542 = vmatpush1.bf16.msra.mxu0 %v1830
    %2543 = vmatprep.subr.bf16.mxu0 0
    %2544 = vmatpush1.bf16.msra.mxu0 %v1831
    %2545 = vmatprep.subr.bf16.mxu0 0
    %2546 = vmatpush1.bf16.msra.mxu0 %v1832
    %2547 = vmatprep.subr.bf16.mxu0 0
    %2548 = vmatpush1.bf16.msra.mxu0 %v1833
    %2549 = vmatprep.subr.bf16.mxu0 0
    %2550 = vmatpush1.bf16.msra.mxu0 %v1834
    %2551 = vmatprep.subr.bf16.mxu0 0
    %2552 = vmatpush1.bf16.msra.mxu0 %v1835
    %2553 = vmatprep.subr.bf16.mxu0 0
    %2554 = vmatpush1.bf16.msra.mxu0 %v1836
    %2555 = vmatprep.subr.bf16.mxu0 0
    %2556 = vmatpush1.bf16.msra.mxu0 %v1837
    %2557 = vmatprep.subr.bf16.mxu0 0
    %2558 = vmatpush1.bf16.msra.mxu0 %v1838
    %2559 = vmatprep.mubr.bf16.mxu0 %v137
    %2560 = vmatmul.mubr.bf16.gmra.mrb[0].mxu0 %v136
    %v2561 = vpop.f32.mrb[0].mxu0
    %v2562 = vadd.f32 %v2522, %v2561
    %v2563 = vpop.f32.mrb[0].mxu0
    %v2564 = vpop.f32.mrb[0].mxu0
    %v2565 = vpop.f32.mrb[0].mxu0
    %2566 = vdwg.mxu0
    %2567 = vmatprep.subr.bf16.mxu0 0
    %2568 = vmatpush1.bf16.msra.mxu0 %v1839
    %2569 = vmatprep.subr.bf16.mxu0 0
    %2570 = vmatpush1.bf16.msra.mxu0 %v1840
    %2571 = vmatprep.subr.bf16.mxu0 0
    %2572 = vmatpush1.bf16.msra.mxu0 %v1841
    %2573 = vmatprep.subr.bf16.mxu0 0
    %2574 = vmatpush1.bf16.msra.mxu0 %v1842
    %2575 = vmatprep.subr.bf16.mxu0 0
    %2576 = vmatpush1.bf16.msra.mxu0 %v1843
    %2577 = vmatprep.subr.bf16.mxu0 0
    %2578 = vmatpush1.bf16.msra.mxu0 %v1844
    %2579 = vmatprep.subr.bf16.mxu0 0
    %2580 = vmatpush1.bf16.msra.mxu0 %v1845
    %2581 = vmatprep.subr.bf16.mxu0 0
    %2582 = vmatpush1.bf16.msra.mxu0 %v1846
    %2583 = vmatprep.subr.bf16.mxu0 0
    %2584 = vmatpush1.bf16.msra.mxu0 %v1847
    %2585 = vmatprep.subr.bf16.mxu0 0
    %2586 = vmatpush1.bf16.msra.mxu0 %v1848
    %2587 = vmatprep.subr.bf16.mxu0 0
    %2588 = vmatpush1.bf16.msra.mxu0 %v1849
    %2589 = vmatprep.subr.bf16.mxu0 0
    %2590 = vmatpush1.bf16.msra.mxu0 %v1850
    %2591 = vmatprep.subr.bf16.mxu0 0
    %2592 = vmatpush1.bf16.msra.mxu0 %v1851
    %2593 = vmatprep.subr.bf16.mxu0 0
    %2594 = vmatpush1.bf16.msra.mxu0 %v1852
    %2595 = vmatprep.subr.bf16.mxu0 0
    %2596 = vmatpush1.bf16.msra.mxu0 %v1853
    %2597 = vmatprep.subr.bf16.mxu0 0
    %2598 = vmatpush1.bf16.msra.mxu0 %v1854
    %2599 = vmatprep.mubr.bf16.mxu0 %v139
    %2600 = vmatmul.mubr.bf16.gmra.mrb[0].mxu0 %v138
    %v2601 = vpop.f32.mrb[0].mxu0
    %v2602 = vadd.f32 %v2562, %v2601
    %v2603 = vpop.f32.mrb[0].mxu0
    %v2604 = vpop.f32.mrb[0].mxu0
    %v2605 = vpop.f32.mrb[0].mxu0
    %2606 = vdwg.mxu0
    %2607 = vmatprep.subr.bf16.mxu0 0
    %2608 = vmatpush1.bf16.msra.mxu0 %v1855
    %2609 = vmatprep.subr.bf16.mxu0 0
    %2610 = vmatpush1.bf16.msra.mxu0 %v1856
    %2611 = vmatprep.subr.bf16.mxu0 0
    %2612 = vmatpush1.bf16.msra.mxu0 %v1857
    %2613 = vmatprep.subr.bf16.mxu0 0
    %2614 = vmatpush1.bf16.msra.mxu0 %v1858
    %2615 = vmatprep.subr.bf16.mxu0 0
    %2616 = vmatpush1.bf16.msra.mxu0 %v1859
    %2617 = vmatprep.subr.bf16.mxu0 0
    %2618 = vmatpush1.bf16.msra.mxu0 %v1860
    %2619 = vmatprep.subr.bf16.mxu0 0
    %2620 = vmatpush1.bf16.msra.mxu0 %v1861
    %2621 = vmatprep.subr.bf16.mxu0 0
    %2622 = vmatpush1.bf16.msra.mxu0 %v1862
    %2623 = vmatprep.subr.bf16.mxu0 0
    %2624 = vmatpush1.bf16.msra.mxu0 %v1863
    %2625 = vmatprep.subr.bf16.mxu0 0
    %2626 = vmatpush1.bf16.msra.mxu0 %v1864
    %2627 = vmatprep.subr.bf16.mxu0 0
    %2628 = vmatpush1.bf16.msra.mxu0 %v1865
    %2629 = vmatprep.subr.bf16.mxu0 0
    %2630 = vmatpush1.bf16.msra.mxu0 %v1866
    %2631 = vmatprep.subr.bf16.mxu0 0
    %2632 = vmatpush1.bf16.msra.mxu0 %v1867
    %2633 = vmatprep.subr.bf16.mxu0 0
    %2634 = vmatpush1.bf16.msra.mxu0 %v1868
    %2635 = vmatprep.subr.bf16.mxu0 0
    %2636 = vmatpush1.bf16.msra.mxu0 %v1869
    %2637 = vmatprep.subr.bf16.mxu0 0
    %2638 = vmatpush1.bf16.msra.mxu0 %v1870
    %2639 = vmatprep.mubr.bf16.mxu0 %v141
    %2640 = vmatmul.mubr.bf16.gmra.mrb[0].mxu0 %v140
    %v2641 = vpop.f32.mrb[0].mxu0
    %v2642 = vadd.f32 %v2602, %v2641
    %v2643 = vpop.f32.mrb[0].mxu0
    %v2644 = vpop.f32.mrb[0].mxu0
    %v2645 = vpop.f32.mrb[0].mxu0
    %2646 = vdwg.mxu0
    %2647 = vmatprep.subr.bf16.mxu0 0
    %2648 = vmatpush1.bf16.msra.mxu0 %v1871
    %2649 = vmatprep.subr.bf16.mxu0 0
    %2650 = vmatpush1.bf16.msra.mxu0 %v1872
    %2651 = vmatprep.subr.bf16.mxu0 0
    %2652 = vmatpush1.bf16.msra.mxu0 %v1873
    %2653 = vmatprep.subr.bf16.mxu0 0
    %2654 = vmatpush1.bf16.msra.mxu0 %v1874
    %2655 = vmatprep.subr.bf16.mxu0 0
    %2656 = vmatpush1.bf16.msra.mxu0 %v1875
    %2657 = vmatprep.subr.bf16.mxu0 0
    %2658 = vmatpush1.bf16.msra.mxu0 %v1876
    %2659 = vmatprep.subr.bf16.mxu0 0
    %2660 = vmatpush1.bf16.msra.mxu0 %v1877
    %2661 = vmatprep.subr.bf16.mxu0 0
    %2662 = vmatpush1.bf16.msra.mxu0 %v1878
    %2663 = vmatprep.subr.bf16.mxu0 0
    %2664 = vmatpush1.bf16.msra.mxu0 %v1879
    %2665 = vmatprep.subr.bf16.mxu0 0
    %2666 = vmatpush1.bf16.msra.mxu0 %v1880
    %2667 = vmatprep.subr.bf16.mxu0 0
    %2668 = vmatpush1.bf16.msra.mxu0 %v1881
    %2669 = vmatprep.subr.bf16.mxu0 0
    %2670 = vmatpush1.bf16.msra.mxu0 %v1882
    %2671 = vmatprep.subr.bf16.mxu0 0
    %2672 = vmatpush1.bf16.msra.mxu0 %v1883
    %2673 = vmatprep.subr.bf16.mxu0 0
    %2674 = vmatpush1.bf16.msra.mxu0 %v1884
    %2675 = vmatprep.subr.bf16.mxu0 0
    %2676 = vmatpush1.bf16.msra.mxu0 %v1885
    %2677 = vmatprep.subr.bf16.mxu0 0
    %2678 = vmatpush1.bf16.msra.mxu0 %v1886
    %2679 = vmatprep.mubr.bf16.mxu0 %v143
    %2680 = vmatmul.mubr.bf16.gmra.mrb[0].mxu0 %v142
    %v2681 = vpop.f32.mrb[0].mxu0
    %v2682 = vadd.f32 %v2642, %v2681
    %v2683 = vpop.f32.mrb[0].mxu0
    %v2684 = vpop.f32.mrb[0].mxu0
    %v2685 = vpop.f32.mrb[0].mxu0
    %2686 = vdwg.mxu0
    %2687 = vmatprep.subr.bf16.mxu0 0
    %2688 = vmatpush1.bf16.msra.mxu0 %v1887
    %2689 = vmatprep.subr.bf16.mxu0 0
    %2690 = vmatpush1.bf16.msra.mxu0 %v1888
    %2691 = vmatprep.subr.bf16.mxu0 0
    %2692 = vmatpush1.bf16.msra.mxu0 %v1889
    %2693 = vmatprep.subr.bf16.mxu0 0
    %2694 = vmatpush1.bf16.msra.mxu0 %v1890
    %2695 = vmatprep.subr.bf16.mxu0 0
    %2696 = vmatpush1.bf16.msra.mxu0 %v1891
    %2697 = vmatprep.subr.bf16.mxu0 0
    %2698 = vmatpush1.bf16.msra.mxu0 %v1892
    %2699 = vmatprep.subr.bf16.mxu0 0
    %2700 = vmatpush1.bf16.msra.mxu0 %v1893
    %2701 = vmatprep.subr.bf16.mxu0 0
    %2702 = vmatpush1.bf16.msra.mxu0 %v1894
    %2703 = vmatprep.subr.bf16.mxu0 0
    %2704 = vmatpush1.bf16.msra.mxu0 %v1895
    %2705 = vmatprep.subr.bf16.mxu0 0
    %2706 = vmatpush1.bf16.msra.mxu0 %v1896
    %2707 = vmatprep.subr.bf16.mxu0 0
    %2708 = vmatpush1.bf16.msra.mxu0 %v1897
    %2709 = vmatprep.subr.bf16.mxu0 0
    %2710 = vmatpush1.bf16.msra.mxu0 %v1898
    %2711 = vmatprep.subr.bf16.mxu0 0
    %2712 = vmatpush1.bf16.msra.mxu0 %v1899
    %2713 = vmatprep.subr.bf16.mxu0 0
    %2714 = vmatpush1.bf16.msra.mxu0 %v1900
    %2715 = vmatprep.subr.bf16.mxu0 0
    %2716 = vmatpush1.bf16.msra.mxu0 %v1901
    %2717 = vmatprep.subr.bf16.mxu0 0
    %2718 = vmatpush1.bf16.msra.mxu0 %v1902
    %2719 = vmatprep.mubr.bf16.mxu0 %v145
    %2720 = vmatmul.mubr.bf16.gmra.mrb[0].mxu0 %v144
    %v2721 = vpop.f32.mrb[0].mxu0
    %v2722 = vadd.f32 %v2682, %v2721
    %v2723 = vpop.f32.mrb[0].mxu0
    %v2724 = vpop.f32.mrb[0].mxu0
    %v2725 = vpop.f32.mrb[0].mxu0
    %2726 = vdwg.mxu0
    %2727 = vmatprep.subr.bf16.mxu0 0
    %2728 = vmatpush1.bf16.msra.mxu0 %v1903
    %2729 = vmatprep.subr.bf16.mxu0 0
    %2730 = vmatpush1.bf16.msra.mxu0 %v1904
    %2731 = vmatprep.subr.bf16.mxu0 0
    %2732 = vmatpush1.bf16.msra.mxu0 %v1905
    %2733 = vmatprep.subr.bf16.mxu0 0
    %2734 = vmatpush1.bf16.msra.mxu0 %v1906
    %2735 = vmatprep.subr.bf16.mxu0 0
    %2736 = vmatpush1.bf16.msra.mxu0 %v1907
    %2737 = vmatprep.subr.bf16.mxu0 0
    %2738 = vmatpush1.bf16.msra.mxu0 %v1908
    %2739 = vmatprep.subr.bf16.mxu0 0
    %2740 = vmatpush1.bf16.msra.mxu0 %v1909
    %2741 = vmatprep.subr.bf16.mxu0 0
    %2742 = vmatpush1.bf16.msra.mxu0 %v1910
    %2743 = vmatprep.subr.bf16.mxu0 0
    %2744 = vmatpush1.bf16.msra.mxu0 %v1911
    %2745 = vmatprep.subr.bf16.mxu0 0
    %2746 = vmatpush1.bf16.msra.mxu0 %v1912
    %2747 = vmatprep.subr.bf16.mxu0 0
    %2748 = vmatpush1.bf16.msra.mxu0 %v1913
    %2749 = vmatprep.subr.bf16.mxu0 0
    %2750 = vmatpush1.bf16.msra.mxu0 %v1914
    %2751 = vmatprep.subr.bf16.mxu0 0
    %2752 = vmatpush1.bf16.msra.mxu0 %v1915
    %2753 = vmatprep.subr.bf16.mxu0 0
    %2754 = vmatpush1.bf16.msra.mxu0 %v1916
    %2755 = vmatprep.subr.bf16.mxu0 0
    %2756 = vmatpush1.bf16.msra.mxu0 %v1917
    %2757 = vmatprep.subr.bf16.mxu0 0
    %2758 = vmatpush1.bf16.msra.mxu0 %v1918
    %2759 = vmatprep.mubr.bf16.mxu0 %v147
    %2760 = vmatmul.mubr.bf16.gmra.mrb[0].mxu0 %v146
    %v2761 = vpop.f32.mrb[0].mxu0
    %v2762 = vadd.f32 %v2722, %v2761
    %v2763 = vpop.f32.mrb[0].mxu0
    %v2764 = vpop.f32.mrb[0].mxu0
    %v2765 = vpop.f32.mrb[0].mxu0
    %2766 = vdwg.mxu0
    %2767 = vmatprep.subr.bf16.mxu0 0
    %2768 = vmatpush1.bf16.msra.mxu0 %v1919
    %2769 = vmatprep.subr.bf16.mxu0 0
    %2770 = vmatpush1.bf16.msra.mxu0 %v1920
    %2771 = vmatprep.subr.bf16.mxu0 0
    %2772 = vmatpush1.bf16.msra.mxu0 %v1921
    %2773 = vmatprep.subr.bf16.mxu0 0
    %2774 = vmatpush1.bf16.msra.mxu0 %v1922
    %2775 = vmatprep.subr.bf16.mxu0 0
    %2776 = vmatpush1.bf16.msra.mxu0 %v1923
    %2777 = vmatprep.subr.bf16.mxu0 0
    %2778 = vmatpush1.bf16.msra.mxu0 %v1924
    %2779 = vmatprep.subr.bf16.mxu0 0
    %2780 = vmatpush1.bf16.msra.mxu0 %v1925
    %2781 = vmatprep.subr.bf16.mxu0 0
    %2782 = vmatpush1.bf16.msra.mxu0 %v1926
    %2783 = vmatprep.subr.bf16.mxu0 0
    %2784 = vmatpush1.bf16.msra.mxu0 %v1927
    %2785 = vmatprep.subr.bf16.mxu0 0
    %2786 = vmatpush1.bf16.msra.mxu0 %v1928
    %2787 = vmatprep.subr.bf16.mxu0 0
    %2788 = vmatpush1.bf16.msra.mxu0 %v1929
    %2789 = vmatprep.subr.bf16.mxu0 0
    %2790 = vmatpush1.bf16.msra.mxu0 %v1930
    %2791 = vmatprep.subr.bf16.mxu0 0
    %2792 = vmatpush1.bf16.msra.mxu0 %v1931
    %2793 = vmatprep.subr.bf16.mxu0 0
    %2794 = vmatpush1.bf16.msra.mxu0 %v1932
    %2795 = vmatprep.subr.bf16.mxu0 0
    %2796 = vmatpush1.bf16.msra.mxu0 %v1933
    %2797 = vmatprep.subr.bf16.mxu0 0
    %2798 = vmatpush1.bf16.msra.mxu0 %v1934
    %2799 = vmatprep.mubr.bf16.mxu0 %v149
    %2800 = vmatmul.mubr.bf16.gmra.mrb[0].mxu0 %v148
    %v2801 = vpop.f32.mrb[0].mxu0
    %v2802 = vadd.f32 %v2762, %v2801
    %v2803 = vpop.f32.mrb[0].mxu0
    %v2804 = vpop.f32.mrb[0].mxu0
    %v2805 = vpop.f32.mrb[0].mxu0
    %2806 = vdwg.mxu0
    %2807 = vmatprep.subr.bf16.mxu0 0
    %2808 = vmatpush1.bf16.msra.mxu0 %v1935
    %2809 = vmatprep.subr.bf16.mxu0 0
    %2810 = vmatpush1.bf16.msra.mxu0 %v1936
    %2811 = vmatprep.subr.bf16.mxu0 0
    %2812 = vmatpush1.bf16.msra.mxu0 %v1937
    %2813 = vmatprep.subr.bf16.mxu0 0
    %2814 = vmatpush1.bf16.msra.mxu0 %v1938
    %2815 = vmatprep.subr.bf16.mxu0 0
    %2816 = vmatpush1.bf16.msra.mxu0 %v1939
    %2817 = vmatprep.subr.bf16.mxu0 0
    %2818 = vmatpush1.bf16.msra.mxu0 %v1940
    %2819 = vmatprep.subr.bf16.mxu0 0
    %2820 = vmatpush1.bf16.msra.mxu0 %v1941
    %2821 = vmatprep.subr.bf16.mxu0 0
    %2822 = vmatpush1.bf16.msra.mxu0 %v1942
    %2823 = vmatprep.subr.bf16.mxu0 0
    %2824 = vmatpush1.bf16.msra.mxu0 %v1943
    %2825 = vmatprep.subr.bf16.mxu0 0
    %2826 = vmatpush1.bf16.msra.mxu0 %v1944
    %2827 = vmatprep.subr.bf16.mxu0 0
    %2828 = vmatpush1.bf16.msra.mxu0 %v1945
    %2829 = vmatprep.subr.bf16.mxu0 0
    %2830 = vmatpush1.bf16.msra.mxu0 %v1946
    %2831 = vmatprep.subr.bf16.mxu0 0
    %2832 = vmatpush1.bf16.msra.mxu0 %v1947
    %2833 = vmatprep.subr.bf16.mxu0 0
    %2834 = vmatpush1.bf16.msra.mxu0 %v1948
    %2835 = vmatprep.subr.bf16.mxu0 0
    %2836 = vmatpush1.bf16.msra.mxu0 %v1949
    %2837 = vmatprep.subr.bf16.mxu0 0
    %2838 = vmatpush1.bf16.msra.mxu0 %v1950
    %2839 = vmatprep.mubr.bf16.mxu0 %v151
    %2840 = vmatmul.mubr.bf16.gmra.mrb[0].mxu0 %v150
    %v2841 = vpop.f32.mrb[0].mxu0
    %v2842 = vadd.f32 %v2802, %v2841
    %v2843 = vpop.f32.mrb[0].mxu0
    %v2844 = vpop.f32.mrb[0].mxu0
    %v2845 = vpop.f32.mrb[0].mxu0
    %2846 = vdwg.mxu0
    %v2847 = vmax.f32 %v2842, 0.0
    %v2848 = vpack.c.bf16 %v2847, %v2847
    %v2849 = vld [vmem:[%s3] sm:$0xf]
    %v2850 = vld [vmem:[%s3 + $0x4] sm:$0xf]
    %v2851 = vld [vmem:[%s3 + $0x8] sm:$0xf]
    %v2852 = vld [vmem:[%s3 + $0xc] sm:$0xf]
    %v2853 = vld [vmem:[%s3 + $0x10] sm:$0xf]
    %v2854 = vld [vmem:[%s3 + $0x14] sm:$0xf]
    %v2855 = vld [vmem:[%s3 + $0x18] sm:$0xf]
    %v2856 = vld [vmem:[%s3 + $0x1c] sm:$0xf]
    %v2857 = vld [vmem:[%s3 + $0x20] sm:$0xf]
    %v2858 = vld [vmem:[%s3 + $0x24] sm:$0xf]
    %v2859 = vld [vmem:[%s3 + $0x28] sm:$0xf]
    %v2860 = vld [vmem:[%s3 + $0x2c] sm:$0xf]
    %v2861 = vld [vmem:[%s3 + $0x30] sm:$0xf]
    %v2862 = vld [vmem:[%s3 + $0x34] sm:$0xf]
    %v2863 = vld [vmem:[%s3 + $0x38] sm:$0xf]
    %v2864 = vld [vmem:[%s3 + $0x3c] sm:$0xf]
    %v2865 = vld [vmem:[%s4] sm:$0x1]
    %v2867 = vlaneseq
    %v2868 = vshrl.u32 %v2867, 7
    %v2869 = vsub.s32 0, %v2868
    %v2870 = vrot.slane %v2865, %v2869
    %v2888 = vunpack.c.l.b16 %v2849
    %v2889 = vunpack.c.l.b16 %v2850
    %v2890 = vunpack.c.l.b16 %v2851
    %v2891 = vunpack.c.l.b16 %v2852
    %v2892 = vunpack.c.l.b16 %v2853
    %v2893 = vunpack.c.l.b16 %v2854
    %v2894 = vunpack.c.l.b16 %v2855
    %v2895 = vunpack.c.l.b16 %v2856
    %v2896 = vunpack.c.l.b16 %v2857
    %v2897 = vunpack.c.l.b16 %v2858
    %v2898 = vunpack.c.l.b16 %v2859
    %v2899 = vunpack.c.l.b16 %v2860
    %v2900 = vunpack.c.l.b16 %v2861
    %v2901 = vunpack.c.l.b16 %v2862
    %v2902 = vunpack.c.l.b16 %v2863
    %v2903 = vunpack.c.l.b16 %v2864
    %v2904 = vpack.c.b16 %v2889, %v2888
    %v2905 = vpack.c.b16 %v2891, %v2890
    %v2906 = vpack.c.b16 %v2893, %v2892
    %v2907 = vpack.c.b16 %v2895, %v2894
    %v2908 = vpack.c.b16 %v2897, %v2896
    %v2909 = vpack.c.b16 %v2899, %v2898
    %v2910 = vpack.c.b16 %v2901, %v2900
    %v2911 = vpack.c.b16 %v2903, %v2902
    %2920 = vmatprep.subr.bf16.mxu0 0
    %2921 = vmatpush1.bf16.msra.mxu0 %v2904
    %2922 = vmatprep.subr.bf16.mxu0 0
    %2923 = vmatpush1.bf16.msra.mxu0 %v2905
    %2924 = vmatprep.subr.bf16.mxu0 0
    %2925 = vmatpush1.bf16.msra.mxu0 %v2906
    %2926 = vmatprep.subr.bf16.mxu0 0
    %2927 = vmatpush1.bf16.msra.mxu0 %v2907
    %2928 = vmatprep.subr.bf16.mxu0 0
    %2929 = vmatpush1.bf16.msra.mxu0 %v2908
    %2930 = vmatprep.subr.bf16.mxu0 0
    %2931 = vmatpush1.bf16.msra.mxu0 %v2909
    %2932 = vmatprep.subr.bf16.mxu0 0
    %2933 = vmatpush1.bf16.msra.mxu0 %v2910
    %2934 = vmatprep.subr.bf16.mxu0 0
    %2935 = vmatpush1.bf16.msra.mxu0 %v2911
    %2936 = vmatprep.subr.bf16.mxu0 0
    %2937 = vmatpush1.bf16.msra.mxu0 0
    %2938 = vmatprep.subr.bf16.mxu0 0
    %2939 = vmatpush1.bf16.msra.mxu0 0
    %2940 = vmatprep.subr.bf16.mxu0 0
    %2941 = vmatpush1.bf16.msra.mxu0 0
    %2942 = vmatprep.subr.bf16.mxu0 0
    %2943 = vmatpush1.bf16.msra.mxu0 0
    %2944 = vmatprep.subr.bf16.mxu0 0
    %2945 = vmatpush1.bf16.msra.mxu0 0
    %2946 = vmatprep.subr.bf16.mxu0 0
    %2947 = vmatpush1.bf16.msra.mxu0 0
    %2948 = vmatprep.subr.bf16.mxu0 0
    %2949 = vmatpush1.bf16.msra.mxu0 0
    %2950 = vmatprep.subr.bf16.mxu0 0
    %2951 = vmatpush1.bf16.msra.mxu0 0
    %2952 = vmatprep.mubr.bf16.mxu0 0
    %2953 = vmatmul.mubr.bf16.gmra.mrb[0].mxu0 %v2848
    %v2954 = vpop.f32.mrb[0].mxu0
    %v2955 = vadd.f32 %v2870, %v2954
    %v2956 = vpop.f32.mrb[0].mxu0
    %v2957 = vpop.f32.mrb[0].mxu0
    %v2958 = vpop.f32.mrb[0].mxu0
    %2959 = vdwg.mxu0
    %v2960 = vmax.f32 %v2955, 0.0
    %v2961 = vpack.c.bf16 %v2960, %v2960
    %v2962 = vld [vmem:[%s5] sm:$0xf]
    %v2963 = vld [vmem:[%s5 + $0x4] sm:$0xf]
    %v2964 = vld [vmem:[%s5 + $0x8] sm:$0xf]
    %v2965 = vld [vmem:[%s5 + $0xc] sm:$0xf]
    %v2966 = vld [vmem:[%s5 + $0x10] sm:$0xf]
    %v2967 = vld [vmem:[%s5 + $0x14] sm:$0xf]
    %v2968 = vld [vmem:[%s5 + $0x18] sm:$0xf]
    %v2969 = vld [vmem:[%s5 + $0x1c] sm:$0xf]
    %v2970 = vld [vmem:[%s5 + $0x20] sm:$0xf]
    %v2971 = vld [vmem:[%s5 + $0x24] sm:$0xf]
    %v2972 = vld [vmem:[%s5 + $0x28] sm:$0xf]
    %v2973 = vld [vmem:[%s5 + $0x2c] sm:$0xf]
    %v2974 = vld [vmem:[%s5 + $0x30] sm:$0xf]
    %v2975 = vld [vmem:[%s5 + $0x34] sm:$0xf]
    %v2976 = vld [vmem:[%s5 + $0x38] sm:$0xf]
    %v2977 = vld [vmem:[%s5 + $0x3c] sm:$0xf]
    %v2978 = vld [vmem:[%s6] sm:$0x1]
    %v2980 = vlaneseq
    %v2981 = vshrl.u32 %v2980, 7
    %v2982 = vsub.s32 0, %v2981
    %v2983 = vrot.slane %v2978, %v2982
    %v3001 = vunpack.c.l.b16 %v2962
    %v3002 = vunpack.c.l.b16 %v2963
    %v3003 = vunpack.c.l.b16 %v2964
    %v3004 = vunpack.c.l.b16 %v2965
    %v3005 = vunpack.c.l.b16 %v2966
    %v3006 = vunpack.c.l.b16 %v2967
    %v3007 = vunpack.c.l.b16 %v2968
    %v3008 = vunpack.c.l.b16 %v2969
    %v3009 = vunpack.c.l.b16 %v2970
    %v3010 = vunpack.c.l.b16 %v2971
    %v3011 = vunpack.c.l.b16 %v2972
    %v3012 = vunpack.c.l.b16 %v2973
    %v3013 = vunpack.c.l.b16 %v2974
    %v3014 = vunpack.c.l.b16 %v2975
    %v3015 = vunpack.c.l.b16 %v2976
    %v3016 = vunpack.c.l.b16 %v2977
    %v3017 = vpack.c.b16 %v3002, %v3001
    %v3018 = vpack.c.b16 %v3004, %v3003
    %v3019 = vpack.c.b16 %v3006, %v3005
    %v3020 = vpack.c.b16 %v3008, %v3007
    %v3021 = vpack.c.b16 %v3010, %v3009
    %v3022 = vpack.c.b16 %v3012, %v3011
    %v3023 = vpack.c.b16 %v3014, %v3013
    %v3024 = vpack.c.b16 %v3016, %v3015
    %3033 = vmatprep.subr.bf16.mxu0 0
    %3034 = vmatpush1.bf16.msra.mxu0 %v3017
    %3035 = vmatprep.subr.bf16.mxu0 0
    %3036 = vmatpush1.bf16.msra.mxu0 %v3018
    %3037 = vmatprep.subr.bf16.mxu0 0
    %3038 = vmatpush1.bf16.msra.mxu0 %v3019
    %3039 = vmatprep.subr.bf16.mxu0 0
    %3040 = vmatpush1.bf16.msra.mxu0 %v3020
    %3041 = vmatprep.subr.bf16.mxu0 0
    %3042 = vmatpush1.bf16.msra.mxu0 %v3021
    %3043 = vmatprep.subr.bf16.mxu0 0
    %3044 = vmatpush1.bf16.msra.mxu0 %v3022
    %3045 = vmatprep.subr.bf16.mxu0 0
    %3046 = vmatpush1.bf16.msra.mxu0 %v3023
    %3047 = vmatprep.subr.bf16.mxu0 0
    %3048 = vmatpush1.bf16.msra.mxu0 %v3024
    %3049 = vmatprep.subr.bf16.mxu0 0
    %3050 = vmatpush1.bf16.msra.mxu0 0
    %3051 = vmatprep.subr.bf16.mxu0 0
    %3052 = vmatpush1.bf16.msra.mxu0 0
    %3053 = vmatprep.subr.bf16.mxu0 0
    %3054 = vmatpush1.bf16.msra.mxu0 0
    %3055 = vmatprep.subr.bf16.mxu0 0
    %3056 = vmatpush1.bf16.msra.mxu0 0
    %3057 = vmatprep.subr.bf16.mxu0 0
    %3058 = vmatpush1.bf16.msra.mxu0 0
    %3059 = vmatprep.subr.bf16.mxu0 0
    %3060 = vmatpush1.bf16.msra.mxu0 0
    %3061 = vmatprep.subr.bf16.mxu0 0
    %3062 = vmatpush1.bf16.msra.mxu0 0
    %3063 = vmatprep.subr.bf16.mxu0 0
    %3064 = vmatpush1.bf16.msra.mxu0 0
    %3065 = vmatprep.mubr.bf16.mxu0 0
    %3066 = vmatmul.mubr.bf16.gmra.mrb[0].mxu0 %v2961
    %v3067 = vpop.f32.mrb[0].mxu0
    %v3068 = vadd.f32 %v2983, %v3067
    %v3069 = vpop.f32.mrb[0].mxu0
    %v3070 = vpop.f32.mrb[0].mxu0
    %v3071 = vpop.f32.mrb[0].mxu0
    %3072 = vdwg.mxu0
    %v3073 = vmax.f32 %v3068, 0.0
    %v3074 = vpack.c.bf16 %v3073, %v3073
    %v3075 = vld [vmem:[%s7] sm:$0xf]
    %v3076 = vld [vmem:[%s7 + $0x4] sm:$0xf]
    %v3077 = vld [vmem:[%s7 + $0x8] sm:$0xf]
    %v3078 = vld [vmem:[%s7 + $0xc] sm:$0xf]
    %v3079 = vld [vmem:[%s7 + $0x10] sm:$0xf]
    %v3080 = vld [vmem:[%s7 + $0x14] sm:$0xf]
    %v3081 = vld [vmem:[%s7 + $0x18] sm:$0xf]
    %v3082 = vld [vmem:[%s7 + $0x1c] sm:$0xf]
    %v3083 = vld [vmem:[%s7 + $0x20] sm:$0xf]
    %v3084 = vld [vmem:[%s7 + $0x24] sm:$0xf]
    %v3085 = vld [vmem:[%s7 + $0x28] sm:$0xf]
    %v3086 = vld [vmem:[%s7 + $0x2c] sm:$0xf]
    %v3087 = vld [vmem:[%s7 + $0x30] sm:$0xf]
    %v3088 = vld [vmem:[%s7 + $0x34] sm:$0xf]
    %v3089 = vld [vmem:[%s7 + $0x38] sm:$0xf]
    %v3090 = vld [vmem:[%s7 + $0x3c] sm:$0xf]
    %v3091 = vld [vmem:[%s8] sm:$0x1]
    %v3093 = vlaneseq
    %v3094 = vshrl.u32 %v3093, 7
    %v3095 = vsub.s32 0, %v3094
    %v3096 = vrot.slane %v3091, %v3095
    %v3114 = vunpack.c.l.b16 %v3075
    %v3115 = vunpack.c.l.b16 %v3076
    %v3116 = vunpack.c.l.b16 %v3077
    %v3117 = vunpack.c.l.b16 %v3078
    %v3118 = vunpack.c.l.b16 %v3079
    %v3119 = vunpack.c.l.b16 %v3080
    %v3120 = vunpack.c.l.b16 %v3081
    %v3121 = vunpack.c.l.b16 %v3082
    %v3122 = vunpack.c.l.b16 %v3083
    %v3123 = vunpack.c.l.b16 %v3084
    %v3124 = vunpack.c.l.b16 %v3085
    %v3125 = vunpack.c.l.b16 %v3086
    %v3126 = vunpack.c.l.b16 %v3087
    %v3127 = vunpack.c.l.b16 %v3088
    %v3128 = vunpack.c.l.b16 %v3089
    %v3129 = vunpack.c.l.b16 %v3090
    %v3130 = vpack.c.b16 %v3115, %v3114
    %v3131 = vpack.c.b16 %v3117, %v3116
    %v3132 = vpack.c.b16 %v3119, %v3118
    %v3133 = vpack.c.b16 %v3121, %v3120
    %v3134 = vpack.c.b16 %v3123, %v3122
    %v3135 = vpack.c.b16 %v3125, %v3124
    %v3136 = vpack.c.b16 %v3127, %v3126
    %v3137 = vpack.c.b16 %v3129, %v3128
    %3146 = vmatprep.subr.bf16.mxu0 0
    %3147 = vmatpush1.bf16.msra.mxu0 %v3130
    %3148 = vmatprep.subr.bf16.mxu0 0
    %3149 = vmatpush1.bf16.msra.mxu0 %v3131
    %3150 = vmatprep.subr.bf16.mxu0 0
    %3151 = vmatpush1.bf16.msra.mxu0 %v3132
    %3152 = vmatprep.subr.bf16.mxu0 0
    %3153 = vmatpush1.bf16.msra.mxu0 %v3133
    %3154 = vmatprep.subr.bf16.mxu0 0
    %3155 = vmatpush1.bf16.msra.mxu0 %v3134
    %3156 = vmatprep.subr.bf16.mxu0 0
    %3157 = vmatpush1.bf16.msra.mxu0 %v3135
    %3158 = vmatprep.subr.bf16.mxu0 0
    %3159 = vmatpush1.bf16.msra.mxu0 %v3136
    %3160 = vmatprep.subr.bf16.mxu0 0
    %3161 = vmatpush1.bf16.msra.mxu0 %v3137
    %3162 = vmatprep.subr.bf16.mxu0 0
    %3163 = vmatpush1.bf16.msra.mxu0 0
    %3164 = vmatprep.subr.bf16.mxu0 0
    %3165 = vmatpush1.bf16.msra.mxu0 0
    %3166 = vmatprep.subr.bf16.mxu0 0
    %3167 = vmatpush1.bf16.msra.mxu0 0
    %3168 = vmatprep.subr.bf16.mxu0 0
    %3169 = vmatpush1.bf16.msra.mxu0 0
    %3170 = vmatprep.subr.bf16.mxu0 0
    %3171 = vmatpush1.bf16.msra.mxu0 0
    %3172 = vmatprep.subr.bf16.mxu0 0
    %3173 = vmatpush1.bf16.msra.mxu0 0
    %3174 = vmatprep.subr.bf16.mxu0 0
    %3175 = vmatpush1.bf16.msra.mxu0 0
    %3176 = vmatprep.subr.bf16.mxu0 0
    %3177 = vmatpush1.bf16.msra.mxu0 0
    %3178 = vmatprep.mubr.bf16.mxu0 0
    %3179 = vmatmul.mubr.bf16.gmra.mrb[0].mxu0 %v3074
    %v3180 = vpop.f32.mrb[0].mxu0
    %v3181 = vadd.f32 %v3096, %v3180
    %v3182 = vpop.f32.mrb[0].mxu0
    %v3183 = vpop.f32.mrb[0].mxu0
    %v3184 = vpop.f32.mrb[0].mxu0
    %3185 = vdwg.mxu0
    %3186 = vst [vmem:[#allocation7] sm:$0xff] %v3181
    %v3187 = vpack.c.bf16 %v3181, %v3181
    %v3188 = vld [vmem:[%s9] sm:$0xf]
    %v3189 = vld [vmem:[%s9 + $0x4] sm:$0xf]
    %v3190 = vld [vmem:[%s9 + $0x8] sm:$0xf]
    %v3191 = vld [vmem:[%s9 + $0xc] sm:$0xf]
    %v3192 = vld [vmem:[%s9 + $0x10] sm:$0xf]
    %v3193 = vld [vmem:[%s9 + $0x14] sm:$0xf]
    %v3194 = vld [vmem:[%s9 + $0x18] sm:$0xf]
    %v3195 = vld [vmem:[%s9 + $0x1c] sm:$0xf]
    %v3196 = vld [vmem:[%s9 + $0x20] sm:$0xf]
    %v3197 = vld [vmem:[%s9 + $0x24] sm:$0xf]
    %v3198 = vld [vmem:[%s9 + $0x28] sm:$0xf]
    %v3199 = vld [vmem:[%s9 + $0x2c] sm:$0xf]
    %v3200 = vld [vmem:[%s9 + $0x30] sm:$0xf]
    %v3201 = vld [vmem:[%s9 + $0x34] sm:$0xf]
    %v3202 = vld [vmem:[%s9 + $0x38] sm:$0xf]
    %v3203 = vld [vmem:[%s9 + $0x3c] sm:$0xf]
    %v3204 = vld [vmem:[%s10] sm:$0x1]
    %v3206 = vlaneseq
    %v3207 = vshrl.u32 %v3206, 7
    %v3208 = vsub.s32 0, %v3207
    %v3209 = vrot.slane %v3204, %v3208
    %v3227 = vunpack.c.l.b16 %v3188
    %v3228 = vunpack.c.l.b16 %v3189
    %v3229 = vunpack.c.l.b16 %v3190
    %v3230 = vunpack.c.l.b16 %v3191
    %v3231 = vunpack.c.l.b16 %v3192
    %v3232 = vunpack.c.l.b16 %v3193
    %v3233 = vunpack.c.l.b16 %v3194
    %v3234 = vunpack.c.l.b16 %v3195
    %v3235 = vunpack.c.l.b16 %v3196
    %v3236 = vunpack.c.l.b16 %v3197
    %v3237 = vunpack.c.l.b16 %v3198
    %v3238 = vunpack.c.l.b16 %v3199
    %v3239 = vunpack.c.l.b16 %v3200
    %v3240 = vunpack.c.l.b16 %v3201
    %v3241 = vunpack.c.l.b16 %v3202
    %v3242 = vunpack.c.l.b16 %v3203
    %v3243 = vpack.c.b16 %v3228, %v3227
    %v3244 = vpack.c.b16 %v3230, %v3229
    %v3245 = vpack.c.b16 %v3232, %v3231
    %v3246 = vpack.c.b16 %v3234, %v3233
    %v3247 = vpack.c.b16 %v3236, %v3235
    %v3248 = vpack.c.b16 %v3238, %v3237
    %v3249 = vpack.c.b16 %v3240, %v3239
    %v3250 = vpack.c.b16 %v3242, %v3241
    %3259 = vmatprep.subr.bf16.mxu0 0
    %3260 = vmatpush1.bf16.msra.mxu0 %v3243
    %3261 = vmatprep.subr.bf16.mxu0 0
    %3262 = vmatpush1.bf16.msra.mxu0 %v3244
    %3263 = vmatprep.subr.bf16.mxu0 0
    %3264 = vmatpush1.bf16.msra.mxu0 %v3245
    %3265 = vmatprep.subr.bf16.mxu0 0
    %3266 = vmatpush1.bf16.msra.mxu0 %v3246
    %3267 = vmatprep.subr.bf16.mxu0 0
    %3268 = vmatpush1.bf16.msra.mxu0 %v3247
    %3269 = vmatprep.subr.bf16.mxu0 0
    %3270 = vmatpush1.bf16.msra.mxu0 %v3248
    %3271 = vmatprep.subr.bf16.mxu0 0
    %3272 = vmatpush1.bf16.msra.mxu0 %v3249
    %3273 = vmatprep.subr.bf16.mxu0 0
    %3274 = vmatpush1.bf16.msra.mxu0 %v3250
    %3275 = vmatprep.subr.bf16.mxu0 0
    %3276 = vmatpush1.bf16.msra.mxu0 0
    %3277 = vmatprep.subr.bf16.mxu0 0
    %3278 = vmatpush1.bf16.msra.mxu0 0
    %3279 = vmatprep.subr.bf16.mxu0 0
    %3280 = vmatpush1.bf16.msra.mxu0 0
    %3281 = vmatprep.subr.bf16.mxu0 0
    %3282 = vmatpush1.bf16.msra.mxu0 0
    %3283 = vmatprep.subr.bf16.mxu0 0
    %3284 = vmatpush1.bf16.msra.mxu0 0
    %3285 = vmatprep.subr.bf16.mxu0 0
    %3286 = vmatpush1.bf16.msra.mxu0 0
    %3287 = vmatprep.subr.bf16.mxu0 0
    %3288 = vmatpush1.bf16.msra.mxu0 0
    %3289 = vmatprep.subr.bf16.mxu0 0
    %3290 = vmatpush1.bf16.msra.mxu0 0
    %3291 = vmatprep.mubr.bf16.mxu0 0
    %3292 = vmatmul.mubr.bf16.gmra.mrb[0].mxu0 %v3187
    %v3293 = vpop.f32.mrb[0].mxu0
    %v3294 = vadd.f32 %v3209, %v3293
    %v3295 = vpop.f32.mrb[0].mxu0
    %v3296 = vpop.f32.mrb[0].mxu0
    %v3297 = vpop.f32.mrb[0].mxu0
    %3298 = vdwg.mxu0
    %v3299 = vmax.f32 %v3294, 0.0
    %v3300 = vpack.c.bf16 %v3299, %v3299
    %v3301 = vld [vmem:[%s11] sm:$0xf]
    %v3302 = vld [vmem:[%s11 + $0x4] sm:$0xf]
    %v3303 = vld [vmem:[%s11 + $0x8] sm:$0xf]
    %v3304 = vld [vmem:[%s11 + $0xc] sm:$0xf]
    %v3305 = vld [vmem:[%s11 + $0x10] sm:$0xf]
    %v3306 = vld [vmem:[%s11 + $0x14] sm:$0xf]
    %v3307 = vld [vmem:[%s11 + $0x18] sm:$0xf]
    %v3308 = vld [vmem:[%s11 + $0x1c] sm:$0xf]
    %v3309 = vld [vmem:[%s11 + $0x20] sm:$0xf]
    %v3310 = vld [vmem:[%s11 + $0x24] sm:$0xf]
    %v3311 = vld [vmem:[%s11 + $0x28] sm:$0xf]
    %v3312 = vld [vmem:[%s11 + $0x2c] sm:$0xf]
    %v3313 = vld [vmem:[%s11 + $0x30] sm:$0xf]
    %v3314 = vld [vmem:[%s11 + $0x34] sm:$0xf]
    %v3315 = vld [vmem:[%s11 + $0x38] sm:$0xf]
    %v3316 = vld [vmem:[%s11 + $0x3c] sm:$0xf]
    %v3317 = vld [vmem:[%s12] sm:$0x1]
    %v3319 = vlaneseq
    %v3320 = vshrl.u32 %v3319, 7
    %v3321 = vsub.s32 0, %v3320
    %v3322 = vrot.slane %v3317, %v3321
    %v3340 = vunpack.c.l.b16 %v3301
    %v3341 = vunpack.c.l.b16 %v3302
    %v3342 = vunpack.c.l.b16 %v3303
    %v3343 = vunpack.c.l.b16 %v3304
    %v3344 = vunpack.c.l.b16 %v3305
    %v3345 = vunpack.c.l.b16 %v3306
    %v3346 = vunpack.c.l.b16 %v3307
    %v3347 = vunpack.c.l.b16 %v3308
    %v3348 = vunpack.c.l.b16 %v3309
    %v3349 = vunpack.c.l.b16 %v3310
    %v3350 = vunpack.c.l.b16 %v3311
    %v3351 = vunpack.c.l.b16 %v3312
    %v3352 = vunpack.c.l.b16 %v3313
    %v3353 = vunpack.c.l.b16 %v3314
    %v3354 = vunpack.c.l.b16 %v3315
    %v3355 = vunpack.c.l.b16 %v3316
    %v3356 = vpack.c.b16 %v3341, %v3340
    %v3357 = vpack.c.b16 %v3343, %v3342
    %v3358 = vpack.c.b16 %v3345, %v3344
    %v3359 = vpack.c.b16 %v3347, %v3346
    %v3360 = vpack.c.b16 %v3349, %v3348
    %v3361 = vpack.c.b16 %v3351, %v3350
    %v3362 = vpack.c.b16 %v3353, %v3352
    %v3363 = vpack.c.b16 %v3355, %v3354
    %3372 = vmatprep.subr.bf16.mxu0 0
    %3373 = vmatpush1.bf16.msra.mxu0 %v3356
    %3374 = vmatprep.subr.bf16.mxu0 0
    %3375 = vmatpush1.bf16.msra.mxu0 %v3357
    %3376 = vmatprep.subr.bf16.mxu0 0
    %3377 = vmatpush1.bf16.msra.mxu0 %v3358
    %3378 = vmatprep.subr.bf16.mxu0 0
    %3379 = vmatpush1.bf16.msra.mxu0 %v3359
    %3380 = vmatprep.subr.bf16.mxu0 0
    %3381 = vmatpush1.bf16.msra.mxu0 %v3360
    %3382 = vmatprep.subr.bf16.mxu0 0
    %3383 = vmatpush1.bf16.msra.mxu0 %v3361
    %3384 = vmatprep.subr.bf16.mxu0 0
    %3385 = vmatpush1.bf16.msra.mxu0 %v3362
    %3386 = vmatprep.subr.bf16.mxu0 0
    %3387 = vmatpush1.bf16.msra.mxu0 %v3363
    %3388 = vmatprep.subr.bf16.mxu0 0
    %3389 = vmatpush1.bf16.msra.mxu0 0
    %3390 = vmatprep.subr.bf16.mxu0 0
    %3391 = vmatpush1.bf16.msra.mxu0 0
    %3392 = vmatprep.subr.bf16.mxu0 0
    %3393 = vmatpush1.bf16.msra.mxu0 0
    %3394 = vmatprep.subr.bf16.mxu0 0
    %3395 = vmatpush1.bf16.msra.mxu0 0
    %3396 = vmatprep.subr.bf16.mxu0 0
    %3397 = vmatpush1.bf16.msra.mxu0 0
    %3398 = vmatprep.subr.bf16.mxu0 0
    %3399 = vmatpush1.bf16.msra.mxu0 0
    %3400 = vmatprep.subr.bf16.mxu0 0
    %3401 = vmatpush1.bf16.msra.mxu0 0
    %3402 = vmatprep.subr.bf16.mxu0 0
    %3403 = vmatpush1.bf16.msra.mxu0 0
    %3404 = vmatprep.mubr.bf16.mxu0 0
    %3405 = vmatmul.mubr.bf16.gmra.mrb[0].mxu0 %v3300
    %v3406 = vpop.f32.mrb[0].mxu0
    %v3407 = vadd.f32 %v3322, %v3406
    %v3408 = vpop.f32.mrb[0].mxu0
    %v3409 = vpop.f32.mrb[0].mxu0
    %v3410 = vpop.f32.mrb[0].mxu0
    %3411 = vdwg.mxu0
    %v3412 = vmax.f32 %v3407, 0.0
    %v3413 = vpack.c.bf16 %v3412, %v3412
    %v3414 = vld [vmem:[%s13] sm:$0xf]
    %v3415 = vld [vmem:[%s13 + $0x4] sm:$0xf]
    %v3416 = vld [vmem:[%s13 + $0x8] sm:$0xf]
    %v3417 = vld [vmem:[%s13 + $0xc] sm:$0xf]
    %v3418 = vld [vmem:[%s13 + $0x10] sm:$0xf]
    %v3419 = vld [vmem:[%s13 + $0x14] sm:$0xf]
    %v3420 = vld [vmem:[%s13 + $0x18] sm:$0xf]
    %v3421 = vld [vmem:[%s13 + $0x1c] sm:$0xf]
    %v3422 = vld [vmem:[%s13 + $0x20] sm:$0xf]
    %v3423 = vld [vmem:[%s13 + $0x24] sm:$0xf]
    %v3424 = vld [vmem:[%s13 + $0x28] sm:$0xf]
    %v3425 = vld [vmem:[%s13 + $0x2c] sm:$0xf]
    %v3426 = vld [vmem:[%s13 + $0x30] sm:$0xf]
    %v3427 = vld [vmem:[%s13 + $0x34] sm:$0xf]
    %v3428 = vld [vmem:[%s13 + $0x38] sm:$0xf]
    %v3429 = vld [vmem:[%s13 + $0x3c] sm:$0xf]
    %v3430 = vld [vmem:[%s14] sm:$0x1]
    %v3432 = vlaneseq
    %v3433 = vshrl.u32 %v3432, 7
    %v3434 = vsub.s32 0, %v3433
    %v3435 = vrot.slane %v3430, %v3434
    %v3453 = vunpack.c.l.b16 %v3414
    %v3454 = vunpack.c.l.b16 %v3415
    %v3455 = vunpack.c.l.b16 %v3416
    %v3456 = vunpack.c.l.b16 %v3417
    %v3457 = vunpack.c.l.b16 %v3418
    %v3458 = vunpack.c.l.b16 %v3419
    %v3459 = vunpack.c.l.b16 %v3420
    %v3460 = vunpack.c.l.b16 %v3421
    %v3461 = vunpack.c.l.b16 %v3422
    %v3462 = vunpack.c.l.b16 %v3423
    %v3463 = vunpack.c.l.b16 %v3424
    %v3464 = vunpack.c.l.b16 %v3425
    %v3465 = vunpack.c.l.b16 %v3426
    %v3466 = vunpack.c.l.b16 %v3427
    %v3467 = vunpack.c.l.b16 %v3428
    %v3468 = vunpack.c.l.b16 %v3429
    %v3469 = vpack.c.b16 %v3454, %v3453
    %v3470 = vpack.c.b16 %v3456, %v3455
    %v3471 = vpack.c.b16 %v3458, %v3457
    %v3472 = vpack.c.b16 %v3460, %v3459
    %v3473 = vpack.c.b16 %v3462, %v3461
    %v3474 = vpack.c.b16 %v3464, %v3463
    %v3475 = vpack.c.b16 %v3466, %v3465
    %v3476 = vpack.c.b16 %v3468, %v3467
    %3485 = vmatprep.subr.bf16.mxu0 0
    %3486 = vmatpush1.bf16.msra.mxu0 %v3469
    %3487 = vmatprep.subr.bf16.mxu0 0
    %3488 = vmatpush1.bf16.msra.mxu0 %v3470
    %3489 = vmatprep.subr.bf16.mxu0 0
    %3490 = vmatpush1.bf16.msra.mxu0 %v3471
    %3491 = vmatprep.subr.bf16.mxu0 0
    %3492 = vmatpush1.bf16.msra.mxu0 %v3472
    %3493 = vmatprep.subr.bf16.mxu0 0
    %3494 = vmatpush1.bf16.msra.mxu0 %v3473
    %3495 = vmatprep.subr.bf16.mxu0 0
    %3496 = vmatpush1.bf16.msra.mxu0 %v3474
    %3497 = vmatprep.subr.bf16.mxu0 0
    %3498 = vmatpush1.bf16.msra.mxu0 %v3475
    %3499 = vmatprep.subr.bf16.mxu0 0
    %3500 = vmatpush1.bf16.msra.mxu0 %v3476
    %3501 = vmatprep.subr.bf16.mxu0 0
    %3502 = vmatpush1.bf16.msra.mxu0 0
    %3503 = vmatprep.subr.bf16.mxu0 0
    %3504 = vmatpush1.bf16.msra.mxu0 0
    %3505 = vmatprep.subr.bf16.mxu0 0
    %3506 = vmatpush1.bf16.msra.mxu0 0
    %3507 = vmatprep.subr.bf16.mxu0 0
    %3508 = vmatpush1.bf16.msra.mxu0 0
    %3509 = vmatprep.subr.bf16.mxu0 0
    %3510 = vmatpush1.bf16.msra.mxu0 0
    %3511 = vmatprep.subr.bf16.mxu0 0
    %3512 = vmatpush1.bf16.msra.mxu0 0
    %3513 = vmatprep.subr.bf16.mxu0 0
    %3514 = vmatpush1.bf16.msra.mxu0 0
    %3515 = vmatprep.subr.bf16.mxu0 0
    %3516 = vmatpush1.bf16.msra.mxu0 0
    %3517 = vmatprep.mubr.bf16.mxu0 0
    %3518 = vmatmul.mubr.bf16.gmra.mrb[0].mxu0 %v3413
    %v3519 = vpop.f32.mrb[0].mxu0
    %v3520 = vadd.f32 %v3435, %v3519
    %v3521 = vpop.f32.mrb[0].mxu0
    %v3522 = vpop.f32.mrb[0].mxu0
    %v3523 = vpop.f32.mrb[0].mxu0
    %3524 = vdwg.mxu0
    %v3525 = vmax.f32 %v3520, 0.0
    %v3526 = vpack.c.bf16 %v3525, %v3525
    %v3527 = vld [vmem:[#allocation5] sm:$0xff]
    %v3528 = vld [vmem:[#allocation5 + $0x8] sm:$0xff]
    %v3529 = vld [vmem:[#allocation5 + $0x10] sm:$0xff]
    %v3530 = vld [vmem:[#allocation5 + $0x18] sm:$0xff]
    %v3531 = vld [vmem:[#allocation5 + $0x20] sm:$0xff]
    %v3532 = vld [vmem:[#allocation5 + $0x28] sm:$0xff]
    %v3533 = vld [vmem:[#allocation5 + $0x30] sm:$0xff]
    %v3534 = vld [vmem:[#allocation5 + $0x38] sm:$0xff]
    %v3535 = vld [vmem:[#allocation5 + $0x40] sm:$0xff]
    %v3536 = vld [vmem:[#allocation5 + $0x48] sm:$0xff]
    %v3537 = vld [vmem:[#allocation5 + $0x50] sm:$0xff]
    %v3538 = vld [vmem:[#allocation5 + $0x58] sm:$0xff]
    %v3539 = vld [vmem:[#allocation5 + $0x60] sm:$0xff]
    %v3540 = vld [vmem:[#allocation5 + $0x68] sm:$0xff]
    %v3541 = vld [vmem:[#allocation5 + $0x70] sm:$0xff]
    %v3542 = vld [vmem:[#allocation5 + $0x78] sm:$0xff]
    %v3543 = vld [vmem:[#allocation5 + $0x80] sm:$0xff]
    %v3544 = vld [vmem:[#allocation5 + $0x88] sm:$0xff]
    %v3545 = vld [vmem:[#allocation5 + $0x90] sm:$0xff]
    %v3546 = vld [vmem:[#allocation5 + $0x98] sm:$0xff]
    %v3547 = vld [vmem:[#allocation5 + $0xa0] sm:$0xff]
    %v3548 = vld [vmem:[#allocation5 + $0xa8] sm:$0xff]
    %v3549 = vld [vmem:[#allocation5 + $0xb0] sm:$0xff]
    %v3550 = vld [vmem:[#allocation5 + $0xb8] sm:$0xff]
    %v3551 = vld [vmem:[#allocation5 + $0xc0] sm:$0xff]
    %v3552 = vld [vmem:[#allocation5 + $0xc8] sm:$0xff]
    %v3553 = vld [vmem:[#allocation5 + $0xd0] sm:$0xff]
    %v3554 = vld [vmem:[#allocation5 + $0xd8] sm:$0xff]
    %v3555 = vld [vmem:[#allocation5 + $0xe0] sm:$0xff]
    %v3556 = vld [vmem:[#allocation5 + $0xe8] sm:$0xff]
    %v3557 = vld [vmem:[#allocation5 + $0xf0] sm:$0xff]
    %v3558 = vld [vmem:[#allocation5 + $0xf8] sm:$0xff]
    %v3559 = vld [vmem:[#allocation5 + $0x100] sm:$0xff]
    %v3560 = vld [vmem:[#allocation5 + $0x108] sm:$0xff]
    %v3561 = vld [vmem:[#allocation5 + $0x110] sm:$0xff]
    %v3562 = vld [vmem:[#allocation5 + $0x118] sm:$0xff]
    %v3563 = vld [vmem:[#allocation5 + $0x120] sm:$0xff]
    %v3564 = vld [vmem:[#allocation5 + $0x128] sm:$0xff]
    %v3565 = vld [vmem:[#allocation5 + $0x130] sm:$0xff]
    %v3566 = vld [vmem:[#allocation5 + $0x138] sm:$0xff]
    %v3567 = vld [vmem:[#allocation5 + $0x140] sm:$0xff]
    %v3568 = vld [vmem:[#allocation5 + $0x148] sm:$0xff]
    %v3569 = vld [vmem:[#allocation5 + $0x150] sm:$0xff]
    %v3570 = vld [vmem:[#allocation5 + $0x158] sm:$0xff]
    %v3571 = vld [vmem:[#allocation5 + $0x160] sm:$0xff]
    %v3572 = vld [vmem:[#allocation5 + $0x168] sm:$0xff]
    %v3573 = vld [vmem:[#allocation5 + $0x170] sm:$0xff]
    %v3574 = vld [vmem:[#allocation5 + $0x178] sm:$0xff]
    %v3575 = vld [vmem:[#allocation5 + $0x180] sm:$0xff]
    %v3576 = vld [vmem:[#allocation5 + $0x188] sm:$0xff]
    %v3577 = vld [vmem:[#allocation5 + $0x190] sm:$0xff]
    %v3578 = vld [vmem:[#allocation5 + $0x198] sm:$0xff]
    %v3579 = vld [vmem:[#allocation5 + $0x1a0] sm:$0xff]
    %v3580 = vld [vmem:[#allocation5 + $0x1a8] sm:$0xff]
    %v3581 = vld [vmem:[#allocation5 + $0x1b0] sm:$0xff]
    %v3582 = vld [vmem:[#allocation5 + $0x1b8] sm:$0xff]
    %v3583 = vld [vmem:[#allocation5 + $0x1c0] sm:$0xff]
    %v3584 = vld [vmem:[#allocation5 + $0x1c8] sm:$0xff]
    %v3585 = vld [vmem:[#allocation5 + $0x1d0] sm:$0xff]
    %v3586 = vld [vmem:[#allocation5 + $0x1d8] sm:$0xff]
    %v3587 = vld [vmem:[#allocation5 + $0x1e0] sm:$0xff]
    %v3588 = vld [vmem:[#allocation5 + $0x1e8] sm:$0xff]
    %v3589 = vld [vmem:[#allocation5 + $0x1f0] sm:$0xff]
    %v3590 = vld [vmem:[#allocation5 + $0x1f8] sm:$0xff]
    %v3591 = vld [vmem:[#allocation5 + $0x200] sm:$0xff]
    %v3592 = vld [vmem:[#allocation5 + $0x208] sm:$0xff]
    %v3593 = vld [vmem:[#allocation5 + $0x210] sm:$0xff]
    %v3594 = vld [vmem:[#allocation5 + $0x218] sm:$0xff]
    %v3595 = vld [vmem:[#allocation5 + $0x220] sm:$0xff]
    %v3596 = vld [vmem:[#allocation5 + $0x228] sm:$0xff]
    %v3597 = vld [vmem:[#allocation5 + $0x230] sm:$0xff]
    %v3598 = vld [vmem:[#allocation5 + $0x238] sm:$0xff]
    %v3599 = vld [vmem:[#allocation5 + $0x240] sm:$0xff]
    %v3600 = vld [vmem:[#allocation5 + $0x248] sm:$0xff]
    %v3601 = vld [vmem:[#allocation5 + $0x250] sm:$0xff]
    %v3602 = vld [vmem:[#allocation5 + $0x258] sm:$0xff]
    %v3603 = vld [vmem:[#allocation5 + $0x260] sm:$0xff]
    %v3604 = vld [vmem:[#allocation5 + $0x268] sm:$0xff]
    %v3605 = vld [vmem:[#allocation5 + $0x270] sm:$0xff]
    %v3606 = vld [vmem:[#allocation5 + $0x278] sm:$0xff]
    %v3607 = vld [vmem:[#allocation5 + $0x280] sm:$0xff]
    %v3608 = vld [vmem:[#allocation5 + $0x288] sm:$0xff]
    %v3609 = vld [vmem:[#allocation5 + $0x290] sm:$0xff]
    %v3610 = vld [vmem:[#allocation5 + $0x298] sm:$0xff]
    %v3611 = vld [vmem:[#allocation5 + $0x2a0] sm:$0xff]
    %v3612 = vld [vmem:[#allocation5 + $0x2a8] sm:$0xff]
    %v3613 = vld [vmem:[#allocation5 + $0x2b0] sm:$0xff]
    %v3614 = vld [vmem:[#allocation5 + $0x2b8] sm:$0xff]
    %v3615 = vld [vmem:[#allocation5 + $0x2c0] sm:$0xff]
    %v3616 = vld [vmem:[#allocation5 + $0x2c8] sm:$0xff]
    %v3617 = vld [vmem:[#allocation5 + $0x2d0] sm:$0xff]
    %v3618 = vld [vmem:[#allocation5 + $0x2d8] sm:$0xff]
    %v3619 = vld [vmem:[#allocation5 + $0x2e0] sm:$0xff]
    %v3620 = vld [vmem:[#allocation5 + $0x2e8] sm:$0xff]
    %v3621 = vld [vmem:[#allocation5 + $0x2f0] sm:$0xff]
    %v3622 = vld [vmem:[#allocation5 + $0x2f8] sm:$0xff]
    %v3623 = vld [vmem:[#allocation5 + $0x300] sm:$0xff]
    %v3624 = vld [vmem:[#allocation5 + $0x308] sm:$0xff]
    %v3625 = vld [vmem:[#allocation5 + $0x310] sm:$0xff]
    %v3626 = vld [vmem:[#allocation5 + $0x318] sm:$0xff]
    %v3627 = vld [vmem:[#allocation5 + $0x320] sm:$0xff]
    %v3628 = vld [vmem:[#allocation5 + $0x328] sm:$0xff]
    %v3629 = vld [vmem:[#allocation5 + $0x330] sm:$0xff]
    %v3630 = vld [vmem:[#allocation5 + $0x338] sm:$0xff]
    %v3631 = vld [vmem:[#allocation5 + $0x340] sm:$0xff]
    %v3632 = vld [vmem:[#allocation5 + $0x348] sm:$0xff]
    %v3633 = vld [vmem:[#allocation5 + $0x350] sm:$0xff]
    %v3634 = vld [vmem:[#allocation5 + $0x358] sm:$0xff]
    %v3635 = vld [vmem:[#allocation5 + $0x360] sm:$0xff]
    %v3636 = vld [vmem:[#allocation5 + $0x368] sm:$0xff]
    %v3637 = vld [vmem:[#allocation5 + $0x370] sm:$0xff]
    %v3638 = vld [vmem:[#allocation5 + $0x378] sm:$0xff]
    %v3639 = vld [vmem:[#allocation5 + $0x380] sm:$0xff]
    %v3640 = vld [vmem:[#allocation5 + $0x388] sm:$0xff]
    %v3641 = vld [vmem:[#allocation5 + $0x390] sm:$0xff]
    %v3642 = vld [vmem:[#allocation5 + $0x398] sm:$0xff]
    %v3643 = vld [vmem:[#allocation5 + $0x3a0] sm:$0xff]
    %v3644 = vld [vmem:[#allocation5 + $0x3a8] sm:$0xff]
    %v3645 = vld [vmem:[#allocation5 + $0x3b0] sm:$0xff]
    %v3646 = vld [vmem:[#allocation5 + $0x3b8] sm:$0xff]
    %v3647 = vld [vmem:[#allocation5 + $0x3c0] sm:$0xff]
    %v3648 = vld [vmem:[#allocation5 + $0x3c8] sm:$0xff]
    %v3649 = vld [vmem:[#allocation5 + $0x3d0] sm:$0xff]
    %v3650 = vld [vmem:[#allocation5 + $0x3d8] sm:$0xff]
    %v3651 = vld [vmem:[#allocation5 + $0x3e0] sm:$0xff]
    %v3652 = vld [vmem:[#allocation5 + $0x3e8] sm:$0xff]
    %v3653 = vld [vmem:[#allocation5 + $0x3f0] sm:$0xff]
    %v3654 = vld [vmem:[#allocation5 + $0x3f8] sm:$0xff]
    %v3655 = vld [vmem:[#allocation5 + $0x400] sm:$0xff]
    %v3656 = vld [vmem:[#allocation5 + $0x408] sm:$0xff]
    %v3657 = vld [vmem:[#allocation5 + $0x410] sm:$0xff]
    %v3658 = vld [vmem:[#allocation5 + $0x418] sm:$0xff]
    %v3659 = vld [vmem:[#allocation5 + $0x420] sm:$0xff]
    %v3660 = vld [vmem:[#allocation5 + $0x428] sm:$0xff]
    %v3661 = vld [vmem:[#allocation5 + $0x430] sm:$0xff]
    %v3662 = vld [vmem:[#allocation5 + $0x438] sm:$0xff]
    %v3663 = vld [vmem:[#allocation5 + $0x440] sm:$0xff]
    %v3664 = vld [vmem:[#allocation5 + $0x448] sm:$0xff]
    %v3665 = vld [vmem:[#allocation5 + $0x450] sm:$0xff]
    %v3666 = vld [vmem:[#allocation5 + $0x458] sm:$0xff]
    %v3667 = vld [vmem:[#allocation5 + $0x460] sm:$0xff]
    %v3668 = vld [vmem:[#allocation5 + $0x468] sm:$0xff]
    %v3669 = vld [vmem:[#allocation5 + $0x470] sm:$0xff]
    %v3670 = vld [vmem:[#allocation5 + $0x478] sm:$0xff]
    %v3671 = vld [vmem:[#allocation5 + $0x480] sm:$0xff]
    %v3672 = vld [vmem:[#allocation5 + $0x488] sm:$0xff]
    %v3673 = vld [vmem:[#allocation5 + $0x490] sm:$0xff]
    %v3674 = vld [vmem:[#allocation5 + $0x498] sm:$0xff]
    %v3675 = vld [vmem:[#allocation5 + $0x4a0] sm:$0xff]
    %v3676 = vld [vmem:[#allocation5 + $0x4a8] sm:$0xff]
    %v3677 = vld [vmem:[#allocation5 + $0x4b0] sm:$0xff]
    %v3678 = vld [vmem:[#allocation5 + $0x4b8] sm:$0xff]
    %v3679 = vld [vmem:[#allocation5 + $0x4c0] sm:$0xff]
    %v3680 = vld [vmem:[#allocation5 + $0x4c8] sm:$0xff]
    %v3681 = vld [vmem:[#allocation5 + $0x4d0] sm:$0xff]
    %v3682 = vld [vmem:[#allocation5 + $0x4d8] sm:$0xff]
    %v3683 = vld [vmem:[#allocation5 + $0x4e0] sm:$0xff]
    %v3684 = vld [vmem:[#allocation5 + $0x4e8] sm:$0xff]
    %v3685 = vld [vmem:[#allocation5 + $0x4f0] sm:$0xff]
    %v3686 = vld [vmem:[#allocation5 + $0x4f8] sm:$0xff]
    %v3687 = vld [vmem:[#allocation5 + $0x500] sm:$0xff]
    %v3688 = vld [vmem:[#allocation5 + $0x508] sm:$0xff]
    %v3689 = vld [vmem:[#allocation5 + $0x510] sm:$0xff]
    %v3690 = vld [vmem:[#allocation5 + $0x518] sm:$0xff]
    %v3691 = vld [vmem:[#allocation5 + $0x520] sm:$0xff]
    %v3692 = vld [vmem:[#allocation5 + $0x528] sm:$0xff]
    %v3693 = vld [vmem:[#allocation5 + $0x530] sm:$0xff]
    %v3694 = vld [vmem:[#allocation5 + $0x538] sm:$0xff]
    %v3695 = vld [vmem:[#allocation5 + $0x540] sm:$0xff]
    %v3696 = vld [vmem:[#allocation5 + $0x548] sm:$0xff]
    %v3697 = vld [vmem:[#allocation5 + $0x550] sm:$0xff]
    %v3698 = vld [vmem:[#allocation5 + $0x558] sm:$0xff]
    %v3699 = vld [vmem:[#allocation5 + $0x560] sm:$0xff]
    %v3700 = vld [vmem:[#allocation5 + $0x568] sm:$0xff]
    %v3701 = vld [vmem:[#allocation5 + $0x570] sm:$0xff]
    %v3702 = vld [vmem:[#allocation5 + $0x578] sm:$0xff]
    %v3703 = vld [vmem:[#allocation5 + $0x580] sm:$0xff]
    %v3704 = vld [vmem:[#allocation5 + $0x588] sm:$0xff]
    %v3705 = vld [vmem:[#allocation5 + $0x590] sm:$0xff]
    %v3706 = vld [vmem:[#allocation5 + $0x598] sm:$0xff]
    %v3707 = vld [vmem:[#allocation5 + $0x5a0] sm:$0xff]
    %v3708 = vld [vmem:[#allocation5 + $0x5a8] sm:$0xff]
    %v3709 = vld [vmem:[#allocation5 + $0x5b0] sm:$0xff]
    %v3710 = vld [vmem:[#allocation5 + $0x5b8] sm:$0xff]
    %v3711 = vld [vmem:[#allocation5 + $0x5c0] sm:$0xff]
    %v3712 = vld [vmem:[#allocation5 + $0x5c8] sm:$0xff]
    %v3713 = vld [vmem:[#allocation5 + $0x5d0] sm:$0xff]
    %v3714 = vld [vmem:[#allocation5 + $0x5d8] sm:$0xff]
    %v3715 = vld [vmem:[#allocation5 + $0x5e0] sm:$0xff]
    %v3716 = vld [vmem:[#allocation5 + $0x5e8] sm:$0xff]
    %v3717 = vld [vmem:[#allocation5 + $0x5f0] sm:$0xff]
    %v3718 = vld [vmem:[#allocation5 + $0x5f8] sm:$0xff]
    %v3719 = vld [vmem:[#allocation5 + $0x600] sm:$0xff]
    %v3720 = vld [vmem:[#allocation5 + $0x608] sm:$0xff]
    %v3721 = vld [vmem:[#allocation5 + $0x610] sm:$0xff]
    %v3722 = vld [vmem:[#allocation5 + $0x618] sm:$0xff]
    %v3723 = vld [vmem:[#allocation5 + $0x620] sm:$0xff]
    %v3724 = vld [vmem:[#allocation5 + $0x628] sm:$0xff]
    %v3725 = vld [vmem:[#allocation5 + $0x630] sm:$0xff]
    %v3726 = vld [vmem:[#allocation5 + $0x638] sm:$0xff]
    %v3727 = vld [vmem:[#allocation5 + $0x640] sm:$0xff]
    %v3728 = vld [vmem:[#allocation5 + $0x648] sm:$0xff]
    %v3729 = vld [vmem:[#allocation5 + $0x650] sm:$0xff]
    %v3730 = vld [vmem:[#allocation5 + $0x658] sm:$0xff]
    %v3731 = vld [vmem:[#allocation5 + $0x660] sm:$0xff]
    %v3732 = vld [vmem:[#allocation5 + $0x668] sm:$0xff]
    %v3733 = vld [vmem:[#allocation5 + $0x670] sm:$0xff]
    %v3734 = vld [vmem:[#allocation5 + $0x678] sm:$0xff]
    %v3735 = vld [vmem:[#allocation5 + $0x680] sm:$0xff]
    %v3736 = vld [vmem:[#allocation5 + $0x688] sm:$0xff]
    %v3737 = vld [vmem:[#allocation5 + $0x690] sm:$0xff]
    %v3738 = vld [vmem:[#allocation5 + $0x698] sm:$0xff]
    %v3739 = vld [vmem:[#allocation5 + $0x6a0] sm:$0xff]
    %v3740 = vld [vmem:[#allocation5 + $0x6a8] sm:$0xff]
    %v3741 = vld [vmem:[#allocation5 + $0x6b0] sm:$0xff]
    %v3742 = vld [vmem:[#allocation5 + $0x6b8] sm:$0xff]
    %v3743 = vld [vmem:[#allocation5 + $0x6c0] sm:$0xff]
    %v3744 = vld [vmem:[#allocation5 + $0x6c8] sm:$0xff]
    %v3745 = vld [vmem:[#allocation5 + $0x6d0] sm:$0xff]
    %v3746 = vld [vmem:[#allocation5 + $0x6d8] sm:$0xff]
    %v3747 = vld [vmem:[#allocation5 + $0x6e0] sm:$0xff]
    %v3748 = vld [vmem:[#allocation5 + $0x6e8] sm:$0xff]
    %v3749 = vld [vmem:[#allocation5 + $0x6f0] sm:$0xff]
    %v3750 = vld [vmem:[#allocation5 + $0x6f8] sm:$0xff]
    %v3751 = vld [vmem:[#allocation5 + $0x700] sm:$0xff]
    %v3752 = vld [vmem:[#allocation5 + $0x708] sm:$0xff]
    %v3753 = vld [vmem:[#allocation5 + $0x710] sm:$0xff]
    %v3754 = vld [vmem:[#allocation5 + $0x718] sm:$0xff]
    %v3755 = vld [vmem:[#allocation5 + $0x720] sm:$0xff]
    %v3756 = vld [vmem:[#allocation5 + $0x728] sm:$0xff]
    %v3757 = vld [vmem:[#allocation5 + $0x730] sm:$0xff]
    %v3758 = vld [vmem:[#allocation5 + $0x738] sm:$0xff]
    %v3759 = vld [vmem:[#allocation5 + $0x740] sm:$0xff]
    %v3760 = vld [vmem:[#allocation5 + $0x748] sm:$0xff]
    %v3761 = vld [vmem:[#allocation5 + $0x750] sm:$0xff]
    %v3762 = vld [vmem:[#allocation5 + $0x758] sm:$0xff]
    %v3763 = vld [vmem:[#allocation5 + $0x760] sm:$0xff]
    %v3764 = vld [vmem:[#allocation5 + $0x768] sm:$0xff]
    %v3765 = vld [vmem:[#allocation5 + $0x770] sm:$0xff]
    %v3766 = vld [vmem:[#allocation5 + $0x778] sm:$0xff]
    %v3767 = vld [vmem:[#allocation5 + $0x780] sm:$0xff]
    %v3768 = vld [vmem:[#allocation5 + $0x788] sm:$0xff]
    %v3769 = vld [vmem:[#allocation5 + $0x790] sm:$0xff]
    %v3770 = vld [vmem:[#allocation5 + $0x798] sm:$0xff]
    %v3771 = vld [vmem:[#allocation5 + $0x7a0] sm:$0xff]
    %v3772 = vld [vmem:[#allocation5 + $0x7a8] sm:$0xff]
    %v3773 = vld [vmem:[#allocation5 + $0x7b0] sm:$0xff]
    %v3774 = vld [vmem:[#allocation5 + $0x7b8] sm:$0xff]
    %v3775 = vld [vmem:[#allocation5 + $0x7c0] sm:$0xff]
    %v3776 = vld [vmem:[#allocation5 + $0x7c8] sm:$0xff]
    %v3777 = vld [vmem:[#allocation5 + $0x7d0] sm:$0xff]
    %v3778 = vld [vmem:[#allocation5 + $0x7d8] sm:$0xff]
    %v3779 = vld [vmem:[#allocation5 + $0x7e0] sm:$0xff]
    %v3780 = vld [vmem:[#allocation5 + $0x7e8] sm:$0xff]
    %v3781 = vld [vmem:[#allocation5 + $0x7f0] sm:$0xff]
    %v3782 = vld [vmem:[#allocation5 + $0x7f8] sm:$0xff]
    %v3783 = vld [vmem:[%s16] sm:$0xff]
    %v3784 = vld [vmem:[%s16 + $0x8] sm:$0xff]
    %v3785 = vld [vmem:[%s16 + $0x10] sm:$0xff]
    %v3786 = vld [vmem:[%s16 + $0x18] sm:$0xff]
    %v3791 = vlaneseq
    %v3792 = vshrl.u32 %v3791, 7
    %v3793 = vsub.s32 0, %v3792
    %v3794 = vrot.slane %v3783, %v3793
    %v3795 = vlaneseq
    %v3796 = vshrl.u32 %v3795, 7
    %v3797 = vsub.s32 1, %v3796
    %v3798 = vrot.slane %v3783, %v3797
    %v3799 = vlaneseq
    %v3800 = vshrl.u32 %v3799, 7
    %v3801 = vsub.s32 2, %v3800
    %v3802 = vrot.slane %v3783, %v3801
    %v3803 = vlaneseq
    %v3804 = vshrl.u32 %v3803, 7
    %v3805 = vsub.s32 3, %v3804
    %v3806 = vrot.slane %v3783, %v3805
    %v3807 = vlaneseq
    %v3808 = vshrl.u32 %v3807, 7
    %v3809 = vsub.s32 4, %v3808
    %v3810 = vrot.slane %v3783, %v3809
    %v3811 = vlaneseq
    %v3812 = vshrl.u32 %v3811, 7
    %v3813 = vsub.s32 5, %v3812
    %v3814 = vrot.slane %v3783, %v3813
    %v3815 = vlaneseq
    %v3816 = vshrl.u32 %v3815, 7
    %v3817 = vsub.s32 6, %v3816
    %v3818 = vrot.slane %v3783, %v3817
    %v3819 = vlaneseq
    %v3820 = vshrl.u32 %v3819, 7
    %v3821 = vsub.s32 7, %v3820
    %v3822 = vrot.slane %v3783, %v3821
    %v3823 = vlaneseq
    %v3824 = vshrl.u32 %v3823, 7
    %v3825 = vsub.s32 0, %v3824
    %v3826 = vrot.slane %v3784, %v3825
    %v3827 = vlaneseq
    %v3828 = vshrl.u32 %v3827, 7
    %v3829 = vsub.s32 1, %v3828
    %v3830 = vrot.slane %v3784, %v3829
    %v3831 = vlaneseq
    %v3832 = vshrl.u32 %v3831, 7
    %v3833 = vsub.s32 2, %v3832
    %v3834 = vrot.slane %v3784, %v3833
    %v3835 = vlaneseq
    %v3836 = vshrl.u32 %v3835, 7
    %v3837 = vsub.s32 3, %v3836
    %v3838 = vrot.slane %v3784, %v3837
    %v3839 = vlaneseq
    %v3840 = vshrl.u32 %v3839, 7
    %v3841 = vsub.s32 4, %v3840
    %v3842 = vrot.slane %v3784, %v3841
    %v3843 = vlaneseq
    %v3844 = vshrl.u32 %v3843, 7
    %v3845 = vsub.s32 5, %v3844
    %v3846 = vrot.slane %v3784, %v3845
    %v3847 = vlaneseq
    %v3848 = vshrl.u32 %v3847, 7
    %v3849 = vsub.s32 6, %v3848
    %v3850 = vrot.slane %v3784, %v3849
    %v3851 = vlaneseq
    %v3852 = vshrl.u32 %v3851, 7
    %v3853 = vsub.s32 7, %v3852
    %v3854 = vrot.slane %v3784, %v3853
    %v3855 = vlaneseq
    %v3856 = vshrl.u32 %v3855, 7
    %v3857 = vsub.s32 0, %v3856
    %v3858 = vrot.slane %v3785, %v3857
    %v3859 = vlaneseq
    %v3860 = vshrl.u32 %v3859, 7
    %v3861 = vsub.s32 1, %v3860
    %v3862 = vrot.slane %v3785, %v3861
    %v3863 = vlaneseq
    %v3864 = vshrl.u32 %v3863, 7
    %v3865 = vsub.s32 2, %v3864
    %v3866 = vrot.slane %v3785, %v3865
    %v3867 = vlaneseq
    %v3868 = vshrl.u32 %v3867, 7
    %v3869 = vsub.s32 3, %v3868
    %v3870 = vrot.slane %v3785, %v3869
    %v3871 = vlaneseq
    %v3872 = vshrl.u32 %v3871, 7
    %v3873 = vsub.s32 4, %v3872
    %v3874 = vrot.slane %v3785, %v3873
    %v3875 = vlaneseq
    %v3876 = vshrl.u32 %v3875, 7
    %v3877 = vsub.s32 5, %v3876
    %v3878 = vrot.slane %v3785, %v3877
    %v3879 = vlaneseq
    %v3880 = vshrl.u32 %v3879, 7
    %v3881 = vsub.s32 6, %v3880
    %v3882 = vrot.slane %v3785, %v3881
    %v3883 = vlaneseq
    %v3884 = vshrl.u32 %v3883, 7
    %v3885 = vsub.s32 7, %v3884
    %v3886 = vrot.slane %v3785, %v3885
    %v3887 = vlaneseq
    %v3888 = vshrl.u32 %v3887, 7
    %v3889 = vsub.s32 0, %v3888
    %v3890 = vrot.slane %v3786, %v3889
    %v3891 = vlaneseq
    %v3892 = vshrl.u32 %v3891, 7
    %v3893 = vsub.s32 1, %v3892
    %v3894 = vrot.slane %v3786, %v3893
    %v3895 = vlaneseq
    %v3896 = vshrl.u32 %v3895, 7
    %v3897 = vsub.s32 2, %v3896
    %v3898 = vrot.slane %v3786, %v3897
    %v3899 = vlaneseq
    %v3900 = vshrl.u32 %v3899, 7
    %v3901 = vsub.s32 3, %v3900
    %v3902 = vrot.slane %v3786, %v3901
    %v3903 = vlaneseq
    %v3904 = vshrl.u32 %v3903, 7
    %v3905 = vsub.s32 4, %v3904
    %v3906 = vrot.slane %v3786, %v3905
    %v3907 = vlaneseq
    %v3908 = vshrl.u32 %v3907, 7
    %v3909 = vsub.s32 5, %v3908
    %v3910 = vrot.slane %v3786, %v3909
    %v3911 = vlaneseq
    %v3912 = vshrl.u32 %v3911, 7
    %v3913 = vsub.s32 6, %v3912
    %v3914 = vrot.slane %v3786, %v3913
    %v3915 = vlaneseq
    %v3916 = vshrl.u32 %v3915, 7
    %v3917 = vsub.s32 7, %v3916
    %v3918 = vrot.slane %v3786, %v3917
    %v4207 = vunpack.c.l.b16 %v3527
    %v4208 = vunpack.c.h.b16 %v3527
    %v4209 = vunpack.c.l.b16 %v3528
    %v4210 = vunpack.c.h.b16 %v3528
    %v4211 = vunpack.c.l.b16 %v3529
    %v4212 = vunpack.c.h.b16 %v3529
    %v4213 = vunpack.c.l.b16 %v3530
    %v4214 = vunpack.c.h.b16 %v3530
    %v4215 = vunpack.c.l.b16 %v3531
    %v4216 = vunpack.c.h.b16 %v3531
    %v4217 = vunpack.c.l.b16 %v3532
    %v4218 = vunpack.c.h.b16 %v3532
    %v4219 = vunpack.c.l.b16 %v3533
    %v4220 = vunpack.c.h.b16 %v3533
    %v4221 = vunpack.c.l.b16 %v3534
    %v4222 = vunpack.c.h.b16 %v3534
    %v4223 = vunpack.c.l.b16 %v3535
    %v4224 = vunpack.c.h.b16 %v3535
    %v4225 = vunpack.c.l.b16 %v3536
    %v4226 = vunpack.c.h.b16 %v3536
    %v4227 = vunpack.c.l.b16 %v3537
    %v4228 = vunpack.c.h.b16 %v3537
    %v4229 = vunpack.c.l.b16 %v3538
    %v4230 = vunpack.c.h.b16 %v3538
    %v4231 = vunpack.c.l.b16 %v3539
    %v4232 = vunpack.c.h.b16 %v3539
    %v4233 = vunpack.c.l.b16 %v3540
    %v4234 = vunpack.c.h.b16 %v3540
    %v4235 = vunpack.c.l.b16 %v3541
    %v4236 = vunpack.c.h.b16 %v3541
    %v4237 = vunpack.c.l.b16 %v3542
    %v4238 = vunpack.c.h.b16 %v3542
    %v4239 = vunpack.c.l.b16 %v3543
    %v4240 = vunpack.c.h.b16 %v3543
    %v4241 = vunpack.c.l.b16 %v3544
    %v4242 = vunpack.c.h.b16 %v3544
    %v4243 = vunpack.c.l.b16 %v3545
    %v4244 = vunpack.c.h.b16 %v3545
    %v4245 = vunpack.c.l.b16 %v3546
    %v4246 = vunpack.c.h.b16 %v3546
    %v4247 = vunpack.c.l.b16 %v3547
    %v4248 = vunpack.c.h.b16 %v3547
    %v4249 = vunpack.c.l.b16 %v3548
    %v4250 = vunpack.c.h.b16 %v3548
    %v4251 = vunpack.c.l.b16 %v3549
    %v4252 = vunpack.c.h.b16 %v3549
    %v4253 = vunpack.c.l.b16 %v3550
    %v4254 = vunpack.c.h.b16 %v3550
    %v4255 = vunpack.c.l.b16 %v3551
    %v4256 = vunpack.c.h.b16 %v3551
    %v4257 = vunpack.c.l.b16 %v3552
    %v4258 = vunpack.c.h.b16 %v3552
    %v4259 = vunpack.c.l.b16 %v3553
    %v4260 = vunpack.c.h.b16 %v3553
    %v4261 = vunpack.c.l.b16 %v3554
    %v4262 = vunpack.c.h.b16 %v3554
    %v4263 = vunpack.c.l.b16 %v3555
    %v4264 = vunpack.c.h.b16 %v3555
    %v4265 = vunpack.c.l.b16 %v3556
    %v4266 = vunpack.c.h.b16 %v3556
    %v4267 = vunpack.c.l.b16 %v3557
    %v4268 = vunpack.c.h.b16 %v3557
    %v4269 = vunpack.c.l.b16 %v3558
    %v4270 = vunpack.c.h.b16 %v3558
    %v4271 = vunpack.c.l.b16 %v3559
    %v4272 = vunpack.c.h.b16 %v3559
    %v4273 = vunpack.c.l.b16 %v3560
    %v4274 = vunpack.c.h.b16 %v3560
    %v4275 = vunpack.c.l.b16 %v3561
    %v4276 = vunpack.c.h.b16 %v3561
    %v4277 = vunpack.c.l.b16 %v3562
    %v4278 = vunpack.c.h.b16 %v3562
    %v4279 = vunpack.c.l.b16 %v3563
    %v4280 = vunpack.c.h.b16 %v3563
    %v4281 = vunpack.c.l.b16 %v3564
    %v4282 = vunpack.c.h.b16 %v3564
    %v4283 = vunpack.c.l.b16 %v3565
    %v4284 = vunpack.c.h.b16 %v3565
    %v4285 = vunpack.c.l.b16 %v3566
    %v4286 = vunpack.c.h.b16 %v3566
    %v4287 = vunpack.c.l.b16 %v3567
    %v4288 = vunpack.c.h.b16 %v3567
    %v4289 = vunpack.c.l.b16 %v3568
    %v4290 = vunpack.c.h.b16 %v3568
    %v4291 = vunpack.c.l.b16 %v3569
    %v4292 = vunpack.c.h.b16 %v3569
    %v4293 = vunpack.c.l.b16 %v3570
    %v4294 = vunpack.c.h.b16 %v3570
    %v4295 = vunpack.c.l.b16 %v3571
    %v4296 = vunpack.c.h.b16 %v3571
    %v4297 = vunpack.c.l.b16 %v3572
    %v4298 = vunpack.c.h.b16 %v3572
    %v4299 = vunpack.c.l.b16 %v3573
    %v4300 = vunpack.c.h.b16 %v3573
    %v4301 = vunpack.c.l.b16 %v3574
    %v4302 = vunpack.c.h.b16 %v3574
    %v4303 = vunpack.c.l.b16 %v3575
    %v4304 = vunpack.c.h.b16 %v3575
    %v4305 = vunpack.c.l.b16 %v3576
    %v4306 = vunpack.c.h.b16 %v3576
    %v4307 = vunpack.c.l.b16 %v3577
    %v4308 = vunpack.c.h.b16 %v3577
    %v4309 = vunpack.c.l.b16 %v3578
    %v4310 = vunpack.c.h.b16 %v3578
    %v4311 = vunpack.c.l.b16 %v3579
    %v4312 = vunpack.c.h.b16 %v3579
    %v4313 = vunpack.c.l.b16 %v3580
    %v4314 = vunpack.c.h.b16 %v3580
    %v4315 = vunpack.c.l.b16 %v3581
    %v4316 = vunpack.c.h.b16 %v3581
    %v4317 = vunpack.c.l.b16 %v3582
    %v4318 = vunpack.c.h.b16 %v3582
    %v4319 = vunpack.c.l.b16 %v3583
    %v4320 = vunpack.c.h.b16 %v3583
    %v4321 = vunpack.c.l.b16 %v3584
    %v4322 = vunpack.c.h.b16 %v3584
    %v4323 = vunpack.c.l.b16 %v3585
    %v4324 = vunpack.c.h.b16 %v3585
    %v4325 = vunpack.c.l.b16 %v3586
    %v4326 = vunpack.c.h.b16 %v3586
    %v4327 = vunpack.c.l.b16 %v3587
    %v4328 = vunpack.c.h.b16 %v3587
    %v4329 = vunpack.c.l.b16 %v3588
    %v4330 = vunpack.c.h.b16 %v3588
    %v4331 = vunpack.c.l.b16 %v3589
    %v4332 = vunpack.c.h.b16 %v3589
    %v4333 = vunpack.c.l.b16 %v3590
    %v4334 = vunpack.c.h.b16 %v3590
    %v4335 = vunpack.c.l.b16 %v3591
    %v4336 = vunpack.c.h.b16 %v3591
    %v4337 = vunpack.c.l.b16 %v3592
    %v4338 = vunpack.c.h.b16 %v3592
    %v4339 = vunpack.c.l.b16 %v3593
    %v4340 = vunpack.c.h.b16 %v3593
    %v4341 = vunpack.c.l.b16 %v3594
    %v4342 = vunpack.c.h.b16 %v3594
    %v4343 = vunpack.c.l.b16 %v3595
    %v4344 = vunpack.c.h.b16 %v3595
    %v4345 = vunpack.c.l.b16 %v3596
    %v4346 = vunpack.c.h.b16 %v3596
    %v4347 = vunpack.c.l.b16 %v3597
    %v4348 = vunpack.c.h.b16 %v3597
    %v4349 = vunpack.c.l.b16 %v3598
    %v4350 = vunpack.c.h.b16 %v3598
    %v4351 = vunpack.c.l.b16 %v3599
    %v4352 = vunpack.c.h.b16 %v3599
    %v4353 = vunpack.c.l.b16 %v3600
    %v4354 = vunpack.c.h.b16 %v3600
    %v4355 = vunpack.c.l.b16 %v3601
    %v4356 = vunpack.c.h.b16 %v3601
    %v4357 = vunpack.c.l.b16 %v3602
    %v4358 = vunpack.c.h.b16 %v3602
    %v4359 = vunpack.c.l.b16 %v3603
    %v4360 = vunpack.c.h.b16 %v3603
    %v4361 = vunpack.c.l.b16 %v3604
    %v4362 = vunpack.c.h.b16 %v3604
    %v4363 = vunpack.c.l.b16 %v3605
    %v4364 = vunpack.c.h.b16 %v3605
    %v4365 = vunpack.c.l.b16 %v3606
    %v4366 = vunpack.c.h.b16 %v3606
    %v4367 = vunpack.c.l.b16 %v3607
    %v4368 = vunpack.c.h.b16 %v3607
    %v4369 = vunpack.c.l.b16 %v3608
    %v4370 = vunpack.c.h.b16 %v3608
    %v4371 = vunpack.c.l.b16 %v3609
    %v4372 = vunpack.c.h.b16 %v3609
    %v4373 = vunpack.c.l.b16 %v3610
    %v4374 = vunpack.c.h.b16 %v3610
    %v4375 = vunpack.c.l.b16 %v3611
    %v4376 = vunpack.c.h.b16 %v3611
    %v4377 = vunpack.c.l.b16 %v3612
    %v4378 = vunpack.c.h.b16 %v3612
    %v4379 = vunpack.c.l.b16 %v3613
    %v4380 = vunpack.c.h.b16 %v3613
    %v4381 = vunpack.c.l.b16 %v3614
    %v4382 = vunpack.c.h.b16 %v3614
    %v4383 = vunpack.c.l.b16 %v3615
    %v4384 = vunpack.c.h.b16 %v3615
    %v4385 = vunpack.c.l.b16 %v3616
    %v4386 = vunpack.c.h.b16 %v3616
    %v4387 = vunpack.c.l.b16 %v3617
    %v4388 = vunpack.c.h.b16 %v3617
    %v4389 = vunpack.c.l.b16 %v3618
    %v4390 = vunpack.c.h.b16 %v3618
    %v4391 = vunpack.c.l.b16 %v3619
    %v4392 = vunpack.c.h.b16 %v3619
    %v4393 = vunpack.c.l.b16 %v3620
    %v4394 = vunpack.c.h.b16 %v3620
    %v4395 = vunpack.c.l.b16 %v3621
    %v4396 = vunpack.c.h.b16 %v3621
    %v4397 = vunpack.c.l.b16 %v3622
    %v4398 = vunpack.c.h.b16 %v3622
    %v4399 = vunpack.c.l.b16 %v3623
    %v4400 = vunpack.c.h.b16 %v3623
    %v4401 = vunpack.c.l.b16 %v3624
    %v4402 = vunpack.c.h.b16 %v3624
    %v4403 = vunpack.c.l.b16 %v3625
    %v4404 = vunpack.c.h.b16 %v3625
    %v4405 = vunpack.c.l.b16 %v3626
    %v4406 = vunpack.c.h.b16 %v3626
    %v4407 = vunpack.c.l.b16 %v3627
    %v4408 = vunpack.c.h.b16 %v3627
    %v4409 = vunpack.c.l.b16 %v3628
    %v4410 = vunpack.c.h.b16 %v3628
    %v4411 = vunpack.c.l.b16 %v3629
    %v4412 = vunpack.c.h.b16 %v3629
    %v4413 = vunpack.c.l.b16 %v3630
    %v4414 = vunpack.c.h.b16 %v3630
    %v4415 = vunpack.c.l.b16 %v3631
    %v4416 = vunpack.c.h.b16 %v3631
    %v4417 = vunpack.c.l.b16 %v3632
    %v4418 = vunpack.c.h.b16 %v3632
    %v4419 = vunpack.c.l.b16 %v3633
    %v4420 = vunpack.c.h.b16 %v3633
    %v4421 = vunpack.c.l.b16 %v3634
    %v4422 = vunpack.c.h.b16 %v3634
    %v4423 = vunpack.c.l.b16 %v3635
    %v4424 = vunpack.c.h.b16 %v3635
    %v4425 = vunpack.c.l.b16 %v3636
    %v4426 = vunpack.c.h.b16 %v3636
    %v4427 = vunpack.c.l.b16 %v3637
    %v4428 = vunpack.c.h.b16 %v3637
    %v4429 = vunpack.c.l.b16 %v3638
    %v4430 = vunpack.c.h.b16 %v3638
    %v4431 = vunpack.c.l.b16 %v3639
    %v4432 = vunpack.c.h.b16 %v3639
    %v4433 = vunpack.c.l.b16 %v3640
    %v4434 = vunpack.c.h.b16 %v3640
    %v4435 = vunpack.c.l.b16 %v3641
    %v4436 = vunpack.c.h.b16 %v3641
    %v4437 = vunpack.c.l.b16 %v3642
    %v4438 = vunpack.c.h.b16 %v3642
    %v4439 = vunpack.c.l.b16 %v3643
    %v4440 = vunpack.c.h.b16 %v3643
    %v4441 = vunpack.c.l.b16 %v3644
    %v4442 = vunpack.c.h.b16 %v3644
    %v4443 = vunpack.c.l.b16 %v3645
    %v4444 = vunpack.c.h.b16 %v3645
    %v4445 = vunpack.c.l.b16 %v3646
    %v4446 = vunpack.c.h.b16 %v3646
    %v4447 = vunpack.c.l.b16 %v3647
    %v4448 = vunpack.c.h.b16 %v3647
    %v4449 = vunpack.c.l.b16 %v3648
    %v4450 = vunpack.c.h.b16 %v3648
    %v4451 = vunpack.c.l.b16 %v3649
    %v4452 = vunpack.c.h.b16 %v3649
    %v4453 = vunpack.c.l.b16 %v3650
    %v4454 = vunpack.c.h.b16 %v3650
    %v4455 = vunpack.c.l.b16 %v3651
    %v4456 = vunpack.c.h.b16 %v3651
    %v4457 = vunpack.c.l.b16 %v3652
    %v4458 = vunpack.c.h.b16 %v3652
    %v4459 = vunpack.c.l.b16 %v3653
    %v4460 = vunpack.c.h.b16 %v3653
    %v4461 = vunpack.c.l.b16 %v3654
    %v4462 = vunpack.c.h.b16 %v3654
    %v4463 = vunpack.c.l.b16 %v3655
    %v4464 = vunpack.c.h.b16 %v3655
    %v4465 = vunpack.c.l.b16 %v3656
    %v4466 = vunpack.c.h.b16 %v3656
    %v4467 = vunpack.c.l.b16 %v3657
    %v4468 = vunpack.c.h.b16 %v3657
    %v4469 = vunpack.c.l.b16 %v3658
    %v4470 = vunpack.c.h.b16 %v3658
    %v4471 = vunpack.c.l.b16 %v3659
    %v4472 = vunpack.c.h.b16 %v3659
    %v4473 = vunpack.c.l.b16 %v3660
    %v4474 = vunpack.c.h.b16 %v3660
    %v4475 = vunpack.c.l.b16 %v3661
    %v4476 = vunpack.c.h.b16 %v3661
    %v4477 = vunpack.c.l.b16 %v3662
    %v4478 = vunpack.c.h.b16 %v3662
    %v4479 = vunpack.c.l.b16 %v3663
    %v4480 = vunpack.c.h.b16 %v3663
    %v4481 = vunpack.c.l.b16 %v3664
    %v4482 = vunpack.c.h.b16 %v3664
    %v4483 = vunpack.c.l.b16 %v3665
    %v4484 = vunpack.c.h.b16 %v3665
    %v4485 = vunpack.c.l.b16 %v3666
    %v4486 = vunpack.c.h.b16 %v3666
    %v4487 = vunpack.c.l.b16 %v3667
    %v4488 = vunpack.c.h.b16 %v3667
    %v4489 = vunpack.c.l.b16 %v3668
    %v4490 = vunpack.c.h.b16 %v3668
    %v4491 = vunpack.c.l.b16 %v3669
    %v4492 = vunpack.c.h.b16 %v3669
    %v4493 = vunpack.c.l.b16 %v3670
    %v4494 = vunpack.c.h.b16 %v3670
    %v4495 = vunpack.c.l.b16 %v3671
    %v4496 = vunpack.c.h.b16 %v3671
    %v4497 = vunpack.c.l.b16 %v3672
    %v4498 = vunpack.c.h.b16 %v3672
    %v4499 = vunpack.c.l.b16 %v3673
    %v4500 = vunpack.c.h.b16 %v3673
    %v4501 = vunpack.c.l.b16 %v3674
    %v4502 = vunpack.c.h.b16 %v3674
    %v4503 = vunpack.c.l.b16 %v3675
    %v4504 = vunpack.c.h.b16 %v3675
    %v4505 = vunpack.c.l.b16 %v3676
    %v4506 = vunpack.c.h.b16 %v3676
    %v4507 = vunpack.c.l.b16 %v3677
    %v4508 = vunpack.c.h.b16 %v3677
    %v4509 = vunpack.c.l.b16 %v3678
    %v4510 = vunpack.c.h.b16 %v3678
    %v4511 = vunpack.c.l.b16 %v3679
    %v4512 = vunpack.c.h.b16 %v3679
    %v4513 = vunpack.c.l.b16 %v3680
    %v4514 = vunpack.c.h.b16 %v3680
    %v4515 = vunpack.c.l.b16 %v3681
    %v4516 = vunpack.c.h.b16 %v3681
    %v4517 = vunpack.c.l.b16 %v3682
    %v4518 = vunpack.c.h.b16 %v3682
    %v4519 = vunpack.c.l.b16 %v3683
    %v4520 = vunpack.c.h.b16 %v3683
    %v4521 = vunpack.c.l.b16 %v3684
    %v4522 = vunpack.c.h.b16 %v3684
    %v4523 = vunpack.c.l.b16 %v3685
    %v4524 = vunpack.c.h.b16 %v3685
    %v4525 = vunpack.c.l.b16 %v3686
    %v4526 = vunpack.c.h.b16 %v3686
    %v4527 = vunpack.c.l.b16 %v3687
    %v4528 = vunpack.c.h.b16 %v3687
    %v4529 = vunpack.c.l.b16 %v3688
    %v4530 = vunpack.c.h.b16 %v3688
    %v4531 = vunpack.c.l.b16 %v3689
    %v4532 = vunpack.c.h.b16 %v3689
    %v4533 = vunpack.c.l.b16 %v3690
    %v4534 = vunpack.c.h.b16 %v3690
    %v4535 = vunpack.c.l.b16 %v3691
    %v4536 = vunpack.c.h.b16 %v3691
    %v4537 = vunpack.c.l.b16 %v3692
    %v4538 = vunpack.c.h.b16 %v3692
    %v4539 = vunpack.c.l.b16 %v3693
    %v4540 = vunpack.c.h.b16 %v3693
    %v4541 = vunpack.c.l.b16 %v3694
    %v4542 = vunpack.c.h.b16 %v3694
    %v4543 = vunpack.c.l.b16 %v3695
    %v4544 = vunpack.c.h.b16 %v3695
    %v4545 = vunpack.c.l.b16 %v3696
    %v4546 = vunpack.c.h.b16 %v3696
    %v4547 = vunpack.c.l.b16 %v3697
    %v4548 = vunpack.c.h.b16 %v3697
    %v4549 = vunpack.c.l.b16 %v3698
    %v4550 = vunpack.c.h.b16 %v3698
    %v4551 = vunpack.c.l.b16 %v3699
    %v4552 = vunpack.c.h.b16 %v3699
    %v4553 = vunpack.c.l.b16 %v3700
    %v4554 = vunpack.c.h.b16 %v3700
    %v4555 = vunpack.c.l.b16 %v3701
    %v4556 = vunpack.c.h.b16 %v3701
    %v4557 = vunpack.c.l.b16 %v3702
    %v4558 = vunpack.c.h.b16 %v3702
    %v4559 = vunpack.c.l.b16 %v3703
    %v4560 = vunpack.c.h.b16 %v3703
    %v4561 = vunpack.c.l.b16 %v3704
    %v4562 = vunpack.c.h.b16 %v3704
    %v4563 = vunpack.c.l.b16 %v3705
    %v4564 = vunpack.c.h.b16 %v3705
    %v4565 = vunpack.c.l.b16 %v3706
    %v4566 = vunpack.c.h.b16 %v3706
    %v4567 = vunpack.c.l.b16 %v3707
    %v4568 = vunpack.c.h.b16 %v3707
    %v4569 = vunpack.c.l.b16 %v3708
    %v4570 = vunpack.c.h.b16 %v3708
    %v4571 = vunpack.c.l.b16 %v3709
    %v4572 = vunpack.c.h.b16 %v3709
    %v4573 = vunpack.c.l.b16 %v3710
    %v4574 = vunpack.c.h.b16 %v3710
    %v4575 = vunpack.c.l.b16 %v3711
    %v4576 = vunpack.c.h.b16 %v3711
    %v4577 = vunpack.c.l.b16 %v3712
    %v4578 = vunpack.c.h.b16 %v3712
    %v4579 = vunpack.c.l.b16 %v3713
    %v4580 = vunpack.c.h.b16 %v3713
    %v4581 = vunpack.c.l.b16 %v3714
    %v4582 = vunpack.c.h.b16 %v3714
    %v4583 = vunpack.c.l.b16 %v3715
    %v4584 = vunpack.c.h.b16 %v3715
    %v4585 = vunpack.c.l.b16 %v3716
    %v4586 = vunpack.c.h.b16 %v3716
    %v4587 = vunpack.c.l.b16 %v3717
    %v4588 = vunpack.c.h.b16 %v3717
    %v4589 = vunpack.c.l.b16 %v3718
    %v4590 = vunpack.c.h.b16 %v3718
    %v4591 = vunpack.c.l.b16 %v3719
    %v4592 = vunpack.c.h.b16 %v3719
    %v4593 = vunpack.c.l.b16 %v3720
    %v4594 = vunpack.c.h.b16 %v3720
    %v4595 = vunpack.c.l.b16 %v3721
    %v4596 = vunpack.c.h.b16 %v3721
    %v4597 = vunpack.c.l.b16 %v3722
    %v4598 = vunpack.c.h.b16 %v3722
    %v4599 = vunpack.c.l.b16 %v3723
    %v4600 = vunpack.c.h.b16 %v3723
    %v4601 = vunpack.c.l.b16 %v3724
    %v4602 = vunpack.c.h.b16 %v3724
    %v4603 = vunpack.c.l.b16 %v3725
    %v4604 = vunpack.c.h.b16 %v3725
    %v4605 = vunpack.c.l.b16 %v3726
    %v4606 = vunpack.c.h.b16 %v3726
    %v4607 = vunpack.c.l.b16 %v3727
    %v4608 = vunpack.c.h.b16 %v3727
    %v4609 = vunpack.c.l.b16 %v3728
    %v4610 = vunpack.c.h.b16 %v3728
    %v4611 = vunpack.c.l.b16 %v3729
    %v4612 = vunpack.c.h.b16 %v3729
    %v4613 = vunpack.c.l.b16 %v3730
    %v4614 = vunpack.c.h.b16 %v3730
    %v4615 = vunpack.c.l.b16 %v3731
    %v4616 = vunpack.c.h.b16 %v3731
    %v4617 = vunpack.c.l.b16 %v3732
    %v4618 = vunpack.c.h.b16 %v3732
    %v4619 = vunpack.c.l.b16 %v3733
    %v4620 = vunpack.c.h.b16 %v3733
    %v4621 = vunpack.c.l.b16 %v3734
    %v4622 = vunpack.c.h.b16 %v3734
    %v4623 = vunpack.c.l.b16 %v3735
    %v4624 = vunpack.c.h.b16 %v3735
    %v4625 = vunpack.c.l.b16 %v3736
    %v4626 = vunpack.c.h.b16 %v3736
    %v4627 = vunpack.c.l.b16 %v3737
    %v4628 = vunpack.c.h.b16 %v3737
    %v4629 = vunpack.c.l.b16 %v3738
    %v4630 = vunpack.c.h.b16 %v3738
    %v4631 = vunpack.c.l.b16 %v3739
    %v4632 = vunpack.c.h.b16 %v3739
    %v4633 = vunpack.c.l.b16 %v3740
    %v4634 = vunpack.c.h.b16 %v3740
    %v4635 = vunpack.c.l.b16 %v3741
    %v4636 = vunpack.c.h.b16 %v3741
    %v4637 = vunpack.c.l.b16 %v3742
    %v4638 = vunpack.c.h.b16 %v3742
    %v4639 = vunpack.c.l.b16 %v3743
    %v4640 = vunpack.c.h.b16 %v3743
    %v4641 = vunpack.c.l.b16 %v3744
    %v4642 = vunpack.c.h.b16 %v3744
    %v4643 = vunpack.c.l.b16 %v3745
    %v4644 = vunpack.c.h.b16 %v3745
    %v4645 = vunpack.c.l.b16 %v3746
    %v4646 = vunpack.c.h.b16 %v3746
    %v4647 = vunpack.c.l.b16 %v3747
    %v4648 = vunpack.c.h.b16 %v3747
    %v4649 = vunpack.c.l.b16 %v3748
    %v4650 = vunpack.c.h.b16 %v3748
    %v4651 = vunpack.c.l.b16 %v3749
    %v4652 = vunpack.c.h.b16 %v3749
    %v4653 = vunpack.c.l.b16 %v3750
    %v4654 = vunpack.c.h.b16 %v3750
    %v4655 = vunpack.c.l.b16 %v3751
    %v4656 = vunpack.c.h.b16 %v3751
    %v4657 = vunpack.c.l.b16 %v3752
    %v4658 = vunpack.c.h.b16 %v3752
    %v4659 = vunpack.c.l.b16 %v3753
    %v4660 = vunpack.c.h.b16 %v3753
    %v4661 = vunpack.c.l.b16 %v3754
    %v4662 = vunpack.c.h.b16 %v3754
    %v4663 = vunpack.c.l.b16 %v3755
    %v4664 = vunpack.c.h.b16 %v3755
    %v4665 = vunpack.c.l.b16 %v3756
    %v4666 = vunpack.c.h.b16 %v3756
    %v4667 = vunpack.c.l.b16 %v3757
    %v4668 = vunpack.c.h.b16 %v3757
    %v4669 = vunpack.c.l.b16 %v3758
    %v4670 = vunpack.c.h.b16 %v3758
    %v4671 = vunpack.c.l.b16 %v3759
    %v4672 = vunpack.c.h.b16 %v3759
    %v4673 = vunpack.c.l.b16 %v3760
    %v4674 = vunpack.c.h.b16 %v3760
    %v4675 = vunpack.c.l.b16 %v3761
    %v4676 = vunpack.c.h.b16 %v3761
    %v4677 = vunpack.c.l.b16 %v3762
    %v4678 = vunpack.c.h.b16 %v3762
    %v4679 = vunpack.c.l.b16 %v3763
    %v4680 = vunpack.c.h.b16 %v3763
    %v4681 = vunpack.c.l.b16 %v3764
    %v4682 = vunpack.c.h.b16 %v3764
    %v4683 = vunpack.c.l.b16 %v3765
    %v4684 = vunpack.c.h.b16 %v3765
    %v4685 = vunpack.c.l.b16 %v3766
    %v4686 = vunpack.c.h.b16 %v3766
    %v4687 = vunpack.c.l.b16 %v3767
    %v4688 = vunpack.c.h.b16 %v3767
    %v4689 = vunpack.c.l.b16 %v3768
    %v4690 = vunpack.c.h.b16 %v3768
    %v4691 = vunpack.c.l.b16 %v3769
    %v4692 = vunpack.c.h.b16 %v3769
    %v4693 = vunpack.c.l.b16 %v3770
    %v4694 = vunpack.c.h.b16 %v3770
    %v4695 = vunpack.c.l.b16 %v3771
    %v4696 = vunpack.c.h.b16 %v3771
    %v4697 = vunpack.c.l.b16 %v3772
    %v4698 = vunpack.c.h.b16 %v3772
    %v4699 = vunpack.c.l.b16 %v3773
    %v4700 = vunpack.c.h.b16 %v3773
    %v4701 = vunpack.c.l.b16 %v3774
    %v4702 = vunpack.c.h.b16 %v3774
    %v4703 = vunpack.c.l.b16 %v3775
    %v4704 = vunpack.c.h.b16 %v3775
    %v4705 = vunpack.c.l.b16 %v3776
    %v4706 = vunpack.c.h.b16 %v3776
    %v4707 = vunpack.c.l.b16 %v3777
    %v4708 = vunpack.c.h.b16 %v3777
    %v4709 = vunpack.c.l.b16 %v3778
    %v4710 = vunpack.c.h.b16 %v3778
    %v4711 = vunpack.c.l.b16 %v3779
    %v4712 = vunpack.c.h.b16 %v3779
    %v4713 = vunpack.c.l.b16 %v3780
    %v4714 = vunpack.c.h.b16 %v3780
    %v4715 = vunpack.c.l.b16 %v3781
    %v4716 = vunpack.c.h.b16 %v3781
    %v4717 = vunpack.c.l.b16 %v3782
    %v4718 = vunpack.c.h.b16 %v3782
    %v4719 = vpack.c.b16 %v4239, %v4207
    %v4720 = vpack.c.b16 %v4240, %v4208
    %v4721 = vpack.c.b16 %v4241, %v4209
    %v4722 = vpack.c.b16 %v4242, %v4210
    %v4723 = vpack.c.b16 %v4243, %v4211
    %v4724 = vpack.c.b16 %v4244, %v4212
    %v4725 = vpack.c.b16 %v4245, %v4213
    %v4726 = vpack.c.b16 %v4246, %v4214
    %v4727 = vpack.c.b16 %v4247, %v4215
    %v4728 = vpack.c.b16 %v4248, %v4216
    %v4729 = vpack.c.b16 %v4249, %v4217
    %v4730 = vpack.c.b16 %v4250, %v4218
    %v4731 = vpack.c.b16 %v4251, %v4219
    %v4732 = vpack.c.b16 %v4252, %v4220
    %v4733 = vpack.c.b16 %v4253, %v4221
    %v4734 = vpack.c.b16 %v4254, %v4222
    %v4735 = vpack.c.b16 %v4255, %v4223
    %v4736 = vpack.c.b16 %v4256, %v4224
    %v4737 = vpack.c.b16 %v4257, %v4225
    %v4738 = vpack.c.b16 %v4258, %v4226
    %v4739 = vpack.c.b16 %v4259, %v4227
    %v4740 = vpack.c.b16 %v4260, %v4228
    %v4741 = vpack.c.b16 %v4261, %v4229
    %v4742 = vpack.c.b16 %v4262, %v4230
    %v4743 = vpack.c.b16 %v4263, %v4231
    %v4744 = vpack.c.b16 %v4264, %v4232
    %v4745 = vpack.c.b16 %v4265, %v4233
    %v4746 = vpack.c.b16 %v4266, %v4234
    %v4747 = vpack.c.b16 %v4267, %v4235
    %v4748 = vpack.c.b16 %v4268, %v4236
    %v4749 = vpack.c.b16 %v4269, %v4237
    %v4750 = vpack.c.b16 %v4270, %v4238
    %v4751 = vpack.c.b16 %v4303, %v4271
    %v4752 = vpack.c.b16 %v4304, %v4272
    %v4753 = vpack.c.b16 %v4305, %v4273
    %v4754 = vpack.c.b16 %v4306, %v4274
    %v4755 = vpack.c.b16 %v4307, %v4275
    %v4756 = vpack.c.b16 %v4308, %v4276
    %v4757 = vpack.c.b16 %v4309, %v4277
    %v4758 = vpack.c.b16 %v4310, %v4278
    %v4759 = vpack.c.b16 %v4311, %v4279
    %v4760 = vpack.c.b16 %v4312, %v4280
    %v4761 = vpack.c.b16 %v4313, %v4281
    %v4762 = vpack.c.b16 %v4314, %v4282
    %v4763 = vpack.c.b16 %v4315, %v4283
    %v4764 = vpack.c.b16 %v4316, %v4284
    %v4765 = vpack.c.b16 %v4317, %v4285
    %v4766 = vpack.c.b16 %v4318, %v4286
    %v4767 = vpack.c.b16 %v4319, %v4287
    %v4768 = vpack.c.b16 %v4320, %v4288
    %v4769 = vpack.c.b16 %v4321, %v4289
    %v4770 = vpack.c.b16 %v4322, %v4290
    %v4771 = vpack.c.b16 %v4323, %v4291
    %v4772 = vpack.c.b16 %v4324, %v4292
    %v4773 = vpack.c.b16 %v4325, %v4293
    %v4774 = vpack.c.b16 %v4326, %v4294
    %v4775 = vpack.c.b16 %v4327, %v4295
    %v4776 = vpack.c.b16 %v4328, %v4296
    %v4777 = vpack.c.b16 %v4329, %v4297
    %v4778 = vpack.c.b16 %v4330, %v4298
    %v4779 = vpack.c.b16 %v4331, %v4299
    %v4780 = vpack.c.b16 %v4332, %v4300
    %v4781 = vpack.c.b16 %v4333, %v4301
    %v4782 = vpack.c.b16 %v4334, %v4302
    %v4783 = vpack.c.b16 %v4367, %v4335
    %v4784 = vpack.c.b16 %v4368, %v4336
    %v4785 = vpack.c.b16 %v4369, %v4337
    %v4786 = vpack.c.b16 %v4370, %v4338
    %v4787 = vpack.c.b16 %v4371, %v4339
    %v4788 = vpack.c.b16 %v4372, %v4340
    %v4789 = vpack.c.b16 %v4373, %v4341
    %v4790 = vpack.c.b16 %v4374, %v4342
    %v4791 = vpack.c.b16 %v4375, %v4343
    %v4792 = vpack.c.b16 %v4376, %v4344
    %v4793 = vpack.c.b16 %v4377, %v4345
    %v4794 = vpack.c.b16 %v4378, %v4346
    %v4795 = vpack.c.b16 %v4379, %v4347
    %v4796 = vpack.c.b16 %v4380, %v4348
    %v4797 = vpack.c.b16 %v4381, %v4349
    %v4798 = vpack.c.b16 %v4382, %v4350
    %v4799 = vpack.c.b16 %v4383, %v4351
    %v4800 = vpack.c.b16 %v4384, %v4352
    %v4801 = vpack.c.b16 %v4385, %v4353
    %v4802 = vpack.c.b16 %v4386, %v4354
    %v4803 = vpack.c.b16 %v4387, %v4355
    %v4804 = vpack.c.b16 %v4388, %v4356
    %v4805 = vpack.c.b16 %v4389, %v4357
    %v4806 = vpack.c.b16 %v4390, %v4358
    %v4807 = vpack.c.b16 %v4391, %v4359
    %v4808 = vpack.c.b16 %v4392, %v4360
    %v4809 = vpack.c.b16 %v4393, %v4361
    %v4810 = vpack.c.b16 %v4394, %v4362
    %v4811 = vpack.c.b16 %v4395, %v4363
    %v4812 = vpack.c.b16 %v4396, %v4364
    %v4813 = vpack.c.b16 %v4397, %v4365
    %v4814 = vpack.c.b16 %v4398, %v4366
    %v4815 = vpack.c.b16 %v4431, %v4399
    %v4816 = vpack.c.b16 %v4432, %v4400
    %v4817 = vpack.c.b16 %v4433, %v4401
    %v4818 = vpack.c.b16 %v4434, %v4402
    %v4819 = vpack.c.b16 %v4435, %v4403
    %v4820 = vpack.c.b16 %v4436, %v4404
    %v4821 = vpack.c.b16 %v4437, %v4405
    %v4822 = vpack.c.b16 %v4438, %v4406
    %v4823 = vpack.c.b16 %v4439, %v4407
    %v4824 = vpack.c.b16 %v4440, %v4408
    %v4825 = vpack.c.b16 %v4441, %v4409
    %v4826 = vpack.c.b16 %v4442, %v4410
    %v4827 = vpack.c.b16 %v4443, %v4411
    %v4828 = vpack.c.b16 %v4444, %v4412
    %v4829 = vpack.c.b16 %v4445, %v4413
    %v4830 = vpack.c.b16 %v4446, %v4414
    %v4831 = vpack.c.b16 %v4447, %v4415
    %v4832 = vpack.c.b16 %v4448, %v4416
    %v4833 = vpack.c.b16 %v4449, %v4417
    %v4834 = vpack.c.b16 %v4450, %v4418
    %v4835 = vpack.c.b16 %v4451, %v4419
    %v4836 = vpack.c.b16 %v4452, %v4420
    %v4837 = vpack.c.b16 %v4453, %v4421
    %v4838 = vpack.c.b16 %v4454, %v4422
    %v4839 = vpack.c.b16 %v4455, %v4423
    %v4840 = vpack.c.b16 %v4456, %v4424
    %v4841 = vpack.c.b16 %v4457, %v4425
    %v4842 = vpack.c.b16 %v4458, %v4426
    %v4843 = vpack.c.b16 %v4459, %v4427
    %v4844 = vpack.c.b16 %v4460, %v4428
    %v4845 = vpack.c.b16 %v4461, %v4429
    %v4846 = vpack.c.b16 %v4462, %v4430
    %v4847 = vpack.c.b16 %v4495, %v4463
    %v4848 = vpack.c.b16 %v4496, %v4464
    %v4849 = vpack.c.b16 %v4497, %v4465
    %v4850 = vpack.c.b16 %v4498, %v4466
    %v4851 = vpack.c.b16 %v4499, %v4467
    %v4852 = vpack.c.b16 %v4500, %v4468
    %v4853 = vpack.c.b16 %v4501, %v4469
    %v4854 = vpack.c.b16 %v4502, %v4470
    %v4855 = vpack.c.b16 %v4503, %v4471
    %v4856 = vpack.c.b16 %v4504, %v4472
    %v4857 = vpack.c.b16 %v4505, %v4473
    %v4858 = vpack.c.b16 %v4506, %v4474
    %v4859 = vpack.c.b16 %v4507, %v4475
    %v4860 = vpack.c.b16 %v4508, %v4476
    %v4861 = vpack.c.b16 %v4509, %v4477
    %v4862 = vpack.c.b16 %v4510, %v4478
    %v4863 = vpack.c.b16 %v4511, %v4479
    %v4864 = vpack.c.b16 %v4512, %v4480
    %v4865 = vpack.c.b16 %v4513, %v4481
    %v4866 = vpack.c.b16 %v4514, %v4482
    %v4867 = vpack.c.b16 %v4515, %v4483
    %v4868 = vpack.c.b16 %v4516, %v4484
    %v4869 = vpack.c.b16 %v4517, %v4485
    %v4870 = vpack.c.b16 %v4518, %v4486
    %v4871 = vpack.c.b16 %v4519, %v4487
    %v4872 = vpack.c.b16 %v4520, %v4488
    %v4873 = vpack.c.b16 %v4521, %v4489
    %v4874 = vpack.c.b16 %v4522, %v4490
    %v4875 = vpack.c.b16 %v4523, %v4491
    %v4876 = vpack.c.b16 %v4524, %v4492
    %v4877 = vpack.c.b16 %v4525, %v4493
    %v4878 = vpack.c.b16 %v4526, %v4494
    %v4879 = vpack.c.b16 %v4559, %v4527
    %v4880 = vpack.c.b16 %v4560, %v4528
    %v4881 = vpack.c.b16 %v4561, %v4529
    %v4882 = vpack.c.b16 %v4562, %v4530
    %v4883 = vpack.c.b16 %v4563, %v4531
    %v4884 = vpack.c.b16 %v4564, %v4532
    %v4885 = vpack.c.b16 %v4565, %v4533
    %v4886 = vpack.c.b16 %v4566, %v4534
    %v4887 = vpack.c.b16 %v4567, %v4535
    %v4888 = vpack.c.b16 %v4568, %v4536
    %v4889 = vpack.c.b16 %v4569, %v4537
    %v4890 = vpack.c.b16 %v4570, %v4538
    %v4891 = vpack.c.b16 %v4571, %v4539
    %v4892 = vpack.c.b16 %v4572, %v4540
    %v4893 = vpack.c.b16 %v4573, %v4541
    %v4894 = vpack.c.b16 %v4574, %v4542
    %v4895 = vpack.c.b16 %v4575, %v4543
    %v4896 = vpack.c.b16 %v4576, %v4544
    %v4897 = vpack.c.b16 %v4577, %v4545
    %v4898 = vpack.c.b16 %v4578, %v4546
    %v4899 = vpack.c.b16 %v4579, %v4547
    %v4900 = vpack.c.b16 %v4580, %v4548
    %v4901 = vpack.c.b16 %v4581, %v4549
    %v4902 = vpack.c.b16 %v4582, %v4550
    %v4903 = vpack.c.b16 %v4583, %v4551
    %v4904 = vpack.c.b16 %v4584, %v4552
    %v4905 = vpack.c.b16 %v4585, %v4553
    %v4906 = vpack.c.b16 %v4586, %v4554
    %v4907 = vpack.c.b16 %v4587, %v4555
    %v4908 = vpack.c.b16 %v4588, %v4556
    %v4909 = vpack.c.b16 %v4589, %v4557
    %v4910 = vpack.c.b16 %v4590, %v4558
    %v4911 = vpack.c.b16 %v4623, %v4591
    %v4912 = vpack.c.b16 %v4624, %v4592
    %v4913 = vpack.c.b16 %v4625, %v4593
    %v4914 = vpack.c.b16 %v4626, %v4594
    %v4915 = vpack.c.b16 %v4627, %v4595
    %v4916 = vpack.c.b16 %v4628, %v4596
    %v4917 = vpack.c.b16 %v4629, %v4597
    %v4918 = vpack.c.b16 %v4630, %v4598
    %v4919 = vpack.c.b16 %v4631, %v4599
    %v4920 = vpack.c.b16 %v4632, %v4600
    %v4921 = vpack.c.b16 %v4633, %v4601
    %v4922 = vpack.c.b16 %v4634, %v4602
    %v4923 = vpack.c.b16 %v4635, %v4603
    %v4924 = vpack.c.b16 %v4636, %v4604
    %v4925 = vpack.c.b16 %v4637, %v4605
    %v4926 = vpack.c.b16 %v4638, %v4606
    %v4927 = vpack.c.b16 %v4639, %v4607
    %v4928 = vpack.c.b16 %v4640, %v4608
    %v4929 = vpack.c.b16 %v4641, %v4609
    %v4930 = vpack.c.b16 %v4642, %v4610
    %v4931 = vpack.c.b16 %v4643, %v4611
    %v4932 = vpack.c.b16 %v4644, %v4612
    %v4933 = vpack.c.b16 %v4645, %v4613
    %v4934 = vpack.c.b16 %v4646, %v4614
    %v4935 = vpack.c.b16 %v4647, %v4615
    %v4936 = vpack.c.b16 %v4648, %v4616
    %v4937 = vpack.c.b16 %v4649, %v4617
    %v4938 = vpack.c.b16 %v4650, %v4618
    %v4939 = vpack.c.b16 %v4651, %v4619
    %v4940 = vpack.c.b16 %v4652, %v4620
    %v4941 = vpack.c.b16 %v4653, %v4621
    %v4942 = vpack.c.b16 %v4654, %v4622
    %v4943 = vpack.c.b16 %v4687, %v4655
    %v4944 = vpack.c.b16 %v4688, %v4656
    %v4945 = vpack.c.b16 %v4689, %v4657
    %v4946 = vpack.c.b16 %v4690, %v4658
    %v4947 = vpack.c.b16 %v4691, %v4659
    %v4948 = vpack.c.b16 %v4692, %v4660
    %v4949 = vpack.c.b16 %v4693, %v4661
    %v4950 = vpack.c.b16 %v4694, %v4662
    %v4951 = vpack.c.b16 %v4695, %v4663
    %v4952 = vpack.c.b16 %v4696, %v4664
    %v4953 = vpack.c.b16 %v4697, %v4665
    %v4954 = vpack.c.b16 %v4698, %v4666
    %v4955 = vpack.c.b16 %v4699, %v4667
    %v4956 = vpack.c.b16 %v4700, %v4668
    %v4957 = vpack.c.b16 %v4701, %v4669
    %v4958 = vpack.c.b16 %v4702, %v4670
    %v4959 = vpack.c.b16 %v4703, %v4671
    %v4960 = vpack.c.b16 %v4704, %v4672
    %v4961 = vpack.c.b16 %v4705, %v4673
    %v4962 = vpack.c.b16 %v4706, %v4674
    %v4963 = vpack.c.b16 %v4707, %v4675
    %v4964 = vpack.c.b16 %v4708, %v4676
    %v4965 = vpack.c.b16 %v4709, %v4677
    %v4966 = vpack.c.b16 %v4710, %v4678
    %v4967 = vpack.c.b16 %v4711, %v4679
    %v4968 = vpack.c.b16 %v4712, %v4680
    %v4969 = vpack.c.b16 %v4713, %v4681
    %v4970 = vpack.c.b16 %v4714, %v4682
    %v4971 = vpack.c.b16 %v4715, %v4683
    %v4972 = vpack.c.b16 %v4716, %v4684
    %v4973 = vpack.c.b16 %v4717, %v4685
    %v4974 = vpack.c.b16 %v4718, %v4686
    %5231 = vmatprep.subr.bf16.mxu0 %v4720
    %5232 = vmatpush1.bf16.msra.mxu0 %v4719
    %5233 = vmatprep.subr.bf16.mxu0 %v4752
    %5234 = vmatpush1.bf16.msra.mxu0 %v4751
    %5235 = vmatprep.subr.bf16.mxu0 %v4784
    %5236 = vmatpush1.bf16.msra.mxu0 %v4783
    %5237 = vmatprep.subr.bf16.mxu0 %v4816
    %5238 = vmatpush1.bf16.msra.mxu0 %v4815
    %5239 = vmatprep.subr.bf16.mxu0 %v4848
    %5240 = vmatpush1.bf16.msra.mxu0 %v4847
    %5241 = vmatprep.subr.bf16.mxu0 %v4880
    %5242 = vmatpush1.bf16.msra.mxu0 %v4879
    %5243 = vmatprep.subr.bf16.mxu0 %v4912
    %5244 = vmatpush1.bf16.msra.mxu0 %v4911
    %5245 = vmatprep.subr.bf16.mxu0 %v4944
    %5246 = vmatpush1.bf16.msra.mxu0 %v4943
    %5247 = vmatprep.subr.bf16.mxu0 0
    %5248 = vmatpush1.bf16.msra.mxu0 0
    %5249 = vmatprep.subr.bf16.mxu0 0
    %5250 = vmatpush1.bf16.msra.mxu0 0
    %5251 = vmatprep.subr.bf16.mxu0 0
    %5252 = vmatpush1.bf16.msra.mxu0 0
    %5253 = vmatprep.subr.bf16.mxu0 0
    %5254 = vmatpush1.bf16.msra.mxu0 0
    %5255 = vmatprep.subr.bf16.mxu0 0
    %5256 = vmatpush1.bf16.msra.mxu0 0
    %5257 = vmatprep.subr.bf16.mxu0 0
    %5258 = vmatpush1.bf16.msra.mxu0 0
    %5259 = vmatprep.subr.bf16.mxu0 0
    %5260 = vmatpush1.bf16.msra.mxu0 0
    %5261 = vmatprep.subr.bf16.mxu0 0
    %5262 = vmatpush1.bf16.msra.mxu0 0
    %5263 = vmatprep.mubr.bf16.mxu0 0
    %5264 = vmatmul.mubr.bf16.gmra.mrb[0].mxu0 %v3526
    %v5265 = vpop.f32.mrb[0].mxu0
    %v5266 = vadd.f32 %v3794, %v5265
    %v5267 = vpop.f32.mrb[0].mxu0
    %v5268 = vadd.f32 %v3798, %v5267
    %v5269 = vpop.f32.mrb[0].mxu0
    %v5270 = vpop.f32.mrb[0].mxu0
    %5271 = vdwg.mxu0
    %5272 = vmatprep.subr.bf16.mxu0 %v4722
    %5273 = vmatpush1.bf16.msra.mxu0 %v4721
    %5274 = vmatprep.subr.bf16.mxu0 %v4754
    %5275 = vmatpush1.bf16.msra.mxu0 %v4753
    %5276 = vmatprep.subr.bf16.mxu0 %v4786
    %5277 = vmatpush1.bf16.msra.mxu0 %v4785
    %5278 = vmatprep.subr.bf16.mxu0 %v4818
    %5279 = vmatpush1.bf16.msra.mxu0 %v4817
    %5280 = vmatprep.subr.bf16.mxu0 %v4850
    %5281 = vmatpush1.bf16.msra.mxu0 %v4849
    %5282 = vmatprep.subr.bf16.mxu0 %v4882
    %5283 = vmatpush1.bf16.msra.mxu0 %v4881
    %5284 = vmatprep.subr.bf16.mxu0 %v4914
    %5285 = vmatpush1.bf16.msra.mxu0 %v4913
    %5286 = vmatprep.subr.bf16.mxu0 %v4946
    %5287 = vmatpush1.bf16.msra.mxu0 %v4945
    %5288 = vmatprep.subr.bf16.mxu0 0
    %5289 = vmatpush1.bf16.msra.mxu0 0
    %5290 = vmatprep.subr.bf16.mxu0 0
    %5291 = vmatpush1.bf16.msra.mxu0 0
    %5292 = vmatprep.subr.bf16.mxu0 0
    %5293 = vmatpush1.bf16.msra.mxu0 0
    %5294 = vmatprep.subr.bf16.mxu0 0
    %5295 = vmatpush1.bf16.msra.mxu0 0
    %5296 = vmatprep.subr.bf16.mxu0 0
    %5297 = vmatpush1.bf16.msra.mxu0 0
    %5298 = vmatprep.subr.bf16.mxu0 0
    %5299 = vmatpush1.bf16.msra.mxu0 0
    %5300 = vmatprep.subr.bf16.mxu0 0
    %5301 = vmatpush1.bf16.msra.mxu0 0
    %5302 = vmatprep.subr.bf16.mxu0 0
    %5303 = vmatpush1.bf16.msra.mxu0 0
    %5304 = vmatprep.mubr.bf16.mxu0 0
    %5305 = vmatmul.mubr.bf16.gmra.mrb[0].mxu0 %v3526
    %v5306 = vpop.f32.mrb[0].mxu0
    %v5307 = vadd.f32 %v3802, %v5306
    %v5308 = vpop.f32.mrb[0].mxu0
    %v5309 = vadd.f32 %v3806, %v5308
    %v5310 = vpop.f32.mrb[0].mxu0
    %v5311 = vpop.f32.mrb[0].mxu0
    %5312 = vdwg.mxu0
    %5313 = vmatprep.subr.bf16.mxu0 %v4724
    %5314 = vmatpush1.bf16.msra.mxu0 %v4723
    %5315 = vmatprep.subr.bf16.mxu0 %v4756
    %5316 = vmatpush1.bf16.msra.mxu0 %v4755
    %5317 = vmatprep.subr.bf16.mxu0 %v4788
    %5318 = vmatpush1.bf16.msra.mxu0 %v4787
    %5319 = vmatprep.subr.bf16.mxu0 %v4820
    %5320 = vmatpush1.bf16.msra.mxu0 %v4819
    %5321 = vmatprep.subr.bf16.mxu0 %v4852
    %5322 = vmatpush1.bf16.msra.mxu0 %v4851
    %5323 = vmatprep.subr.bf16.mxu0 %v4884
    %5324 = vmatpush1.bf16.msra.mxu0 %v4883
    %5325 = vmatprep.subr.bf16.mxu0 %v4916
    %5326 = vmatpush1.bf16.msra.mxu0 %v4915
    %5327 = vmatprep.subr.bf16.mxu0 %v4948
    %5328 = vmatpush1.bf16.msra.mxu0 %v4947
    %5329 = vmatprep.subr.bf16.mxu0 0
    %5330 = vmatpush1.bf16.msra.mxu0 0
    %5331 = vmatprep.subr.bf16.mxu0 0
    %5332 = vmatpush1.bf16.msra.mxu0 0
    %5333 = vmatprep.subr.bf16.mxu0 0
    %5334 = vmatpush1.bf16.msra.mxu0 0
    %5335 = vmatprep.subr.bf16.mxu0 0
    %5336 = vmatpush1.bf16.msra.mxu0 0
    %5337 = vmatprep.subr.bf16.mxu0 0
    %5338 = vmatpush1.bf16.msra.mxu0 0
    %5339 = vmatprep.subr.bf16.mxu0 0
    %5340 = vmatpush1.bf16.msra.mxu0 0
    %5341 = vmatprep.subr.bf16.mxu0 0
    %5342 = vmatpush1.bf16.msra.mxu0 0
    %5343 = vmatprep.subr.bf16.mxu0 0
    %5344 = vmatpush1.bf16.msra.mxu0 0
    %5345 = vmatprep.mubr.bf16.mxu0 0
    %5346 = vmatmul.mubr.bf16.gmra.mrb[0].mxu0 %v3526
    %v5347 = vpop.f32.mrb[0].mxu0
    %v5348 = vadd.f32 %v3810, %v5347
    %v5349 = vpop.f32.mrb[0].mxu0
    %v5350 = vadd.f32 %v3814, %v5349
    %v5351 = vpop.f32.mrb[0].mxu0
    %v5352 = vpop.f32.mrb[0].mxu0
    %5353 = vdwg.mxu0
    %5354 = vmatprep.subr.bf16.mxu0 %v4726
    %5355 = vmatpush1.bf16.msra.mxu0 %v4725
    %5356 = vmatprep.subr.bf16.mxu0 %v4758
    %5357 = vmatpush1.bf16.msra.mxu0 %v4757
    %5358 = vmatprep.subr.bf16.mxu0 %v4790
    %5359 = vmatpush1.bf16.msra.mxu0 %v4789
    %5360 = vmatprep.subr.bf16.mxu0 %v4822
    %5361 = vmatpush1.bf16.msra.mxu0 %v4821
    %5362 = vmatprep.subr.bf16.mxu0 %v4854
    %5363 = vmatpush1.bf16.msra.mxu0 %v4853
    %5364 = vmatprep.subr.bf16.mxu0 %v4886
    %5365 = vmatpush1.bf16.msra.mxu0 %v4885
    %5366 = vmatprep.subr.bf16.mxu0 %v4918
    %5367 = vmatpush1.bf16.msra.mxu0 %v4917
    %5368 = vmatprep.subr.bf16.mxu0 %v4950
    %5369 = vmatpush1.bf16.msra.mxu0 %v4949
    %5370 = vmatprep.subr.bf16.mxu0 0
    %5371 = vmatpush1.bf16.msra.mxu0 0
    %5372 = vmatprep.subr.bf16.mxu0 0
    %5373 = vmatpush1.bf16.msra.mxu0 0
    %5374 = vmatprep.subr.bf16.mxu0 0
    %5375 = vmatpush1.bf16.msra.mxu0 0
    %5376 = vmatprep.subr.bf16.mxu0 0
    %5377 = vmatpush1.bf16.msra.mxu0 0
    %5378 = vmatprep.subr.bf16.mxu0 0
    %5379 = vmatpush1.bf16.msra.mxu0 0
    %5380 = vmatprep.subr.bf16.mxu0 0
    %5381 = vmatpush1.bf16.msra.mxu0 0
    %5382 = vmatprep.subr.bf16.mxu0 0
    %5383 = vmatpush1.bf16.msra.mxu0 0
    %5384 = vmatprep.subr.bf16.mxu0 0
    %5385 = vmatpush1.bf16.msra.mxu0 0
    %5386 = vmatprep.mubr.bf16.mxu0 0
    %5387 = vmatmul.mubr.bf16.gmra.mrb[0].mxu0 %v3526
    %v5388 = vpop.f32.mrb[0].mxu0
    %v5389 = vadd.f32 %v3818, %v5388
    %v5390 = vpop.f32.mrb[0].mxu0
    %v5391 = vadd.f32 %v3822, %v5390
    %v5392 = vpop.f32.mrb[0].mxu0
    %v5393 = vpop.f32.mrb[0].mxu0
    %5394 = vdwg.mxu0
    %5395 = vmatprep.subr.bf16.mxu0 %v4728
    %5396 = vmatpush1.bf16.msra.mxu0 %v4727
    %5397 = vmatprep.subr.bf16.mxu0 %v4760
    %5398 = vmatpush1.bf16.msra.mxu0 %v4759
    %5399 = vmatprep.subr.bf16.mxu0 %v4792
    %5400 = vmatpush1.bf16.msra.mxu0 %v4791
    %5401 = vmatprep.subr.bf16.mxu0 %v4824
    %5402 = vmatpush1.bf16.msra.mxu0 %v4823
    %5403 = vmatprep.subr.bf16.mxu0 %v4856
    %5404 = vmatpush1.bf16.msra.mxu0 %v4855
    %5405 = vmatprep.subr.bf16.mxu0 %v4888
    %5406 = vmatpush1.bf16.msra.mxu0 %v4887
    %5407 = vmatprep.subr.bf16.mxu0 %v4920
    %5408 = vmatpush1.bf16.msra.mxu0 %v4919
    %5409 = vmatprep.subr.bf16.mxu0 %v4952
    %5410 = vmatpush1.bf16.msra.mxu0 %v4951
    %5411 = vmatprep.subr.bf16.mxu0 0
    %5412 = vmatpush1.bf16.msra.mxu0 0
    %5413 = vmatprep.subr.bf16.mxu0 0
    %5414 = vmatpush1.bf16.msra.mxu0 0
    %5415 = vmatprep.subr.bf16.mxu0 0
    %5416 = vmatpush1.bf16.msra.mxu0 0
    %5417 = vmatprep.subr.bf16.mxu0 0
    %5418 = vmatpush1.bf16.msra.mxu0 0
    %5419 = vmatprep.subr.bf16.mxu0 0
    %5420 = vmatpush1.bf16.msra.mxu0 0
    %5421 = vmatprep.subr.bf16.mxu0 0
    %5422 = vmatpush1.bf16.msra.mxu0 0
    %5423 = vmatprep.subr.bf16.mxu0 0
    %5424 = vmatpush1.bf16.msra.mxu0 0
    %5425 = vmatprep.subr.bf16.mxu0 0
    %5426 = vmatpush1.bf16.msra.mxu0 0
    %5427 = vmatprep.mubr.bf16.mxu0 0
    %5428 = vmatmul.mubr.bf16.gmra.mrb[0].mxu0 %v3526
    %v5429 = vpop.f32.mrb[0].mxu0
    %v5430 = vadd.f32 %v3826, %v5429
    %v5431 = vpop.f32.mrb[0].mxu0
    %v5432 = vadd.f32 %v3830, %v5431
    %v5433 = vpop.f32.mrb[0].mxu0
    %v5434 = vpop.f32.mrb[0].mxu0
    %5435 = vdwg.mxu0
    %5436 = vmatprep.subr.bf16.mxu0 %v4730
    %5437 = vmatpush1.bf16.msra.mxu0 %v4729
    %5438 = vmatprep.subr.bf16.mxu0 %v4762
    %5439 = vmatpush1.bf16.msra.mxu0 %v4761
    %5440 = vmatprep.subr.bf16.mxu0 %v4794
    %5441 = vmatpush1.bf16.msra.mxu0 %v4793
    %5442 = vmatprep.subr.bf16.mxu0 %v4826
    %5443 = vmatpush1.bf16.msra.mxu0 %v4825
    %5444 = vmatprep.subr.bf16.mxu0 %v4858
    %5445 = vmatpush1.bf16.msra.mxu0 %v4857
    %5446 = vmatprep.subr.bf16.mxu0 %v4890
    %5447 = vmatpush1.bf16.msra.mxu0 %v4889
    %5448 = vmatprep.subr.bf16.mxu0 %v4922
    %5449 = vmatpush1.bf16.msra.mxu0 %v4921
    %5450 = vmatprep.subr.bf16.mxu0 %v4954
    %5451 = vmatpush1.bf16.msra.mxu0 %v4953
    %5452 = vmatprep.subr.bf16.mxu0 0
    %5453 = vmatpush1.bf16.msra.mxu0 0
    %5454 = vmatprep.subr.bf16.mxu0 0
    %5455 = vmatpush1.bf16.msra.mxu0 0
    %5456 = vmatprep.subr.bf16.mxu0 0
    %5457 = vmatpush1.bf16.msra.mxu0 0
    %5458 = vmatprep.subr.bf16.mxu0 0
    %5459 = vmatpush1.bf16.msra.mxu0 0
    %5460 = vmatprep.subr.bf16.mxu0 0
    %5461 = vmatpush1.bf16.msra.mxu0 0
    %5462 = vmatprep.subr.bf16.mxu0 0
    %5463 = vmatpush1.bf16.msra.mxu0 0
    %5464 = vmatprep.subr.bf16.mxu0 0
    %5465 = vmatpush1.bf16.msra.mxu0 0
    %5466 = vmatprep.subr.bf16.mxu0 0
    %5467 = vmatpush1.bf16.msra.mxu0 0
    %5468 = vmatprep.mubr.bf16.mxu0 0
    %5469 = vmatmul.mubr.bf16.gmra.mrb[0].mxu0 %v3526
    %v5470 = vpop.f32.mrb[0].mxu0
    %v5471 = vadd.f32 %v3834, %v5470
    %v5472 = vpop.f32.mrb[0].mxu0
    %v5473 = vadd.f32 %v3838, %v5472
    %v5474 = vpop.f32.mrb[0].mxu0
    %v5475 = vpop.f32.mrb[0].mxu0
    %5476 = vdwg.mxu0
    %5477 = vmatprep.subr.bf16.mxu0 %v4732
    %5478 = vmatpush1.bf16.msra.mxu0 %v4731
    %5479 = vmatprep.subr.bf16.mxu0 %v4764
    %5480 = vmatpush1.bf16.msra.mxu0 %v4763
    %5481 = vmatprep.subr.bf16.mxu0 %v4796
    %5482 = vmatpush1.bf16.msra.mxu0 %v4795
    %5483 = vmatprep.subr.bf16.mxu0 %v4828
    %5484 = vmatpush1.bf16.msra.mxu0 %v4827
    %5485 = vmatprep.subr.bf16.mxu0 %v4860
    %5486 = vmatpush1.bf16.msra.mxu0 %v4859
    %5487 = vmatprep.subr.bf16.mxu0 %v4892
    %5488 = vmatpush1.bf16.msra.mxu0 %v4891
    %5489 = vmatprep.subr.bf16.mxu0 %v4924
    %5490 = vmatpush1.bf16.msra.mxu0 %v4923
    %5491 = vmatprep.subr.bf16.mxu0 %v4956
    %5492 = vmatpush1.bf16.msra.mxu0 %v4955
    %5493 = vmatprep.subr.bf16.mxu0 0
    %5494 = vmatpush1.bf16.msra.mxu0 0
    %5495 = vmatprep.subr.bf16.mxu0 0
    %5496 = vmatpush1.bf16.msra.mxu0 0
    %5497 = vmatprep.subr.bf16.mxu0 0
    %5498 = vmatpush1.bf16.msra.mxu0 0
    %5499 = vmatprep.subr.bf16.mxu0 0
    %5500 = vmatpush1.bf16.msra.mxu0 0
    %5501 = vmatprep.subr.bf16.mxu0 0
    %5502 = vmatpush1.bf16.msra.mxu0 0
    %5503 = vmatprep.subr.bf16.mxu0 0
    %5504 = vmatpush1.bf16.msra.mxu0 0
    %5505 = vmatprep.subr.bf16.mxu0 0
    %5506 = vmatpush1.bf16.msra.mxu0 0
    %5507 = vmatprep.subr.bf16.mxu0 0
    %5508 = vmatpush1.bf16.msra.mxu0 0
    %5509 = vmatprep.mubr.bf16.mxu0 0
    %5510 = vmatmul.mubr.bf16.gmra.mrb[0].mxu0 %v3526
    %v5511 = vpop.f32.mrb[0].mxu0
    %v5512 = vadd.f32 %v3842, %v5511
    %v5513 = vpop.f32.mrb[0].mxu0
    %v5514 = vadd.f32 %v3846, %v5513
    %v5515 = vpop.f32.mrb[0].mxu0
    %v5516 = vpop.f32.mrb[0].mxu0
    %5517 = vdwg.mxu0
    %5518 = vmatprep.subr.bf16.mxu0 %v4734
    %5519 = vmatpush1.bf16.msra.mxu0 %v4733
    %5520 = vmatprep.subr.bf16.mxu0 %v4766
    %5521 = vmatpush1.bf16.msra.mxu0 %v4765
    %5522 = vmatprep.subr.bf16.mxu0 %v4798
    %5523 = vmatpush1.bf16.msra.mxu0 %v4797
    %5524 = vmatprep.subr.bf16.mxu0 %v4830
    %5525 = vmatpush1.bf16.msra.mxu0 %v4829
    %5526 = vmatprep.subr.bf16.mxu0 %v4862
    %5527 = vmatpush1.bf16.msra.mxu0 %v4861
    %5528 = vmatprep.subr.bf16.mxu0 %v4894
    %5529 = vmatpush1.bf16.msra.mxu0 %v4893
    %5530 = vmatprep.subr.bf16.mxu0 %v4926
    %5531 = vmatpush1.bf16.msra.mxu0 %v4925
    %5532 = vmatprep.subr.bf16.mxu0 %v4958
    %5533 = vmatpush1.bf16.msra.mxu0 %v4957
    %5534 = vmatprep.subr.bf16.mxu0 0
    %5535 = vmatpush1.bf16.msra.mxu0 0
    %5536 = vmatprep.subr.bf16.mxu0 0
    %5537 = vmatpush1.bf16.msra.mxu0 0
    %5538 = vmatprep.subr.bf16.mxu0 0
    %5539 = vmatpush1.bf16.msra.mxu0 0
    %5540 = vmatprep.subr.bf16.mxu0 0
    %5541 = vmatpush1.bf16.msra.mxu0 0
    %5542 = vmatprep.subr.bf16.mxu0 0
    %5543 = vmatpush1.bf16.msra.mxu0 0
    %5544 = vmatprep.subr.bf16.mxu0 0
    %5545 = vmatpush1.bf16.msra.mxu0 0
    %5546 = vmatprep.subr.bf16.mxu0 0
    %5547 = vmatpush1.bf16.msra.mxu0 0
    %5548 = vmatprep.subr.bf16.mxu0 0
    %5549 = vmatpush1.bf16.msra.mxu0 0
    %5550 = vmatprep.mubr.bf16.mxu0 0
    %5551 = vmatmul.mubr.bf16.gmra.mrb[0].mxu0 %v3526
    %v5552 = vpop.f32.mrb[0].mxu0
    %v5553 = vadd.f32 %v3850, %v5552
    %v5554 = vpop.f32.mrb[0].mxu0
    %v5555 = vadd.f32 %v3854, %v5554
    %v5556 = vpop.f32.mrb[0].mxu0
    %v5557 = vpop.f32.mrb[0].mxu0
    %5558 = vdwg.mxu0
    %5559 = vmatprep.subr.bf16.mxu0 %v4736
    %5560 = vmatpush1.bf16.msra.mxu0 %v4735
    %5561 = vmatprep.subr.bf16.mxu0 %v4768
    %5562 = vmatpush1.bf16.msra.mxu0 %v4767
    %5563 = vmatprep.subr.bf16.mxu0 %v4800
    %5564 = vmatpush1.bf16.msra.mxu0 %v4799
    %5565 = vmatprep.subr.bf16.mxu0 %v4832
    %5566 = vmatpush1.bf16.msra.mxu0 %v4831
    %5567 = vmatprep.subr.bf16.mxu0 %v4864
    %5568 = vmatpush1.bf16.msra.mxu0 %v4863
    %5569 = vmatprep.subr.bf16.mxu0 %v4896
    %5570 = vmatpush1.bf16.msra.mxu0 %v4895
    %5571 = vmatprep.subr.bf16.mxu0 %v4928
    %5572 = vmatpush1.bf16.msra.mxu0 %v4927
    %5573 = vmatprep.subr.bf16.mxu0 %v4960
    %5574 = vmatpush1.bf16.msra.mxu0 %v4959
    %5575 = vmatprep.subr.bf16.mxu0 0
    %5576 = vmatpush1.bf16.msra.mxu0 0
    %5577 = vmatprep.subr.bf16.mxu0 0
    %5578 = vmatpush1.bf16.msra.mxu0 0
    %5579 = vmatprep.subr.bf16.mxu0 0
    %5580 = vmatpush1.bf16.msra.mxu0 0
    %5581 = vmatprep.subr.bf16.mxu0 0
    %5582 = vmatpush1.bf16.msra.mxu0 0
    %5583 = vmatprep.subr.bf16.mxu0 0
    %5584 = vmatpush1.bf16.msra.mxu0 0
    %5585 = vmatprep.subr.bf16.mxu0 0
    %5586 = vmatpush1.bf16.msra.mxu0 0
    %5587 = vmatprep.subr.bf16.mxu0 0
    %5588 = vmatpush1.bf16.msra.mxu0 0
    %5589 = vmatprep.subr.bf16.mxu0 0
    %5590 = vmatpush1.bf16.msra.mxu0 0
    %5591 = vmatprep.mubr.bf16.mxu0 0
    %5592 = vmatmul.mubr.bf16.gmra.mrb[0].mxu0 %v3526
    %v5593 = vpop.f32.mrb[0].mxu0
    %v5594 = vadd.f32 %v3858, %v5593
    %v5595 = vpop.f32.mrb[0].mxu0
    %v5596 = vadd.f32 %v3862, %v5595
    %v5597 = vpop.f32.mrb[0].mxu0
    %v5598 = vpop.f32.mrb[0].mxu0
    %5599 = vdwg.mxu0
    %5600 = vmatprep.subr.bf16.mxu0 %v4738
    %5601 = vmatpush1.bf16.msra.mxu0 %v4737
    %5602 = vmatprep.subr.bf16.mxu0 %v4770
    %5603 = vmatpush1.bf16.msra.mxu0 %v4769
    %5604 = vmatprep.subr.bf16.mxu0 %v4802
    %5605 = vmatpush1.bf16.msra.mxu0 %v4801
    %5606 = vmatprep.subr.bf16.mxu0 %v4834
    %5607 = vmatpush1.bf16.msra.mxu0 %v4833
    %5608 = vmatprep.subr.bf16.mxu0 %v4866
    %5609 = vmatpush1.bf16.msra.mxu0 %v4865
    %5610 = vmatprep.subr.bf16.mxu0 %v4898
    %5611 = vmatpush1.bf16.msra.mxu0 %v4897
    %5612 = vmatprep.subr.bf16.mxu0 %v4930
    %5613 = vmatpush1.bf16.msra.mxu0 %v4929
    %5614 = vmatprep.subr.bf16.mxu0 %v4962
    %5615 = vmatpush1.bf16.msra.mxu0 %v4961
    %5616 = vmatprep.subr.bf16.mxu0 0
    %5617 = vmatpush1.bf16.msra.mxu0 0
    %5618 = vmatprep.subr.bf16.mxu0 0
    %5619 = vmatpush1.bf16.msra.mxu0 0
    %5620 = vmatprep.subr.bf16.mxu0 0
    %5621 = vmatpush1.bf16.msra.mxu0 0
    %5622 = vmatprep.subr.bf16.mxu0 0
    %5623 = vmatpush1.bf16.msra.mxu0 0
    %5624 = vmatprep.subr.bf16.mxu0 0
    %5625 = vmatpush1.bf16.msra.mxu0 0
    %5626 = vmatprep.subr.bf16.mxu0 0
    %5627 = vmatpush1.bf16.msra.mxu0 0
    %5628 = vmatprep.subr.bf16.mxu0 0
    %5629 = vmatpush1.bf16.msra.mxu0 0
    %5630 = vmatprep.subr.bf16.mxu0 0
    %5631 = vmatpush1.bf16.msra.mxu0 0
    %5632 = vmatprep.mubr.bf16.mxu0 0
    %5633 = vmatmul.mubr.bf16.gmra.mrb[0].mxu0 %v3526
    %v5634 = vpop.f32.mrb[0].mxu0
    %v5635 = vadd.f32 %v3866, %v5634
    %v5636 = vpop.f32.mrb[0].mxu0
    %v5637 = vadd.f32 %v3870, %v5636
    %v5638 = vpop.f32.mrb[0].mxu0
    %v5639 = vpop.f32.mrb[0].mxu0
    %5640 = vdwg.mxu0
    %5641 = vmatprep.subr.bf16.mxu0 %v4740
    %5642 = vmatpush1.bf16.msra.mxu0 %v4739
    %5643 = vmatprep.subr.bf16.mxu0 %v4772
    %5644 = vmatpush1.bf16.msra.mxu0 %v4771
    %5645 = vmatprep.subr.bf16.mxu0 %v4804
    %5646 = vmatpush1.bf16.msra.mxu0 %v4803
    %5647 = vmatprep.subr.bf16.mxu0 %v4836
    %5648 = vmatpush1.bf16.msra.mxu0 %v4835
    %5649 = vmatprep.subr.bf16.mxu0 %v4868
    %5650 = vmatpush1.bf16.msra.mxu0 %v4867
    %5651 = vmatprep.subr.bf16.mxu0 %v4900
    %5652 = vmatpush1.bf16.msra.mxu0 %v4899
    %5653 = vmatprep.subr.bf16.mxu0 %v4932
    %5654 = vmatpush1.bf16.msra.mxu0 %v4931
    %5655 = vmatprep.subr.bf16.mxu0 %v4964
    %5656 = vmatpush1.bf16.msra.mxu0 %v4963
    %5657 = vmatprep.subr.bf16.mxu0 0
    %5658 = vmatpush1.bf16.msra.mxu0 0
    %5659 = vmatprep.subr.bf16.mxu0 0
    %5660 = vmatpush1.bf16.msra.mxu0 0
    %5661 = vmatprep.subr.bf16.mxu0 0
    %5662 = vmatpush1.bf16.msra.mxu0 0
    %5663 = vmatprep.subr.bf16.mxu0 0
    %5664 = vmatpush1.bf16.msra.mxu0 0
    %5665 = vmatprep.subr.bf16.mxu0 0
    %5666 = vmatpush1.bf16.msra.mxu0 0
    %5667 = vmatprep.subr.bf16.mxu0 0
    %5668 = vmatpush1.bf16.msra.mxu0 0
    %5669 = vmatprep.subr.bf16.mxu0 0
    %5670 = vmatpush1.bf16.msra.mxu0 0
    %5671 = vmatprep.subr.bf16.mxu0 0
    %5672 = vmatpush1.bf16.msra.mxu0 0
    %5673 = vmatprep.mubr.bf16.mxu0 0
    %5674 = vmatmul.mubr.bf16.gmra.mrb[0].mxu0 %v3526
    %v5675 = vpop.f32.mrb[0].mxu0
    %v5676 = vadd.f32 %v3874, %v5675
    %v5677 = vpop.f32.mrb[0].mxu0
    %v5678 = vadd.f32 %v3878, %v5677
    %v5679 = vpop.f32.mrb[0].mxu0
    %v5680 = vpop.f32.mrb[0].mxu0
    %5681 = vdwg.mxu0
    %5682 = vmatprep.subr.bf16.mxu0 %v4742
    %5683 = vmatpush1.bf16.msra.mxu0 %v4741
    %5684 = vmatprep.subr.bf16.mxu0 %v4774
    %5685 = vmatpush1.bf16.msra.mxu0 %v4773
    %5686 = vmatprep.subr.bf16.mxu0 %v4806
    %5687 = vmatpush1.bf16.msra.mxu0 %v4805
    %5688 = vmatprep.subr.bf16.mxu0 %v4838
    %5689 = vmatpush1.bf16.msra.mxu0 %v4837
    %5690 = vmatprep.subr.bf16.mxu0 %v4870
    %5691 = vmatpush1.bf16.msra.mxu0 %v4869
    %5692 = vmatprep.subr.bf16.mxu0 %v4902
    %5693 = vmatpush1.bf16.msra.mxu0 %v4901
    %5694 = vmatprep.subr.bf16.mxu0 %v4934
    %5695 = vmatpush1.bf16.msra.mxu0 %v4933
    %5696 = vmatprep.subr.bf16.mxu0 %v4966
    %5697 = vmatpush1.bf16.msra.mxu0 %v4965
    %5698 = vmatprep.subr.bf16.mxu0 0
    %5699 = vmatpush1.bf16.msra.mxu0 0
    %5700 = vmatprep.subr.bf16.mxu0 0
    %5701 = vmatpush1.bf16.msra.mxu0 0
    %5702 = vmatprep.subr.bf16.mxu0 0
    %5703 = vmatpush1.bf16.msra.mxu0 0
    %5704 = vmatprep.subr.bf16.mxu0 0
    %5705 = vmatpush1.bf16.msra.mxu0 0
    %5706 = vmatprep.subr.bf16.mxu0 0
    %5707 = vmatpush1.bf16.msra.mxu0 0
    %5708 = vmatprep.subr.bf16.mxu0 0
    %5709 = vmatpush1.bf16.msra.mxu0 0
    %5710 = vmatprep.subr.bf16.mxu0 0
    %5711 = vmatpush1.bf16.msra.mxu0 0
    %5712 = vmatprep.subr.bf16.mxu0 0
    %5713 = vmatpush1.bf16.msra.mxu0 0
    %5714 = vmatprep.mubr.bf16.mxu0 0
    %5715 = vmatmul.mubr.bf16.gmra.mrb[0].mxu0 %v3526
    %v5716 = vpop.f32.mrb[0].mxu0
    %v5717 = vadd.f32 %v3882, %v5716
    %v5718 = vpop.f32.mrb[0].mxu0
    %v5719 = vadd.f32 %v3886, %v5718
    %v5720 = vpop.f32.mrb[0].mxu0
    %v5721 = vpop.f32.mrb[0].mxu0
    %5722 = vdwg.mxu0
    %5723 = vmatprep.subr.bf16.mxu0 %v4744
    %5724 = vmatpush1.bf16.msra.mxu0 %v4743
    %5725 = vmatprep.subr.bf16.mxu0 %v4776
    %5726 = vmatpush1.bf16.msra.mxu0 %v4775
    %5727 = vmatprep.subr.bf16.mxu0 %v4808
    %5728 = vmatpush1.bf16.msra.mxu0 %v4807
    %5729 = vmatprep.subr.bf16.mxu0 %v4840
    %5730 = vmatpush1.bf16.msra.mxu0 %v4839
    %5731 = vmatprep.subr.bf16.mxu0 %v4872
    %5732 = vmatpush1.bf16.msra.mxu0 %v4871
    %5733 = vmatprep.subr.bf16.mxu0 %v4904
    %5734 = vmatpush1.bf16.msra.mxu0 %v4903
    %5735 = vmatprep.subr.bf16.mxu0 %v4936
    %5736 = vmatpush1.bf16.msra.mxu0 %v4935
    %5737 = vmatprep.subr.bf16.mxu0 %v4968
    %5738 = vmatpush1.bf16.msra.mxu0 %v4967
    %5739 = vmatprep.subr.bf16.mxu0 0
    %5740 = vmatpush1.bf16.msra.mxu0 0
    %5741 = vmatprep.subr.bf16.mxu0 0
    %5742 = vmatpush1.bf16.msra.mxu0 0
    %5743 = vmatprep.subr.bf16.mxu0 0
    %5744 = vmatpush1.bf16.msra.mxu0 0
    %5745 = vmatprep.subr.bf16.mxu0 0
    %5746 = vmatpush1.bf16.msra.mxu0 0
    %5747 = vmatprep.subr.bf16.mxu0 0
    %5748 = vmatpush1.bf16.msra.mxu0 0
    %5749 = vmatprep.subr.bf16.mxu0 0
    %5750 = vmatpush1.bf16.msra.mxu0 0
    %5751 = vmatprep.subr.bf16.mxu0 0
    %5752 = vmatpush1.bf16.msra.mxu0 0
    %5753 = vmatprep.subr.bf16.mxu0 0
    %5754 = vmatpush1.bf16.msra.mxu0 0
    %5755 = vmatprep.mubr.bf16.mxu0 0
    %5756 = vmatmul.mubr.bf16.gmra.mrb[0].mxu0 %v3526
    %v5757 = vpop.f32.mrb[0].mxu0
    %v5758 = vadd.f32 %v3890, %v5757
    %v5759 = vpop.f32.mrb[0].mxu0
    %v5760 = vadd.f32 %v3894, %v5759
    %v5761 = vpop.f32.mrb[0].mxu0
    %v5762 = vpop.f32.mrb[0].mxu0
    %5763 = vdwg.mxu0
    %5764 = vmatprep.subr.bf16.mxu0 %v4746
    %5765 = vmatpush1.bf16.msra.mxu0 %v4745
    %5766 = vmatprep.subr.bf16.mxu0 %v4778
    %5767 = vmatpush1.bf16.msra.mxu0 %v4777
    %5768 = vmatprep.subr.bf16.mxu0 %v4810
    %5769 = vmatpush1.bf16.msra.mxu0 %v4809
    %5770 = vmatprep.subr.bf16.mxu0 %v4842
    %5771 = vmatpush1.bf16.msra.mxu0 %v4841
    %5772 = vmatprep.subr.bf16.mxu0 %v4874
    %5773 = vmatpush1.bf16.msra.mxu0 %v4873
    %5774 = vmatprep.subr.bf16.mxu0 %v4906
    %5775 = vmatpush1.bf16.msra.mxu0 %v4905
    %5776 = vmatprep.subr.bf16.mxu0 %v4938
    %5777 = vmatpush1.bf16.msra.mxu0 %v4937
    %5778 = vmatprep.subr.bf16.mxu0 %v4970
    %5779 = vmatpush1.bf16.msra.mxu0 %v4969
    %5780 = vmatprep.subr.bf16.mxu0 0
    %5781 = vmatpush1.bf16.msra.mxu0 0
    %5782 = vmatprep.subr.bf16.mxu0 0
    %5783 = vmatpush1.bf16.msra.mxu0 0
    %5784 = vmatprep.subr.bf16.mxu0 0
    %5785 = vmatpush1.bf16.msra.mxu0 0
    %5786 = vmatprep.subr.bf16.mxu0 0
    %5787 = vmatpush1.bf16.msra.mxu0 0
    %5788 = vmatprep.subr.bf16.mxu0 0
    %5789 = vmatpush1.bf16.msra.mxu0 0
    %5790 = vmatprep.subr.bf16.mxu0 0
    %5791 = vmatpush1.bf16.msra.mxu0 0
    %5792 = vmatprep.subr.bf16.mxu0 0
    %5793 = vmatpush1.bf16.msra.mxu0 0
    %5794 = vmatprep.subr.bf16.mxu0 0
    %5795 = vmatpush1.bf16.msra.mxu0 0
    %5796 = vmatprep.mubr.bf16.mxu0 0
    %5797 = vmatmul.mubr.bf16.gmra.mrb[0].mxu0 %v3526
    %v5798 = vpop.f32.mrb[0].mxu0
    %v5799 = vadd.f32 %v3898, %v5798
    %v5800 = vpop.f32.mrb[0].mxu0
    %v5801 = vadd.f32 %v3902, %v5800
    %v5802 = vpop.f32.mrb[0].mxu0
    %v5803 = vpop.f32.mrb[0].mxu0
    %5804 = vdwg.mxu0
    %5805 = vmatprep.subr.bf16.mxu0 %v4748
    %5806 = vmatpush1.bf16.msra.mxu0 %v4747
    %5807 = vmatprep.subr.bf16.mxu0 %v4780
    %5808 = vmatpush1.bf16.msra.mxu0 %v4779
    %5809 = vmatprep.subr.bf16.mxu0 %v4812
    %5810 = vmatpush1.bf16.msra.mxu0 %v4811
    %5811 = vmatprep.subr.bf16.mxu0 %v4844
    %5812 = vmatpush1.bf16.msra.mxu0 %v4843
    %5813 = vmatprep.subr.bf16.mxu0 %v4876
    %5814 = vmatpush1.bf16.msra.mxu0 %v4875
    %5815 = vmatprep.subr.bf16.mxu0 %v4908
    %5816 = vmatpush1.bf16.msra.mxu0 %v4907
    %5817 = vmatprep.subr.bf16.mxu0 %v4940
    %5818 = vmatpush1.bf16.msra.mxu0 %v4939
    %5819 = vmatprep.subr.bf16.mxu0 %v4972
    %5820 = vmatpush1.bf16.msra.mxu0 %v4971
    %5821 = vmatprep.subr.bf16.mxu0 0
    %5822 = vmatpush1.bf16.msra.mxu0 0
    %5823 = vmatprep.subr.bf16.mxu0 0
    %5824 = vmatpush1.bf16.msra.mxu0 0
    %5825 = vmatprep.subr.bf16.mxu0 0
    %5826 = vmatpush1.bf16.msra.mxu0 0
    %5827 = vmatprep.subr.bf16.mxu0 0
    %5828 = vmatpush1.bf16.msra.mxu0 0
    %5829 = vmatprep.subr.bf16.mxu0 0
    %5830 = vmatpush1.bf16.msra.mxu0 0
    %5831 = vmatprep.subr.bf16.mxu0 0
    %5832 = vmatpush1.bf16.msra.mxu0 0
    %5833 = vmatprep.subr.bf16.mxu0 0
    %5834 = vmatpush1.bf16.msra.mxu0 0
    %5835 = vmatprep.subr.bf16.mxu0 0
    %5836 = vmatpush1.bf16.msra.mxu0 0
    %5837 = vmatprep.mubr.bf16.mxu0 0
    %5838 = vmatmul.mubr.bf16.gmra.mrb[0].mxu0 %v3526
    %v5839 = vpop.f32.mrb[0].mxu0
    %v5840 = vadd.f32 %v3906, %v5839
    %v5841 = vpop.f32.mrb[0].mxu0
    %v5842 = vadd.f32 %v3910, %v5841
    %v5843 = vpop.f32.mrb[0].mxu0
    %v5844 = vpop.f32.mrb[0].mxu0
    %5845 = vdwg.mxu0
    %5846 = vmatprep.subr.bf16.mxu0 %v4750
    %5847 = vmatpush1.bf16.msra.mxu0 %v4749
    %5848 = vmatprep.subr.bf16.mxu0 %v4782
    %5849 = vmatpush1.bf16.msra.mxu0 %v4781
    %5850 = vmatprep.subr.bf16.mxu0 %v4814
    %5851 = vmatpush1.bf16.msra.mxu0 %v4813
    %5852 = vmatprep.subr.bf16.mxu0 %v4846
    %5853 = vmatpush1.bf16.msra.mxu0 %v4845
    %5854 = vmatprep.subr.bf16.mxu0 %v4878
    %5855 = vmatpush1.bf16.msra.mxu0 %v4877
    %5856 = vmatprep.subr.bf16.mxu0 %v4910
    %5857 = vmatpush1.bf16.msra.mxu0 %v4909
    %5858 = vmatprep.subr.bf16.mxu0 %v4942
    %5859 = vmatpush1.bf16.msra.mxu0 %v4941
    %5860 = vmatprep.subr.bf16.mxu0 %v4974
    %5861 = vmatpush1.bf16.msra.mxu0 %v4973
    %5862 = vmatprep.subr.bf16.mxu0 0
    %5863 = vmatpush1.bf16.msra.mxu0 0
    %5864 = vmatprep.subr.bf16.mxu0 0
    %5865 = vmatpush1.bf16.msra.mxu0 0
    %5866 = vmatprep.subr.bf16.mxu0 0
    %5867 = vmatpush1.bf16.msra.mxu0 0
    %5868 = vmatprep.subr.bf16.mxu0 0
    %5869 = vmatpush1.bf16.msra.mxu0 0
    %5870 = vmatprep.subr.bf16.mxu0 0
    %5871 = vmatpush1.bf16.msra.mxu0 0
    %5872 = vmatprep.subr.bf16.mxu0 0
    %5873 = vmatpush1.bf16.msra.mxu0 0
    %5874 = vmatprep.subr.bf16.mxu0 0
    %5875 = vmatpush1.bf16.msra.mxu0 0
    %5876 = vmatprep.subr.bf16.mxu0 0
    %5877 = vmatpush1.bf16.msra.mxu0 0
    %5878 = vmatprep.mubr.bf16.mxu0 0
    %5879 = vmatmul.mubr.bf16.gmra.mrb[0].mxu0 %v3526
    %v5880 = vpop.f32.mrb[0].mxu0
    %v5881 = vadd.f32 %v3914, %v5880
    %v5882 = vpop.f32.mrb[0].mxu0
    %v5883 = vadd.f32 %v3918, %v5882
    %v5884 = vpop.f32.mrb[0].mxu0
    %v5885 = vpop.f32.mrb[0].mxu0
    %5886 = vdwg.mxu0
    %5887 = vst [vmem:[%s17] sm:$0xff] %v5266
    %5888 = vst [vmem:[%s17 + $0x8] sm:$0xff] %v5268
    %5889 = vst [vmem:[%s17 + $0x10] sm:$0xff] %v5307
    %5890 = vst [vmem:[%s17 + $0x18] sm:$0xff] %v5309
    %5891 = vst [vmem:[%s17 + $0x20] sm:$0xff] %v5348
    %5892 = vst [vmem:[%s17 + $0x28] sm:$0xff] %v5350
    %5893 = vst [vmem:[%s17 + $0x30] sm:$0xff] %v5389
    %5894 = vst [vmem:[%s17 + $0x38] sm:$0xff] %v5391
    %5895 = vst [vmem:[%s17 + $0x40] sm:$0xff] %v5430
    %5896 = vst [vmem:[%s17 + $0x48] sm:$0xff] %v5432
    %5897 = vst [vmem:[%s17 + $0x50] sm:$0xff] %v5471
    %5898 = vst [vmem:[%s17 + $0x58] sm:$0xff] %v5473
    %5899 = vst [vmem:[%s17 + $0x60] sm:$0xff] %v5512
    %5900 = vst [vmem:[%s17 + $0x68] sm:$0xff] %v5514
    %5901 = vst [vmem:[%s17 + $0x70] sm:$0xff] %v5553
    %5902 = vst [vmem:[%s17 + $0x78] sm:$0xff] %v5555
    %5903 = vst [vmem:[%s17 + $0x80] sm:$0xff] %v5594
    %5904 = vst [vmem:[%s17 + $0x88] sm:$0xff] %v5596
    %5905 = vst [vmem:[%s17 + $0x90] sm:$0xff] %v5635
    %5906 = vst [vmem:[%s17 + $0x98] sm:$0xff] %v5637
    %5907 = vst [vmem:[%s17 + $0xa0] sm:$0xff] %v5676
    %5908 = vst [vmem:[%s17 + $0xa8] sm:$0xff] %v5678
    %5909 = vst [vmem:[%s17 + $0xb0] sm:$0xff] %v5717
    %5910 = vst [vmem:[%s17 + $0xb8] sm:$0xff] %v5719
    %5911 = vst [vmem:[%s17 + $0xc0] sm:$0xff] %v5758
    %5912 = vst [vmem:[%s17 + $0xc8] sm:$0xff] %v5760
    %5913 = vst [vmem:[%s17 + $0xd0] sm:$0xff] %v5799
    %5914 = vst [vmem:[%s17 + $0xd8] sm:$0xff] %v5801
    %5915 = vst [vmem:[%s17 + $0xe0] sm:$0xff] %v5840
    %5916 = vst [vmem:[%s17 + $0xe8] sm:$0xff] %v5842
    %5917 = vst [vmem:[%s17 + $0xf0] sm:$0xff] %v5881
    %5918 = vst [vmem:[%s17 + $0xf8] sm:$0xff] %v5883
    // Predicated region
    $region78: #{base_ae_forward.1} parent=1 // pred_check
      _
    $region79: #{base_ae_forward.1} parent=1 // pred_check_branch
      %5920 = sbr.rel (0) target = $region81
    $region80: #{base_ae_forward.1} parent=1 // pred_region
      _
    $region81: #{base_ae_forward.1} parent=1 // pred_fallthru
      _
    // Predicated region
    $region82: #{base_ae_forward.1} parent=1 // pred_check
      _
    $region83: #{base_ae_forward.1} parent=1 // pred_check_branch
      %5922 = sbr.rel (0) target = $region85
    $region84: #{base_ae_forward.1} parent=1 // pred_region
      %s5924 = ssub.s32 128, 128
      %5925 = vsyncadd [#allocation4], %s5924
      %s5927 = sshll.u32 [#allocation7], 4
      %s5928 = int_to_ptr.vmem [resolvable:$true] %s5927
      %5930 = dma.vmem_to_hbm [thread:$0]  %s5928, 128, %s18, [#allocation4]
    $region85: #{base_ae_forward.1} parent=1 // pred_fallthru
      _
    // Predicated region
    $region86: #{base_ae_forward.1} parent=1 // pred_check
      _
    $region87: #{base_ae_forward.1} parent=1 // pred_check_branch
      %5932 = sbr.rel (0) target = $region89
    $region88: #{base_ae_forward.1} parent=1 // pred_region
      _
    $region89: #{base_ae_forward.1} parent=1 // pred_fallthru
      _
    // Predicated region
    $region90: #{base_ae_forward.1} parent=1 // pred_check
      _
    $region91: #{base_ae_forward.1} parent=1 // pred_check_branch
      %5934 = sbr.rel (0) target = $region93
    $region92: #{base_ae_forward.1} parent=1 // pred_region
      %5935 = dma.done [#allocation4], 128
    $region93: #{base_ae_forward.1} parent=1 // pred_fallthru
      _
    %5936 = vsyncpa [#allocation3], 1
    %5937 = vsyncpa [#allocation6], 1
    %5938 = vsyncpa [#allocation4], 1

</llo_original>
